<compile_context>
chip_gen: v5e
topology: v5e:2x2
jax: 0.10.0
libtpu: 0.0.40
codegen_flags: <defaults>
</compile_context>

<pallas_src>
import jax
import jax.numpy as jnp
from jax.experimental import pallas as pl
from jax.experimental.pallas import tpu as pltpu

_LP = 8  # left halo width in the conv2 scratch -> interior starts sublane-aligned


def _round_up(x, m):
    return (x + m - 1) // m * m


def _fold_bn(p, eps=1e-5):
    scale = p["gamma"] / jnp.sqrt(p["var"] + eps)
    return scale, p["beta"] - p["mean"] * scale


def _prepare_params(params, sel_idx, inplanes, lane=128):
    """Fold BN + channel_selection into the conv weights and pad to lane tiles."""
    w1, w2, w3 = params["w1"], params["w2"], params["w3"]
    Csel, C1 = w1.shape
    C2 = w2.shape[3]
    Cout = w3.shape[1]
    C1p = _round_up(C1, lane)
    C2p = _round_up(C2, lane)

    s1, b1 = _fold_bn(params["bn1"])     # over inplanes
    s2, b2 = _fold_bn(params["bn2"])     # over C1
    s3, b3 = _fold_bn(params["bn3"])     # over C2

    # channel_selection folded into conv1's rows (unselected input channels get
    # zero rows, so the kernel consumes x exactly once); bn2 scale folded into
    # conv1's columns.  Padded columns stay zero.
    w1_sel = jnp.pad(w1 * s2[None, :], ((0, 0), (0, C1p - C1)))
    w1_full = jnp.zeros((inplanes, C1p), jnp.float32).at[sel_idx].set(w1_sel)

    # bn3 scale folded into conv2's output columns; zero-pad both channel dims.
    w2_full = jnp.pad(w2 * s3[None, None, None, :],
                      ((0, 0), (0, 0), (0, C1p - C1), (0, C2p - C2)))

    # conv3: pad the contraction dim only (padded input channels are zero).
    w3_full = jnp.pad(w3, ((0, C2p - C2), (0, 0)))

    b2p = jnp.pad(b2, (0, C1p - C1)).reshape(1, C1p)
    b3p = jnp.pad(b3, (0, C2p - C2)).reshape(1, C2p)

    return {
        "w1": w1_full.astype(jnp.bfloat16),            # (Cin, C1p)
        "w2": w2_full.astype(jnp.bfloat16),            # (3, 3, C1p, C2p) HWIO
        "w3": w3_full.astype(jnp.bfloat16),            # (C2p, Cout)
        "s1": s1.reshape(1, inplanes).astype(jnp.float32),
        "b1": b1.reshape(1, inplanes).astype(jnp.float32),
        "b2": b2p.astype(jnp.float32),
        "b3": b3p.astype(jnp.float32),
        "dims": (Csel, C1, C2, Cout, C1p, C2p),
    }


def _bottleneck_kernel(x_ref, w1_ref, w2_ref, w3_ref,
                       s1_ref, b1_ref, b2_ref, b3_ref,
                       out_ref, pad_ref):
    """One image of the pre-activation bottleneck.

    x_ref   : (H, W, Cin)        f32  whole image (also the residual)
    w1_ref  : (Cin, C1p)         bf16 conv1 weight (selection + bn2 scale folded)
    w2_ref  : (9, C1p, C2p)      bf16 conv2 weight, one (C1p, C2p) slab per tap
    w3_ref  : (C2p, Cout)        bf16 conv3 weight
    s1_ref, b1_ref : (1, Cin)    f32  folded bn1 scale / shift
    b2_ref  : (1, C1p)           f32  folded bn2 shift (scale lives in w1)
    b3_ref  : (1, C2p)           f32  folded bn3 shift (scale lives in w2)
    out_ref : (H, W, Cout)       f32  output (residual already added)
    pad_ref : (H+2, WP, C1p)     bf16 conv2 staging scratch; interior at
                                 rows [1:H+1], cols [_LP:_LP+W] (8-aligned).
    """
    H, W, Cin = x_ref.shape
    C1p = w1_ref.shape[1]
    C2p = w2_ref.shape[2]
    Cout = w3_ref.shape[1]
    WP = pad_ref.shape[1]

    # ---- bn1 (folded) + ReLU; x is read once and reused as the residual.
    x = x_ref[...]
    h0 = jnp.maximum(x * s1_ref[...] + b1_ref[...], 0.0)

    # ---- conv1 (1x1) on the MXU; bf16 in, f32 accumulate.  bn2's scale is
    # already in w1's columns, so only the shift + ReLU remain.
    h1 = jnp.dot(h0.reshape(H * W, Cin).astype(jnp.bfloat16), w1_ref[...],
                 preferred_element_type=jnp.float32)
    h1 = jnp.maximum(h1 + b2_ref[...], 0.0)

    # ---- stage conv2's input as bf16 with a sublane-aligned interior store
    # (interior W starts at column _LP == 8).
    pad_ref[1:H + 1, _LP:_LP + W, :] = h1.reshape(H, W, C1p).astype(jnp.bfloat16)

    # conv2's SAME zero-padding (narrow stores, re-done each step to stay
    # correct under megacore where each core has its own scratch copy).
    zero_row = jnp.zeros((1, WP, C1p), jnp.bfloat16)
    pad_ref[0:1, :, :] = zero_row                    # top pad row
    pad_ref[H + 1:H + 2, :, :] = zero_row            # bottom pad row
    zero_col = jnp.zeros((H, 1, C1p), jnp.bfloat16)
    pad_ref[1:H + 1, _LP - 1:_LP, :] = zero_col      # left pad column
    pad_ref[1:H + 1, _LP + W:_LP + W + 1, :] = zero_col  # right pad column

    # ---- conv2 (3x3, stride 1, pad 1): nine accumulating MXU matmuls into a
    # single f32 accumulator (taps read directly as bf16 from the scratch).
    acc = None
    for kh in range(3):
        for kw in range(3):
            tap = pad_ref[kh:kh + H, _LP - 1 + kw:_LP - 1 + kw + W, :]
            p = jnp.dot(tap.reshape(H * W, C1p), w2_ref[kh * 3 + kw],
                        preferred_element_type=jnp.float32)
            acc = p if acc is None else acc + p
    h2 = jnp.maximum(acc + b3_ref[...], 0.0)         # bn3 shift + ReLU (f32)

    # ---- conv3 (1x1) + identity residual.
    out = jnp.dot(h2.astype(jnp.bfloat16), w3_ref[...],
                  preferred_element_type=jnp.float32)
    out_ref[...] = (out + x.reshape(H * W, Cin)).reshape(H, W, Cout)


def bottleneck_forward(x_nhwc, sel_idx, params, *, stride=1):
    """Pre-activation bottleneck forward.  Returns (out_nhwc, flops)."""
    # TODO(synk): stride > 1 / downsample branch of the module is not implemented.
    assert stride == 1, "only stride=1 / identity residual implemented"
    N, H, W, Cin = x_nhwc.shape

    prep = _prepare_params(params, sel_idx, Cin)
    Csel, C1, C2, Cout, C1p, C2p = prep["dims"]
    assert Cout == Cin, "no downsample: inplanes must equal planes*4"

    WP = _LP + _round_up(W + 1, 8)           # aligned interior + right halo
    w2_k = prep["w2"].reshape(9, C1p, C2p)   # per-tap weight slabs

    def const(shape):
        nd = len(shape)
        return pl.BlockSpec(shape, lambda n, _nd=nd: (0,) * _nd)

    out = pl.pallas_call(
        _bottleneck_kernel,
        grid=(N,),
        out_shape=jax.ShapeDtypeStruct((N, H, W, Cout), jnp.float32),
        in_specs=[
            pl.BlockSpec((None, H, W, Cin), lambda n: (n, 0, 0, 0)),
            const((Cin, C1p)),
            const((9, C1p, C2p)),
            const((C2p, Cout)),
            const((1, Cin)), const((1, Cin)),
            const((1, C1p)), const((1, C2p)),
        ],
        out_specs=pl.BlockSpec((None, H, W, Cout), lambda n: (n, 0, 0, 0)),
        scratch_shapes=[pltpu.VMEM((H + 2, WP, C1p), jnp.bfloat16)],
        compiler_params=pltpu.CompilerParams(
            # One image per step; batch axis is parallel so v7x's two
            # TensorCores split the batch (needs N >= 2 for full utilization).
            dimension_semantics=("parallel",),
            # Per-step working set (double-buffered x/out image + weights +
            # bf16 scratch + conv2 accumulator) is far below 32 MiB at these
            # and typical CIFAR/ImageNet-layer shapes.
            vmem_limit_bytes=32 * 1024 * 1024),
    )(x_nhwc, prep["w1"], w2_k, prep["w3"],
      prep["s1"], prep["b1"], prep["b2"], prep["b3"])

    # flops bookkeeping identical to the PyTorch module (host-side scalar).
    flops = 0.0
    flops += H * W * Csel                      # bn1 + select + relu (numel / b)
    flops += 1 * 1 * Csel * C1 * H * W         # conv1
    flops += H * W * C1                        # bn2 + relu
    flops += 3 * 3 * C1 * C2 * H * W           # conv2 (stride 1)
    flops += H * W * C2                        # bn3 + relu
    flops += 1 * 1 * C2 * Cout * H * W         # conv3
    # downsample is None -> no extra flops
    return out, flops


def _reference_forward(x_nhwc, sel_idx, params, *, use_bf16=True):
    """Pure-JAX reference.  use_bf16=True mirrors the kernel's folded bf16 path."""
    N, H, W, Cin = x_nhwc.shape
    s1, b1 = _fold_bn(params["bn1"])

    if use_bf16:
        prep = _prepare_params(params, sel_idx, Cin)
        cast = lambda a: a.astype(jnp.bfloat16)
        h = jnp.maximum(x_nhwc * s1 + b1, 0.0)
        h = jnp.einsum("nhwc,cd->nhwd", cast(h), prep["w1"],
                       preferred_element_type=jnp.float32)
        h = jnp.maximum(h + prep["b2"], 0.0)
        h = jax.lax.conv_general_dilated(
            cast(h), prep["w2"], window_strides=(1, 1), padding="SAME",
            dimension_numbers=("NHWC", "HWIO", "NHWC"),
            preferred_element_type=jnp.float32)
        h = jnp.maximum(h + prep["b3"], 0.0)
        h = jnp.einsum("nhwc,cd->nhwd", cast(h), prep["w3"],
                       preferred_element_type=jnp.float32)
        return h + x_nhwc

    s2, b2 = _fold_bn(params["bn2"])
    s3, b3 = _fold_bn(params["bn3"])
    h = jnp.maximum(x_nhwc * s1 + b1, 0.0)
    h = jnp.take(h, sel_idx, axis=3)
    h = jnp.einsum("nhwc,cd->nhwd", h, params["w1"])
    h = jnp.maximum(h * s2 + b2, 0.0)
    h = jax.lax.conv_general_dilated(
        h, params["w2"], window_strides=(1, 1), padding="SAME",
        dimension_numbers=("NHWC", "HWIO", "NHWC"))
    h = jnp.maximum(h * s3 + b3, 0.0)
    h = jnp.einsum("nhwc,cd->nhwd", h, params["w3"])
    return h + x_nhwc


if __name__ == "__main__":
    # Small shapes consistent with the module: inplanes = planes*4 (identity
    # residual), pruned cfg = [12, 8, 8].
    N, H, W = 2, 16, 16
    planes = 4
    inplanes = planes * 4          # 16
    cfg = [12, 8, 8]
    Csel, C1, C2 = cfg

    key = jax.random.PRNGKey(0)
    keys = jax.random.split(key, 8)

    x = jax.random.normal(keys[0], (N, H, W, inplanes), jnp.float32)

    # channel_selection: deterministic subset of `inplanes` channels.
    sel_idx = jnp.sort(jax.random.permutation(keys[1], inplanes)[:Csel])

    def bn_params(k, c):
        k1, k2, k3, k4 = jax.random.split(k, 4)
        return {
            "gamma": jax.random.uniform(k1, (c,), jnp.float32, 0.5, 1.5),
            "beta": 0.1 * jax.random.normal(k2, (c,), jnp.float32),
            "mean": 0.1 * jax.random.normal(k3, (c,), jnp.float32),
            "var": jax.random.uniform(k4, (c,), jnp.float32, 0.5, 1.5),
        }

    params = {
        "bn1": bn_params(keys[2], inplanes),
        "bn2": bn_params(keys[3], C1),
        "bn3": bn_params(keys[4], C2),
        # conv weights stored channel-contraction ready:
        #   w1: (Csel, C1), w2: (3, 3, C1, C2) [HWIO], w3: (C2, planes*4)
        "w1": 0.2 * jax.random.normal(keys[5], (Csel, C1), jnp.float32),
        "w2": 0.2 * jax.random.normal(keys[6], (3, 3, C1, C2), jnp.float32),
        "w3": 0.2 * jax.random.normal(keys[7], (C2, planes * 4), jnp.float32),
    }

    out, flops = bottleneck_forward(x, sel_idx, params)
    out = jax.block_until_ready(out)

    ref_matched = jax.block_until_ready(
        _reference_forward(x, sel_idx, params, use_bf16=True))
    ref_f32 = jax.block_until_ready(
        _reference_forward(x, sel_idx, params, use_bf16=False))

    assert out.shape == (N, H, W, inplanes)
    err_matched = float(jnp.max(jnp.abs(out - ref_matched)))
    err_f32 = float(jnp.max(jnp.abs(out - ref_f32)))
    assert err_matched < 1e-2, f"mismatch vs bf16-matched reference: {err_matched}"
    assert err_f32 < 0.25, f"mismatch vs f32 reference: {err_f32}"

    print("KERNEL_OK")
</pallas_src>

<mosaic_0001>
module attributes {stable_mosaic.version = 11 : i64} {
  func.func @_bottleneck_kernel(%arg0: i32, %arg1: memref<1x16x16x16xf32, #tpu.memory_space<vmem>>, %arg2: memref<16x128xbf16, #tpu.memory_space<vmem>>, %arg3: memref<9x128x128xbf16, #tpu.memory_space<vmem>>, %arg4: memref<128x16xbf16, #tpu.memory_space<vmem>>, %arg5: memref<1x16xf32, #tpu.memory_space<vmem>>, %arg6: memref<1x16xf32, #tpu.memory_space<vmem>>, %arg7: memref<1x128xf32, #tpu.memory_space<vmem>>, %arg8: memref<1x128xf32, #tpu.memory_space<vmem>>, %arg9: memref<1x16x16x16xf32, #tpu.memory_space<vmem>>, %arg10: memref<18x32x128xbf16, #tpu.memory_space<vmem>>) attributes {dimension_semantics = [#tpu.dimension_semantics<parallel>], iteration_bounds = array<i64: 2>, scalar_prefetch = 0 : i64, scratch_operands = 1 : i64, tpu.core_type = #tpu.core_type<tc>, window_params = [{transform_indices = @transform_0, window_bounds = array<i64: 1, 16, 16, 16>}, {pipeline_mode = #tpu.pipeline_mode<synchronous>, transform_indices = @transform_1, window_bounds = array<i64: 16, 128>}, {pipeline_mode = #tpu.pipeline_mode<synchronous>, transform_indices = @transform_2, window_bounds = array<i64: 9, 128, 128>}, {pipeline_mode = #tpu.pipeline_mode<synchronous>, transform_indices = @transform_3, window_bounds = array<i64: 128, 16>}, {pipeline_mode = #tpu.pipeline_mode<synchronous>, transform_indices = @transform_4, window_bounds = array<i64: 1, 16>}, {pipeline_mode = #tpu.pipeline_mode<synchronous>, transform_indices = @transform_5, window_bounds = array<i64: 1, 16>}, {pipeline_mode = #tpu.pipeline_mode<synchronous>, transform_indices = @transform_6, window_bounds = array<i64: 1, 128>}, {pipeline_mode = #tpu.pipeline_mode<synchronous>, transform_indices = @transform_7, window_bounds = array<i64: 1, 128>}, {transform_indices = @transform_8, window_bounds = array<i64: 1, 16, 16, 16>}]} {
    %c0 = arith.constant 0 : index
    %c0_0 = arith.constant 0 : index
    %c0_1 = arith.constant 0 : index
    %c0_2 = arith.constant 0 : index
    %0 = vector.load %arg1[%c0, %c0_0, %c0_1, %c0_2] : memref<1x16x16x16xf32, #tpu.memory_space<vmem>>, vector<1x16x16x16xf32>
    %1 = vector.shape_cast %0 : vector<1x16x16x16xf32> to vector<16x16x16xf32>
    %c0_3 = arith.constant 0 : index
    %c0_4 = arith.constant 0 : index
    %2 = vector.load %arg5[%c0_3, %c0_4] : memref<1x16xf32, #tpu.memory_space<vmem>>, vector<1x16xf32>
    %3 = vector.shape_cast %2 : vector<1x16xf32> to vector<1x1x16xf32>
    %4 = vector.broadcast %3 : vector<1x1x16xf32> to vector<16x16x16xf32>
    %5 = arith.mulf %1, %4 : vector<16x16x16xf32>
    %c0_5 = arith.constant 0 : index
    %c0_6 = arith.constant 0 : index
    %6 = vector.load %arg6[%c0_5, %c0_6] : memref<1x16xf32, #tpu.memory_space<vmem>>, vector<1x16xf32>
    %7 = vector.shape_cast %6 : vector<1x16xf32> to vector<1x1x16xf32>
    %8 = vector.broadcast %7 : vector<1x1x16xf32> to vector<16x16x16xf32>
    %9 = arith.addf %5, %8 : vector<16x16x16xf32>
    %cst = arith.constant 0.000000e+00 : f32
    %10 = vector.broadcast %cst : f32 to vector<16x16x16xf32>
    %11 = arith.maximumf %9, %10 : vector<16x16x16xf32>
    %12 = vector.shape_cast %11 : vector<16x16x16xf32> to vector<256x16xf32>
    %13 = arith.truncf %12 : vector<256x16xf32> to vector<256x16xbf16>
    %c0_7 = arith.constant 0 : index
    %c0_8 = arith.constant 0 : index
    %14 = vector.load %arg2[%c0_7, %c0_8] : memref<16x128xbf16, #tpu.memory_space<vmem>>, vector<16x128xbf16>
    %cst_9 = arith.constant dense<0.000000e+00> : vector<256x128xf32>
    %15 = tpu.matmul %13, %14, %cst_9 {dimension_numbers = #tpu.dot_dimension_numbers<[1], [0], [0], [1], [0, 0, 1, 1], [], []>} : vector<256x16xbf16>, vector<16x128xbf16>, vector<256x128xf32> -> vector<256x128xf32>
    %c0_10 = arith.constant 0 : index
    %c0_11 = arith.constant 0 : index
    %16 = vector.load %arg7[%c0_10, %c0_11] : memref<1x128xf32, #tpu.memory_space<vmem>>, vector<1x128xf32>
    %17 = vector.broadcast %16 : vector<1x128xf32> to vector<256x128xf32>
    %18 = arith.addf %15, %17 : vector<256x128xf32>
    %cst_12 = arith.constant 0.000000e+00 : f32
    %19 = vector.broadcast %cst_12 : f32 to vector<256x128xf32>
    %20 = arith.maximumf %18, %19 : vector<256x128xf32>
    %21 = vector.shape_cast %20 : vector<256x128xf32> to vector<16x16x128xf32>
    %22 = arith.truncf %21 : vector<16x16x128xf32> to vector<16x16x128xbf16>
    %c1 = arith.constant 1 : index
    %c8 = arith.constant 8 : index
    %c0_13 = arith.constant 0 : index
    %23 = vector.load %arg10[%c1, %c8, %c0_13] : memref<18x32x128xbf16, #tpu.memory_space<vmem>>, vector<16x16x128xbf16>
    tpu.vector_store %arg10[%c1, %c8, %c0_13], %22 {strides = array<i32>} : memref<18x32x128xbf16, #tpu.memory_space<vmem>>, vector<16x16x128xbf16>,
    %cst_14 = arith.constant 0.000000e+00 : bf16
    %24 = vector.broadcast %cst_14 : bf16 to vector<1x32x128xbf16>
    %c0_15 = arith.constant 0 : index
    %c0_16 = arith.constant 0 : index
    %c0_17 = arith.constant 0 : index
    %25 = vector.load %arg10[%c0_15, %c0_16, %c0_17] : memref<18x32x128xbf16, #tpu.memory_space<vmem>>, vector<1x32x128xbf16>
    tpu.vector_store %arg10[%c0_15, %c0_16, %c0_17], %24 {strides = array<i32>} : memref<18x32x128xbf16, #tpu.memory_space<vmem>>, vector<1x32x128xbf16>,
    %c17 = arith.constant 17 : index
    %c0_18 = arith.constant 0 : index
    %c0_19 = arith.constant 0 : index
    %26 = vector.load %arg10[%c17, %c0_18, %c0_19] : memref<18x32x128xbf16, #tpu.memory_space<vmem>>, vector<1x32x128xbf16>
    tpu.vector_store %arg10[%c17, %c0_18, %c0_19], %24 {strides = array<i32>} : memref<18x32x128xbf16, #tpu.memory_space<vmem>>, vector<1x32x128xbf16>,
    %cst_20 = arith.constant 0.000000e+00 : bf16
    %27 = vector.broadcast %cst_20 : bf16 to vector<16x1x128xbf16>
    %c1_21 = arith.constant 1 : index
    %c7 = arith.constant 7 : index
    %c0_22 = arith.constant 0 : index
    %28 = vector.load %arg10[%c1_21, %c7, %c0_22] : memref<18x32x128xbf16, #tpu.memory_space<vmem>>, vector<16x1x128xbf16>
    tpu.vector_store %arg10[%c1_21, %c7, %c0_22], %27 {strides = array<i32>} : memref<18x32x128xbf16, #tpu.memory_space<vmem>>, vector<16x1x128xbf16>,
    %c1_23 = arith.constant 1 : index
    %c24 = arith.constant 24 : index
    %c0_24 = arith.constant 0 : index
    %29 = vector.load %arg10[%c1_23, %c24, %c0_24] : memref<18x32x128xbf16, #tpu.memory_space<vmem>>, vector<16x1x128xbf16>
    tpu.vector_store %arg10[%c1_23, %c24, %c0_24], %27 {strides = array<i32>} : memref<18x32x128xbf16, #tpu.memory_space<vmem>>, vector<16x1x128xbf16>,
    %c0_25 = arith.constant 0 : index
    %c7_26 = arith.constant 7 : index
    %c0_27 = arith.constant 0 : index
    %30 = vector.load %arg10[%c0_25, %c7_26, %c0_27] : memref<18x32x128xbf16, #tpu.memory_space<vmem>>, vector<16x16x128xbf16>
    %31 = vector.shape_cast %30 : vector<16x16x128xbf16> to vector<256x128xbf16>
    %c0_28 = arith.constant 0 : index
    %c0_29 = arith.constant 0 : index
    %c0_30 = arith.constant 0 : index
    %32 = vector.load %arg3[%c0_28, %c0_29, %c0_30] : memref<9x128x128xbf16, #tpu.memory_space<vmem>>, vector<1x128x128xbf16>
    %33 = vector.shape_cast %32 : vector<1x128x128xbf16> to vector<128x128xbf16>
    %cst_31 = arith.constant dense<0.000000e+00> : vector<256x128xf32>
    %34 = tpu.matmul %31, %33, %cst_31 {dimension_numbers = #tpu.dot_dimension_numbers<[1], [0], [0], [1], [0, 0, 1, 1], [], []>} : vector<256x128xbf16>, vector<128x128xbf16>, vector<256x128xf32> -> vector<256x128xf32>
    %c0_32 = arith.constant 0 : index
    %c8_33 = arith.constant 8 : index
    %c0_34 = arith.constant 0 : index
    %35 = vector.load %arg10[%c0_32, %c8_33, %c0_34] : memref<18x32x128xbf16, #tpu.memory_space<vmem>>, vector<16x16x128xbf16>
    %36 = vector.shape_cast %35 : vector<16x16x128xbf16> to vector<256x128xbf16>
    %c1_35 = arith.constant 1 : index
    %c0_36 = arith.constant 0 : index
    %c0_37 = arith.constant 0 : index
    %37 = vector.load %arg3[%c1_35, %c0_36, %c0_37] : memref<9x128x128xbf16, #tpu.memory_space<vmem>>, vector<1x128x128xbf16>
    %38 = vector.shape_cast %37 : vector<1x128x128xbf16> to vector<128x128xbf16>
    %cst_38 = arith.constant dense<0.000000e+00> : vector<256x128xf32>
    %39 = tpu.matmul %36, %38, %cst_38 {dimension_numbers = #tpu.dot_dimension_numbers<[1], [0], [0], [1], [0, 0, 1, 1], [], []>} : vector<256x128xbf16>, vector<128x128xbf16>, vector<256x128xf32> -> vector<256x128xf32>
    %40 = arith.addf %34, %39 : vector<256x128xf32>
    %c0_39 = arith.constant 0 : index
    %c9 = arith.constant 9 : index
    %c0_40 = arith.constant 0 : index
    %41 = vector.load %arg10[%c0_39, %c9, %c0_40] : memref<18x32x128xbf16, #tpu.memory_space<vmem>>, vector<16x16x128xbf16>
    %42 = vector.shape_cast %41 : vector<16x16x128xbf16> to vector<256x128xbf16>
    %c2 = arith.constant 2 : index
    %c0_41 = arith.constant 0 : index
    %c0_42 = arith.constant 0 : index
    %43 = vector.load %arg3[%c2, %c0_41, %c0_42] : memref<9x128x128xbf16, #tpu.memory_space<vmem>>, vector<1x128x128xbf16>
    %44 = vector.shape_cast %43 : vector<1x128x128xbf16> to vector<128x128xbf16>
    %cst_43 = arith.constant dense<0.000000e+00> : vector<256x128xf32>
    %45 = tpu.matmul %42, %44, %cst_43 {dimension_numbers = #tpu.dot_dimension_numbers<[1], [0], [0], [1], [0, 0, 1, 1], [], []>} : vector<256x128xbf16>, vector<128x128xbf16>, vector<256x128xf32> -> vector<256x128xf32>
    %46 = arith.addf %40, %45 : vector<256x128xf32>
    %c1_44 = arith.constant 1 : index
    %c7_45 = arith.constant 7 : index
    %c0_46 = arith.constant 0 : index
    %47 = vector.load %arg10[%c1_44, %c7_45, %c0_46] : memref<18x32x128xbf16, #tpu.memory_space<vmem>>, vector<16x16x128xbf16>
    %48 = vector.shape_cast %47 : vector<16x16x128xbf16> to vector<256x128xbf16>
    %c3 = arith.constant 3 : index
    %c0_47 = arith.constant 0 : index
    %c0_48 = arith.constant 0 : index
    %49 = vector.load %arg3[%c3, %c0_47, %c0_48] : memref<9x128x128xbf16, #tpu.memory_space<vmem>>, vector<1x128x128xbf16>
    %50 = vector.shape_cast %49 : vector<1x128x128xbf16> to vector<128x128xbf16>
    %cst_49 = arith.constant dense<0.000000e+00> : vector<256x128xf32>
    %51 = tpu.matmul %48, %50, %cst_49 {dimension_numbers = #tpu.dot_dimension_numbers<[1], [0], [0], [1], [0, 0, 1, 1], [], []>} : vector<256x128xbf16>, vector<128x128xbf16>, vector<256x128xf32> -> vector<256x128xf32>
    %52 = arith.addf %46, %51 : vector<256x128xf32>
    %c1_50 = arith.constant 1 : index
    %c8_51 = arith.constant 8 : index
    %c0_52 = arith.constant 0 : index
    %53 = vector.load %arg10[%c1_50, %c8_51, %c0_52] : memref<18x32x128xbf16, #tpu.memory_space<vmem>>, vector<16x16x128xbf16>
    %54 = vector.shape_cast %53 : vector<16x16x128xbf16> to vector<256x128xbf16>
    %c4 = arith.constant 4 : index
    %c0_53 = arith.constant 0 : index
    %c0_54 = arith.constant 0 : index
    %55 = vector.load %arg3[%c4, %c0_53, %c0_54] : memref<9x128x128xbf16, #tpu.memory_space<vmem>>, vector<1x128x128xbf16>
    %56 = vector.shape_cast %55 : vector<1x128x128xbf16> to vector<128x128xbf16>
    %cst_55 = arith.constant dense<0.000000e+00> : vector<256x128xf32>
    %57 = tpu.matmul %54, %56, %cst_55 {dimension_numbers = #tpu.dot_dimension_numbers<[1], [0], [0], [1], [0, 0, 1, 1], [], []>} : vector<256x128xbf16>, vector<128x128xbf16>, vector<256x128xf32> -> vector<256x128xf32>
    %58 = arith.addf %52, %57 : vector<256x128xf32>
    %c1_56 = arith.constant 1 : index
    %c9_57 = arith.constant 9 : index
    %c0_58 = arith.constant 0 : index
    %59 = vector.load %arg10[%c1_56, %c9_57, %c0_58] : memref<18x32x128xbf16, #tpu.memory_space<vmem>>, vector<16x16x128xbf16>
    %60 = vector.shape_cast %59 : vector<16x16x128xbf16> to vector<256x128xbf16>
    %c5 = arith.constant 5 : index
    %c0_59 = arith.constant 0 : index
    %c0_60 = arith.constant 0 : index
    %61 = vector.load %arg3[%c5, %c0_59, %c0_60] : memref<9x128x128xbf16, #tpu.memory_space<vmem>>, vector<1x128x128xbf16>
    %62 = vector.shape_cast %61 : vector<1x128x128xbf16> to vector<128x128xbf16>
    %cst_61 = arith.constant dense<0.000000e+00> : vector<256x128xf32>
    %63 = tpu.matmul %60, %62, %cst_61 {dimension_numbers = #tpu.dot_dimension_numbers<[1], [0], [0], [1], [0, 0, 1, 1], [], []>} : vector<256x128xbf16>, vector<128x128xbf16>, vector<256x128xf32> -> vector<256x128xf32>
    %64 = arith.addf %58, %63 : vector<256x128xf32>
    %c2_62 = arith.constant 2 : index
    %c7_63 = arith.constant 7 : index
    %c0_64 = arith.constant 0 : index
    %65 = vector.load %arg10[%c2_62, %c7_63, %c0_64] : memref<18x32x128xbf16, #tpu.memory_space<vmem>>, vector<16x16x128xbf16>
    %66 = vector.shape_cast %65 : vector<16x16x128xbf16> to vector<256x128xbf16>
    %c6 = arith.constant 6 : index
    %c0_65 = arith.constant 0 : index
    %c0_66 = arith.constant 0 : index
    %67 = vector.load %arg3[%c6, %c0_65, %c0_66] : memref<9x128x128xbf16, #tpu.memory_space<vmem>>, vector<1x128x128xbf16>
    %68 = vector.shape_cast %67 : vector<1x128x128xbf16> to vector<128x128xbf16>
    %cst_67 = arith.constant dense<0.000000e+00> : vector<256x128xf32>
    %69 = tpu.matmul %66, %68, %cst_67 {dimension_numbers = #tpu.dot_dimension_numbers<[1], [0], [0], [1], [0, 0, 1, 1], [], []>} : vector<256x128xbf16>, vector<128x128xbf16>, vector<256x128xf32> -> vector<256x128xf32>
    %70 = arith.addf %64, %69 : vector<256x128xf32>
    %c2_68 = arith.constant 2 : index
    %c8_69 = arith.constant 8 : index
    %c0_70 = arith.constant 0 : index
    %71 = vector.load %arg10[%c2_68, %c8_69, %c0_70] : memref<18x32x128xbf16, #tpu.memory_space<vmem>>, vector<16x16x128xbf16>
    %72 = vector.shape_cast %71 : vector<16x16x128xbf16> to vector<256x128xbf16>
    %c7_71 = arith.constant 7 : index
    %c0_72 = arith.constant 0 : index
    %c0_73 = arith.constant 0 : index
    %73 = vector.load %arg3[%c7_71, %c0_72, %c0_73] : memref<9x128x128xbf16, #tpu.memory_space<vmem>>, vector<1x128x128xbf16>
    %74 = vector.shape_cast %73 : vector<1x128x128xbf16> to vector<128x128xbf16>
    %cst_74 = arith.constant dense<0.000000e+00> : vector<256x128xf32>
    %75 = tpu.matmul %72, %74, %cst_74 {dimension_numbers = #tpu.dot_dimension_numbers<[1], [0], [0], [1], [0, 0, 1, 1], [], []>} : vector<256x128xbf16>, vector<128x128xbf16>, vector<256x128xf32> -> vector<256x128xf32>
    %76 = arith.addf %70, %75 : vector<256x128xf32>
    %c2_75 = arith.constant 2 : index
    %c9_76 = arith.constant 9 : index
    %c0_77 = arith.constant 0 : index
    %77 = vector.load %arg10[%c2_75, %c9_76, %c0_77] : memref<18x32x128xbf16, #tpu.memory_space<vmem>>, vector<16x16x128xbf16>
    %78 = vector.shape_cast %77 : vector<16x16x128xbf16> to vector<256x128xbf16>
    %c8_78 = arith.constant 8 : index
    %c0_79 = arith.constant 0 : index
    %c0_80 = arith.constant 0 : index
    %79 = vector.load %arg3[%c8_78, %c0_79, %c0_80] : memref<9x128x128xbf16, #tpu.memory_space<vmem>>, vector<1x128x128xbf16>
    %80 = vector.shape_cast %79 : vector<1x128x128xbf16> to vector<128x128xbf16>
    %cst_81 = arith.constant dense<0.000000e+00> : vector<256x128xf32>
    %81 = tpu.matmul %78, %80, %cst_81 {dimension_numbers = #tpu.dot_dimension_numbers<[1], [0], [0], [1], [0, 0, 1, 1], [], []>} : vector<256x128xbf16>, vector<128x128xbf16>, vector<256x128xf32> -> vector<256x128xf32>
    %82 = arith.addf %76, %81 : vector<256x128xf32>
    %c0_82 = arith.constant 0 : index
    %c0_83 = arith.constant 0 : index
    %83 = vector.load %arg8[%c0_82, %c0_83] : memref<1x128xf32, #tpu.memory_space<vmem>>, vector<1x128xf32>
    %84 = vector.broadcast %83 : vector<1x128xf32> to vector<256x128xf32>
    %85 = arith.addf %82, %84 : vector<256x128xf32>
    %cst_84 = arith.constant 0.000000e+00 : f32
    %86 = vector.broadcast %cst_84 : f32 to vector<256x128xf32>
    %87 = arith.maximumf %85, %86 : vector<256x128xf32>
    %88 = arith.truncf %87 : vector<256x128xf32> to vector<256x128xbf16>
    %c0_85 = arith.constant 0 : index
    %c0_86 = arith.constant 0 : index
    %89 = vector.load %arg4[%c0_85, %c0_86] : memref<128x16xbf16, #tpu.memory_space<vmem>>, vector<128x16xbf16>
    %cst_87 = arith.constant dense<0.000000e+00> : vector<256x16xf32>
    %90 = tpu.matmul %88, %89, %cst_87 {dimension_numbers = #tpu.dot_dimension_numbers<[1], [0], [0], [1], [0, 0, 1, 1], [], []>} : vector<256x128xbf16>, vector<128x16xbf16>, vector<256x16xf32> -> vector<256x16xf32>
    %91 = vector.shape_cast %1 : vector<16x16x16xf32> to vector<256x16xf32>
    %92 = arith.addf %90, %91 : vector<256x16xf32>
    %93 = vector.shape_cast %92 : vector<256x16xf32> to vector<16x16x16xf32>
    %c0_88 = arith.constant 0 : index
    %c0_89 = arith.constant 0 : index
    %c0_90 = arith.constant 0 : index
    %c0_91 = arith.constant 0 : index
    %94 = vector.load %arg9[%c0_88, %c0_89, %c0_90, %c0_91] : memref<1x16x16x16xf32, #tpu.memory_space<vmem>>, vector<1x16x16x16xf32>
    %95 = vector.shape_cast %94 : vector<1x16x16x16xf32> to vector<16x16x16xf32>
    %96 = vector.shape_cast %93 : vector<16x16x16xf32> to vector<1x16x16x16xf32>
    tpu.vector_store %arg9[%c0_88, %c0_89, %c0_90, %c0_91], %96 {strides = array<i32>} : memref<1x16x16x16xf32, #tpu.memory_space<vmem>>, vector<1x16x16x16xf32>,
    return
  }
  func.func @transform_0(%arg0: i32) -> (i32, i32, i32, i32) {
    %c0_i32 = arith.constant 0 : i32
    %c0_i32_0 = arith.constant 0 : i32
    %c0_i32_1 = arith.constant 0 : i32
    %c0_i32_2 = arith.constant 0 : i32
    return %arg0, %c0_i32, %c0_i32_0, %c0_i32_1 : i32, i32, i32, i32
  }
  func.func @transform_1(%arg0: i32) -> (i32, i32) {
    %c0_i32 = arith.constant 0 : i32
    %c0_i32_0 = arith.constant 0 : i32
    %c0_i32_1 = arith.constant 0 : i32
    return %c0_i32, %c0_i32_0 : i32, i32
  }
  func.func @transform_2(%arg0: i32) -> (i32, i32, i32) {
    %c0_i32 = arith.constant 0 : i32
    %c0_i32_0 = arith.constant 0 : i32
    %c0_i32_1 = arith.constant 0 : i32
    %c0_i32_2 = arith.constant 0 : i32
    return %c0_i32, %c0_i32_0, %c0_i32_1 : i32, i32, i32
  }
  func.func @transform_3(%arg0: i32) -> (i32, i32) {
    %c0_i32 = arith.constant 0 : i32
    %c0_i32_0 = arith.constant 0 : i32
    %c0_i32_1 = arith.constant 0 : i32
    return %c0_i32, %c0_i32_0 : i32, i32
  }
  func.func @transform_4(%arg0: i32) -> (i32, i32) {
    %c0_i32 = arith.constant 0 : i32
    %c0_i32_0 = arith.constant 0 : i32
    %c0_i32_1 = arith.constant 0 : i32
    return %c0_i32, %c0_i32_0 : i32, i32
  }
  func.func @transform_5(%arg0: i32) -> (i32, i32) {
    %c0_i32 = arith.constant 0 : i32
    %c0_i32_0 = arith.constant 0 : i32
    %c0_i32_1 = arith.constant 0 : i32
    return %c0_i32, %c0_i32_0 : i32, i32
  }
  func.func @transform_6(%arg0: i32) -> (i32, i32) {
    %c0_i32 = arith.constant 0 : i32
    %c0_i32_0 = arith.constant 0 : i32
    %c0_i32_1 = arith.constant 0 : i32
    return %c0_i32, %c0_i32_0 : i32, i32
  }
  func.func @transform_7(%arg0: i32) -> (i32, i32) {
    %c0_i32 = arith.constant 0 : i32
    %c0_i32_0 = arith.constant 0 : i32
    %c0_i32_1 = arith.constant 0 : i32
    return %c0_i32, %c0_i32_0 : i32, i32
  }
  func.func @transform_8(%arg0: i32) -> (i32, i32, i32, i32) {
    %c0_i32 = arith.constant 0 : i32
    %c0_i32_0 = arith.constant 0 : i32
    %c0_i32_1 = arith.constant 0 : i32
    %c0_i32_2 = arith.constant 0 : i32
    return %arg0, %c0_i32, %c0_i32_0, %c0_i32_1 : i32, i32, i32, i32
  }
}

</mosaic_0001>

<llo_original>
// kernel: tpu_custom_call.1
$region0: #{tpu_custom_call.1}
  #allocation0 [shape = 'u32[]', space=smem, size = 0x4, offset = 0x4, fixed_abs, tag = 'smem constant byte address 0x4 - core index']
  #allocation1 [shape = 'u32[72,128]{1,0:T(1,128)}', space=vmem, size = 0x9000, scoped, tag = 'internal scratch']
  #allocation2 [shape = 'bf16[18,32,128]{2,1,0:T(8,128)(2,1)}', space=vmem, size = 0x24000, scoped, tag = 'scratch operand']
  %s0 = inlined_call_operand.hbm [shape: f32[2,16,16,16], index: 0, kind: input, shape index: {}]
  %s1 = inlined_call_operand.vmem [shape: bf16[16,128], index: 1, kind: input, shape index: {}]
  %s2 = inlined_call_operand.hbm [shape: bf16[9,128,128], index: 2, kind: input, shape index: {}]
  %s3 = inlined_call_operand.vmem [shape: bf16[128,16], index: 3, kind: input, shape index: {}]
  %s4 = inlined_call_operand.vmem [shape: f32[1,16], index: 4, kind: input, shape index: {}]
  %s5 = inlined_call_operand.vmem [shape: f32[1,16], index: 5, kind: input, shape index: {}]
  %s6 = inlined_call_operand.vmem [shape: f32[1,128], index: 6, kind: input, shape index: {}]
  %s7 = inlined_call_operand.vmem [shape: f32[1,128], index: 7, kind: input, shape index: {}]
  %s8 = inlined_call_operand.hbm [shape: f32[2,16,16,16], index: 8, kind: output, shape index: {}]
  %s9 = sld [smem:[#allocation0]]
  $region73: #{tpu_custom_call.1} parent=0
    _
  %s11 = ssub.s32 1, %s9
  %s12 = scalar_select 0, %s11, %s9
  $region1: #{tpu_custom_call.1} parent=0
    #allocation3 [shape = 'u8[262144]{0}', space=vmem, size = 0x40000, scoped, tag = 'input window, operand 0']
    #allocation4 [shape = 's32[2]{0}', space=sflag, size = 0x8, scoped, tag = 'scoped memory for tpu_custom_call.1']
    #allocation5 [shape = 's32[2]{0}', space=sflag, size = 0x8, scoped, tag = 'scoped memory for tpu_custom_call.1']
    #allocation6 [shape = 'u8[294912]{0}', space=vmem, size = 0x48000, scoped, tag = 'input window, operand 2, single buffered']
    #allocation7 [shape = 's32[1]{0}', space=sflag, size = 0x4, scoped, tag = 'scoped memory for tpu_custom_call.1']
    #allocation8 [shape = 'u8[262144]{0}', space=vmem, size = 0x40000, scoped, tag = 'output window, operand 0']
    %13 = vsyncpa [#allocation4], 0
    %s14 = scalar_lea.sflag [#allocation4], 1
    %15 = vsyncpa %s14, 0
    %16 = vsyncpa [#allocation7], 0
    %17 = vsyncpa [#allocation5], 0
    %s18 = scalar_lea.sflag [#allocation5], 1
    %19 = vsyncpa %s18, 0
    loop: start=0, step=1, limit=4
    $region2: #{tpu_custom_call.1} parent=1 // loop_pre_header
      _
    $region3: #{tpu_custom_call.1} parent=1 // loop_header
      %s21 = sphi 0, %s25
      %p22 = scmp.ge.s32.totalorder %s21, 4
      %s31 = sphi 0, %s33
      %s34 = sphi 0, %s31
      %s35 = sphi 0, %s34
      %s51 = sphi 0, %s35
      %s55 = sphi 0, %s55
      %s57 = sphi 0, %s55
      %s58 = sphi 0, %s57
      %s72 = sphi 0, %s58
      %s76 = sphi 0, %s76
      %s78 = sphi 0, %s76
      %s79 = sphi 0, %s78
      %s93 = sphi 0, %s79
      %s97 = sphi 0, %s97
      %s99 = sphi 0, %s97
      %s100 = sphi 0, %s99
      %s114 = sphi 0, %s100
      %s118 = sphi 0, %s118
      %s120 = sphi 0, %s118
      %s121 = sphi 0, %s120
      %s135 = sphi 0, %s121
      %s139 = sphi 0, %s139
      %s141 = sphi 0, %s139
      %s142 = sphi 0, %s141
      %s156 = sphi 0, %s142
      %s160 = sphi 0, %s160
      %s162 = sphi 0, %s160
      %s163 = sphi 0, %s162
      %s177 = sphi 0, %s163
      %s181 = sphi 0, %s181
      %s183 = sphi 0, %s181
      %s184 = sphi 0, %s183
      %s198 = sphi 0, %s184
      %s204 = sphi 0, %s206
      %s207 = sphi 0, %s204
      %s208 = sphi 0, %s207
      %s224 = sphi 0, %s208
    $region4: #{tpu_custom_call.1} parent=1 // loop_header_branch
      %24 = sbr.rel (%p22) target = $region8
    $region5: #{tpu_custom_call.1} parent=1 // loop_body
      %s26 = ssub.s32 %s21, 1
      %s27 = ssub.s32 %s21, 2
      %s28 = sadd.s32 %s21, 1
      %s29 = ssub.s32 %s21, %s28
      %p30 = scmp.eq.s32.totalorder %s29, 0
      %s32 = sadd.s32 %s31, 1
      %s33 = scalar_select %p30, %s31, %s32
      %p36 = pneg %p30
      %p37 = scmp.eq.s32.totalorder %s21, 1
      %p38 = por %p36, %p37
      %p39 = scmp.ne.s32.totalorder %s31, %s34
      %p40 = scmp.eq.s32.totalorder %s21, 0
      %p41 = por %p39, %p40
      %p42 = scmp.ne.s32.totalorder %s31, %s34
      %p43 = scmp.eq.s32.totalorder %s26, 1
      %p44 = por %p42, %p43
      %p45 = scmp.ne.s32.totalorder %s34, %s35
      %p46 = scmp.eq.s32.totalorder %s26, 0
      %p47 = por %p45, %p46
      %p48 = scmp.ne.s32.totalorder %s34, %s35
      %p49 = scmp.eq.s32.totalorder %s27, 1
      %p50 = por %p48, %p49
      %p52 = scmp.ne.s32.totalorder %s35, %s51
      %p53 = scmp.eq.s32.totalorder %s27, 0
      %p54 = por %p52, %p53
      %s56 = sadd.s32 %s55, 1
      %p59 = scmp.eq.s32.totalorder %s21, 1
      %p60 = scmp.ne.s32.totalorder %s55, %s57
      %p61 = scmp.eq.s32.totalorder %s21, 0
      %p62 = por %p60, %p61
      %p63 = scmp.ne.s32.totalorder %s55, %s57
      %p64 = scmp.eq.s32.totalorder %s26, 1
      %p65 = por %p63, %p64
      %p66 = scmp.ne.s32.totalorder %s57, %s58
      %p67 = scmp.eq.s32.totalorder %s26, 0
      %p68 = por %p66, %p67
      %p69 = scmp.ne.s32.totalorder %s57, %s58
      %p70 = scmp.eq.s32.totalorder %s27, 1
      %p71 = por %p69, %p70
      %p73 = scmp.ne.s32.totalorder %s58, %s72
      %p74 = scmp.eq.s32.totalorder %s27, 0
      %p75 = por %p73, %p74
      %s77 = sadd.s32 %s76, 1
      %p80 = scmp.eq.s32.totalorder %s21, 1
      %p81 = scmp.ne.s32.totalorder %s76, %s78
      %p82 = scmp.eq.s32.totalorder %s21, 0
      %p83 = por %p81, %p82
      %p84 = scmp.ne.s32.totalorder %s76, %s78
      %p85 = scmp.eq.s32.totalorder %s26, 1
      %p86 = por %p84, %p85
      %p87 = scmp.ne.s32.totalorder %s78, %s79
      %p88 = scmp.eq.s32.totalorder %s26, 0
      %p89 = por %p87, %p88
      %p90 = scmp.ne.s32.totalorder %s78, %s79
      %p91 = scmp.eq.s32.totalorder %s27, 1
      %p92 = por %p90, %p91
      %p94 = scmp.ne.s32.totalorder %s79, %s93
      %p95 = scmp.eq.s32.totalorder %s27, 0
      %p96 = por %p94, %p95
      %s98 = sadd.s32 %s97, 1
      %p101 = scmp.eq.s32.totalorder %s21, 1
      %p102 = scmp.ne.s32.totalorder %s97, %s99
      %p103 = scmp.eq.s32.totalorder %s21, 0
      %p104 = por %p102, %p103
      %p105 = scmp.ne.s32.totalorder %s97, %s99
      %p106 = scmp.eq.s32.totalorder %s26, 1
      %p107 = por %p105, %p106
      %p108 = scmp.ne.s32.totalorder %s99, %s100
      %p109 = scmp.eq.s32.totalorder %s26, 0
      %p110 = por %p108, %p109
      %p111 = scmp.ne.s32.totalorder %s99, %s100
      %p112 = scmp.eq.s32.totalorder %s27, 1
      %p113 = por %p111, %p112
      %p115 = scmp.ne.s32.totalorder %s100, %s114
      %p116 = scmp.eq.s32.totalorder %s27, 0
      %p117 = por %p115, %p116
      %s119 = sadd.s32 %s118, 1
      %p122 = scmp.eq.s32.totalorder %s21, 1
      %p123 = scmp.ne.s32.totalorder %s118, %s120
      %p124 = scmp.eq.s32.totalorder %s21, 0
      %p125 = por %p123, %p124
      %p126 = scmp.ne.s32.totalorder %s118, %s120
      %p127 = scmp.eq.s32.totalorder %s26, 1
      %p128 = por %p126, %p127
      %p129 = scmp.ne.s32.totalorder %s120, %s121
      %p130 = scmp.eq.s32.totalorder %s26, 0
      %p131 = por %p129, %p130
      %p132 = scmp.ne.s32.totalorder %s120, %s121
      %p133 = scmp.eq.s32.totalorder %s27, 1
      %p134 = por %p132, %p133
      %p136 = scmp.ne.s32.totalorder %s121, %s135
      %p137 = scmp.eq.s32.totalorder %s27, 0
      %p138 = por %p136, %p137
      %s140 = sadd.s32 %s139, 1
      %p143 = scmp.eq.s32.totalorder %s21, 1
      %p144 = scmp.ne.s32.totalorder %s139, %s141
      %p145 = scmp.eq.s32.totalorder %s21, 0
      %p146 = por %p144, %p145
      %p147 = scmp.ne.s32.totalorder %s139, %s141
      %p148 = scmp.eq.s32.totalorder %s26, 1
      %p149 = por %p147, %p148
      %p150 = scmp.ne.s32.totalorder %s141, %s142
      %p151 = scmp.eq.s32.totalorder %s26, 0
      %p152 = por %p150, %p151
      %p153 = scmp.ne.s32.totalorder %s141, %s142
      %p154 = scmp.eq.s32.totalorder %s27, 1
      %p155 = por %p153, %p154
      %p157 = scmp.ne.s32.totalorder %s142, %s156
      %p158 = scmp.eq.s32.totalorder %s27, 0
      %p159 = por %p157, %p158
      %s161 = sadd.s32 %s160, 1
      %p164 = scmp.eq.s32.totalorder %s21, 1
      %p165 = scmp.ne.s32.totalorder %s160, %s162
      %p166 = scmp.eq.s32.totalorder %s21, 0
      %p167 = por %p165, %p166
      %p168 = scmp.ne.s32.totalorder %s160, %s162
      %p169 = scmp.eq.s32.totalorder %s26, 1
      %p170 = por %p168, %p169
      %p171 = scmp.ne.s32.totalorder %s162, %s163
      %p172 = scmp.eq.s32.totalorder %s26, 0
      %p173 = por %p171, %p172
      %p174 = scmp.ne.s32.totalorder %s162, %s163
      %p175 = scmp.eq.s32.totalorder %s27, 1
      %p176 = por %p174, %p175
      %p178 = scmp.ne.s32.totalorder %s163, %s177
      %p179 = scmp.eq.s32.totalorder %s27, 0
      %p180 = por %p178, %p179
      %s182 = sadd.s32 %s181, 1
      %p185 = scmp.eq.s32.totalorder %s21, 1
      %p186 = scmp.ne.s32.totalorder %s181, %s183
      %p187 = scmp.eq.s32.totalorder %s21, 0
      %p188 = por %p186, %p187
      %p189 = scmp.ne.s32.totalorder %s181, %s183
      %p190 = scmp.eq.s32.totalorder %s26, 1
      %p191 = por %p189, %p190
      %p192 = scmp.ne.s32.totalorder %s183, %s184
      %p193 = scmp.eq.s32.totalorder %s26, 0
      %p194 = por %p192, %p193
      %p195 = scmp.ne.s32.totalorder %s183, %s184
      %p196 = scmp.eq.s32.totalorder %s27, 1
      %p197 = por %p195, %p196
      %p199 = scmp.ne.s32.totalorder %s184, %s198
      %p200 = scmp.eq.s32.totalorder %s27, 0
      %p201 = por %p199, %p200
      %s202 = ssub.s32 %s21, %s28
      %p203 = scmp.eq.s32.totalorder %s202, 0
      %s205 = sadd.s32 %s204, 1
      %s206 = scalar_select %p203, %s204, %s205
      %p209 = pneg %p203
      %p210 = scmp.eq.s32.totalorder %s21, 1
      %p211 = por %p209, %p210
      %p212 = scmp.ne.s32.totalorder %s204, %s207
      %p213 = scmp.eq.s32.totalorder %s21, 0
      %p214 = por %p212, %p213
      %p215 = scmp.ne.s32.totalorder %s204, %s207
      %p216 = scmp.eq.s32.totalorder %s26, 1
      %p217 = por %p215, %p216
      %p218 = scmp.ne.s32.totalorder %s207, %s208
      %p219 = scmp.eq.s32.totalorder %s26, 0
      %p220 = por %p218, %p219
      %p221 = scmp.ne.s32.totalorder %s207, %s208
      %p222 = scmp.eq.s32.totalorder %s27, 1
      %p223 = por %p221, %p222
      %p225 = scmp.ne.s32.totalorder %s208, %s224
      %p226 = scmp.eq.s32.totalorder %s27, 0
      %p227 = por %p225, %p226
      %p228 = scmp.le.s32.totalorder 1, %s21
      %p229 = scmp.lt.s32.totalorder %s21, 3
      %p230 = pnand %p228, %p229
      %p231 = pneg %p230
      // Predicated region
      $region9: #{tpu_custom_call.1} parent=5 // pred_check
        _
      $region10: #{tpu_custom_call.1} parent=5 // pred_check_branch
        %233 = sbr.rel (%p230) target = $region12
      $region11: #{tpu_custom_call.1} parent=5 // pred_region
        %s234 = ssub.s32 %s21, 1
        // Predicated region
        $region13: #{tpu_custom_call.1} parent=11 // pred_check
          %p235 = pneg %p68
        $region14: #{tpu_custom_call.1} parent=11 // pred_check_branch
          %237 = sbr.rel (%p235) target = $region16
        $region15: #{tpu_custom_call.1} parent=11 // pred_region
          _
        $region16: #{tpu_custom_call.1} parent=11 // pred_fallthru
          _
        // Predicated region
        $region17: #{tpu_custom_call.1} parent=11 // pred_check
          %p238 = pneg %p89
        $region18: #{tpu_custom_call.1} parent=11 // pred_check_branch
          %240 = sbr.rel (%p238) target = $region20
        $region19: #{tpu_custom_call.1} parent=11 // pred_region
          %242 = vsyncadd [#allocation7], 0
          %s243 = sshll.u32 %s2, 4
          %s244 = int_to_ptr.hbm [resolvable:$true] %s243
          %s245 = sshll.u32 [#allocation6], 4
          %s246 = int_to_ptr.vmem [resolvable:$true] %s245
          %251 = dma.hbm_to_vmem [thread:$0]  %s244, 9216, %s246, [#allocation7], 64, 64, 4
        $region20: #{tpu_custom_call.1} parent=11 // pred_fallthru
          _
        // Predicated region
        $region21: #{tpu_custom_call.1} parent=11 // pred_check
          %p252 = pneg %p110
        $region22: #{tpu_custom_call.1} parent=11 // pred_check_branch
          %254 = sbr.rel (%p252) target = $region24
        $region23: #{tpu_custom_call.1} parent=11 // pred_region
          _
        $region24: #{tpu_custom_call.1} parent=11 // pred_fallthru
          _
        // Predicated region
        $region25: #{tpu_custom_call.1} parent=11 // pred_check
          %p255 = pneg %p131
        $region26: #{tpu_custom_call.1} parent=11 // pred_check_branch
          %257 = sbr.rel (%p255) target = $region28
        $region27: #{tpu_custom_call.1} parent=11 // pred_region
          _
        $region28: #{tpu_custom_call.1} parent=11 // pred_fallthru
          _
        // Predicated region
        $region29: #{tpu_custom_call.1} parent=11 // pred_check
          %p258 = pneg %p152
        $region30: #{tpu_custom_call.1} parent=11 // pred_check_branch
          %260 = sbr.rel (%p258) target = $region32
        $region31: #{tpu_custom_call.1} parent=11 // pred_region
          _
        $region32: #{tpu_custom_call.1} parent=11 // pred_fallthru
          _
        // Predicated region
        $region33: #{tpu_custom_call.1} parent=11 // pred_check
          %p261 = pneg %p173
        $region34: #{tpu_custom_call.1} parent=11 // pred_check_branch
          %263 = sbr.rel (%p261) target = $region36
        $region35: #{tpu_custom_call.1} parent=11 // pred_region
          _
        $region36: #{tpu_custom_call.1} parent=11 // pred_fallthru
          _
        // Predicated region
        $region37: #{tpu_custom_call.1} parent=11 // pred_check
          %p264 = pneg %p194
        $region38: #{tpu_custom_call.1} parent=11 // pred_check_branch
          %266 = sbr.rel (%p264) target = $region40
        $region39: #{tpu_custom_call.1} parent=11 // pred_region
          _
        $region40: #{tpu_custom_call.1} parent=11 // pred_fallthru
          _
      $region12: #{tpu_custom_call.1} parent=5 // pred_fallthru
        _
      %p267 = scmp.lt.s32.totalorder %s21, 2
      // Predicated region
      $region41: #{tpu_custom_call.1} parent=5 // pred_check
        %p268 = pneg %p267
      $region42: #{tpu_custom_call.1} parent=5 // pred_check_branch
        %270 = sbr.rel (%p268) target = $region44
      $region43: #{tpu_custom_call.1} parent=5 // pred_region
        // Predicated region
        $region45: #{tpu_custom_call.1} parent=43 // pred_check
          %p271 = pneg %p41
        $region46: #{tpu_custom_call.1} parent=43 // pred_check_branch
          %273 = sbr.rel (%p271) target = $region48
        $region47: #{tpu_custom_call.1} parent=43 // pred_region
          %s274 = sand.u32 %s31, 1
          %s275 = scalar_lea.sflag [#allocation4], %s274
          %s276 = sand.u32 %s31, 1
          %s277 = smul.addr %s276, 256
          %s278 = scalar_lea.vmem [#allocation3], %s277
          %280 = vsyncadd %s275, 0
          %s281 = smul.addr %s21, 32
          %s282 = smul.addr %s281, 8
          %s283 = scalar_lea.hbm %s0, %s282
          %s284 = sshll.u32 %s283, 4
          %s285 = int_to_ptr.hbm [resolvable:$true] %s284
          %s286 = sshll.u32 %s278, 4
          %s287 = int_to_ptr.vmem [resolvable:$true] %s286
          %292 = dma.hbm_to_vmem [thread:$0]  %s285, 4096, %s287, %s275, 128, 128, 8
        $region48: #{tpu_custom_call.1} parent=43 // pred_fallthru
          _
      $region44: #{tpu_custom_call.1} parent=5 // pred_fallthru
        _
      %p293 = scmp.le.s32.totalorder 1, %s21
      %p294 = scmp.lt.s32.totalorder %s21, 3
      %p295 = pnand %p293, %p294
      %p296 = pneg %p295
      // Predicated region
      $region49: #{tpu_custom_call.1} parent=5 // pred_check
        _
      $region50: #{tpu_custom_call.1} parent=5 // pred_check_branch
        %298 = sbr.rel (%p295) target = $region52
      $region51: #{tpu_custom_call.1} parent=5 // pred_region
        %s299 = ssub.s32 %s21, 1
        %s300 = sand.u32 %s34, 1
        %s301 = scalar_lea.sflag [#allocation4], %s300
        %s302 = sand.u32 %s34, 1
        %s303 = smul.addr %s302, 256
        %s304 = scalar_lea.vmem [#allocation3], %s303
        // Predicated region
        $region53: #{tpu_custom_call.1} parent=51 // pred_check
          %p305 = pneg %p47
        $region54: #{tpu_custom_call.1} parent=51 // pred_check_branch
          %307 = sbr.rel (%p305) target = $region56
        $region55: #{tpu_custom_call.1} parent=51 // pred_region
          %309 = dma.done %s301, 4096
        $region56: #{tpu_custom_call.1} parent=51 // pred_fallthru
          _
        // Predicated region
        $region57: #{tpu_custom_call.1} parent=51 // pred_check
          %p310 = pneg %p89
        $region58: #{tpu_custom_call.1} parent=51 // pred_check_branch
          %312 = sbr.rel (%p310) target = $region60
        $region59: #{tpu_custom_call.1} parent=51 // pred_region
          %314 = dma.done [#allocation7], 9216
        $region60: #{tpu_custom_call.1} parent=51 // pred_fallthru
          _
        %s315 = sand.u32 %s34, 1
        %s316 = scalar_lea.sflag [#allocation4], %s315
        %s317 = sand.u32 %s34, 1
        %s318 = smul.addr %s317, 256
        %s319 = scalar_lea.vmem [#allocation3], %s318
        %p320 = pneg %p47
        %p321 = pneg %p44
        %p322 = pneg %p68
        %p323 = pneg %p65
        %p324 = pneg %p89
        %p325 = pneg %p86
        %p326 = pneg %p110
        %p327 = pneg %p107
        %p328 = pneg %p131
        %p329 = pneg %p128
        %p330 = pneg %p152
        %p331 = pneg %p149
        %p332 = pneg %p173
        %p333 = pneg %p170
        %p334 = pneg %p194
        %p335 = pneg %p191
        %p336 = pneg %p220
        %p337 = pneg %p217
        %s338 = sand.u32 %s207, 1
        %s339 = scalar_lea.sflag [#allocation5], %s338
        %s340 = sand.u32 %s207, 1
        %s341 = smul.addr %s340, 256
        %s342 = scalar_lea.vmem [#allocation8], %s341
        %v344 = vld [vmem:[%s304] sm:$0xff]
        %v345 = vld [vmem:[%s304 + $0x8] sm:$0xff]
        %v346 = vld [vmem:[%s304 + $0x10] sm:$0xff]
        %v347 = vld [vmem:[%s304 + $0x18] sm:$0xff]
        %v348 = vld [vmem:[%s304 + $0x20] sm:$0xff]
        %v349 = vld [vmem:[%s304 + $0x28] sm:$0xff]
        %v350 = vld [vmem:[%s304 + $0x30] sm:$0xff]
        %v351 = vld [vmem:[%s304 + $0x38] sm:$0xff]
        %v352 = vld [vmem:[%s304 + $0x40] sm:$0xff]
        %v353 = vld [vmem:[%s304 + $0x48] sm:$0xff]
        %v354 = vld [vmem:[%s304 + $0x50] sm:$0xff]
        %v355 = vld [vmem:[%s304 + $0x58] sm:$0xff]
        %v356 = vld [vmem:[%s304 + $0x60] sm:$0xff]
        %v357 = vld [vmem:[%s304 + $0x68] sm:$0xff]
        %v358 = vld [vmem:[%s304 + $0x70] sm:$0xff]
        %v359 = vld [vmem:[%s304 + $0x78] sm:$0xff]
        %v360 = vld [vmem:[%s304 + $0x80] sm:$0xff]
        %v361 = vld [vmem:[%s304 + $0x88] sm:$0xff]
        %v362 = vld [vmem:[%s304 + $0x90] sm:$0xff]
        %v363 = vld [vmem:[%s304 + $0x98] sm:$0xff]
        %v364 = vld [vmem:[%s304 + $0xa0] sm:$0xff]
        %v365 = vld [vmem:[%s304 + $0xa8] sm:$0xff]
        %v366 = vld [vmem:[%s304 + $0xb0] sm:$0xff]
        %v367 = vld [vmem:[%s304 + $0xb8] sm:$0xff]
        %v368 = vld [vmem:[%s304 + $0xc0] sm:$0xff]
        %v369 = vld [vmem:[%s304 + $0xc8] sm:$0xff]
        %v370 = vld [vmem:[%s304 + $0xd0] sm:$0xff]
        %v371 = vld [vmem:[%s304 + $0xd8] sm:$0xff]
        %v372 = vld [vmem:[%s304 + $0xe0] sm:$0xff]
        %v373 = vld [vmem:[%s304 + $0xe8] sm:$0xff]
        %v374 = vld [vmem:[%s304 + $0xf0] sm:$0xff]
        %v375 = vld [vmem:[%s304 + $0xf8] sm:$0xff]
        %v376 = vld [vmem:[%s4] sm:$0x1]
        %v378 = vperm.slane %v376, 0
        %v380 = vmul.f32 %v344, %v378
        %v381 = vmul.f32 %v345, %v378
        %v382 = vmul.f32 %v346, %v378
        %v383 = vmul.f32 %v347, %v378
        %v384 = vmul.f32 %v348, %v378
        %v385 = vmul.f32 %v349, %v378
        %v386 = vmul.f32 %v350, %v378
        %v387 = vmul.f32 %v351, %v378
        %v388 = vmul.f32 %v352, %v378
        %v389 = vmul.f32 %v353, %v378
        %v390 = vmul.f32 %v354, %v378
        %v391 = vmul.f32 %v355, %v378
        %v392 = vmul.f32 %v356, %v378
        %v393 = vmul.f32 %v357, %v378
        %v394 = vmul.f32 %v358, %v378
        %v395 = vmul.f32 %v359, %v378
        %v396 = vmul.f32 %v360, %v378
        %v397 = vmul.f32 %v361, %v378
        %v398 = vmul.f32 %v362, %v378
        %v399 = vmul.f32 %v363, %v378
        %v400 = vmul.f32 %v364, %v378
        %v401 = vmul.f32 %v365, %v378
        %v402 = vmul.f32 %v366, %v378
        %v403 = vmul.f32 %v367, %v378
        %v404 = vmul.f32 %v368, %v378
        %v405 = vmul.f32 %v369, %v378
        %v406 = vmul.f32 %v370, %v378
        %v407 = vmul.f32 %v371, %v378
        %v408 = vmul.f32 %v372, %v378
        %v409 = vmul.f32 %v373, %v378
        %v410 = vmul.f32 %v374, %v378
        %v411 = vmul.f32 %v375, %v378
        %v412 = vld [vmem:[%s5] sm:$0x1]
        %v414 = vperm.slane %v412, 0
        %v416 = vadd.f32 %v380, %v414
        %v417 = vadd.f32 %v381, %v414
        %v418 = vadd.f32 %v382, %v414
        %v419 = vadd.f32 %v383, %v414
        %v420 = vadd.f32 %v384, %v414
        %v421 = vadd.f32 %v385, %v414
        %v422 = vadd.f32 %v386, %v414
        %v423 = vadd.f32 %v387, %v414
        %v424 = vadd.f32 %v388, %v414
        %v425 = vadd.f32 %v389, %v414
        %v426 = vadd.f32 %v390, %v414
        %v427 = vadd.f32 %v391, %v414
        %v428 = vadd.f32 %v392, %v414
        %v429 = vadd.f32 %v393, %v414
        %v430 = vadd.f32 %v394, %v414
        %v431 = vadd.f32 %v395, %v414
        %v432 = vadd.f32 %v396, %v414
        %v433 = vadd.f32 %v397, %v414
        %v434 = vadd.f32 %v398, %v414
        %v435 = vadd.f32 %v399, %v414
        %v436 = vadd.f32 %v400, %v414
        %v437 = vadd.f32 %v401, %v414
        %v438 = vadd.f32 %v402, %v414
        %v439 = vadd.f32 %v403, %v414
        %v440 = vadd.f32 %v404, %v414
        %v441 = vadd.f32 %v405, %v414
        %v442 = vadd.f32 %v406, %v414
        %v443 = vadd.f32 %v407, %v414
        %v444 = vadd.f32 %v408, %v414
        %v445 = vadd.f32 %v409, %v414
        %v446 = vadd.f32 %v410, %v414
        %v447 = vadd.f32 %v411, %v414
        %v448 = vmax.f32 %v416, 0.0
        %v449 = vmax.f32 %v417, 0.0
        %v450 = vmax.f32 %v418, 0.0
        %v451 = vmax.f32 %v419, 0.0
        %v452 = vmax.f32 %v420, 0.0
        %v453 = vmax.f32 %v421, 0.0
        %v454 = vmax.f32 %v422, 0.0
        %v455 = vmax.f32 %v423, 0.0
        %v456 = vmax.f32 %v424, 0.0
        %v457 = vmax.f32 %v425, 0.0
        %v458 = vmax.f32 %v426, 0.0
        %v459 = vmax.f32 %v427, 0.0
        %v460 = vmax.f32 %v428, 0.0
        %v461 = vmax.f32 %v429, 0.0
        %v462 = vmax.f32 %v430, 0.0
        %v463 = vmax.f32 %v431, 0.0
        %v464 = vmax.f32 %v432, 0.0
        %v465 = vmax.f32 %v433, 0.0
        %v466 = vmax.f32 %v434, 0.0
        %v467 = vmax.f32 %v435, 0.0
        %v468 = vmax.f32 %v436, 0.0
        %v469 = vmax.f32 %v437, 0.0
        %v470 = vmax.f32 %v438, 0.0
        %v471 = vmax.f32 %v439, 0.0
        %v472 = vmax.f32 %v440, 0.0
        %v473 = vmax.f32 %v441, 0.0
        %v474 = vmax.f32 %v442, 0.0
        %v475 = vmax.f32 %v443, 0.0
        %v476 = vmax.f32 %v444, 0.0
        %v477 = vmax.f32 %v445, 0.0
        %v478 = vmax.f32 %v446, 0.0
        %v479 = vmax.f32 %v447, 0.0
        %v480 = vpack.c.bf16 %v449, %v448
        %v481 = vpack.c.bf16 %v451, %v450
        %v482 = vpack.c.bf16 %v453, %v452
        %v483 = vpack.c.bf16 %v455, %v454
        %v484 = vpack.c.bf16 %v457, %v456
        %v485 = vpack.c.bf16 %v459, %v458
        %v486 = vpack.c.bf16 %v461, %v460
        %v487 = vpack.c.bf16 %v463, %v462
        %v488 = vpack.c.bf16 %v465, %v464
        %v489 = vpack.c.bf16 %v467, %v466
        %v490 = vpack.c.bf16 %v469, %v468
        %v491 = vpack.c.bf16 %v471, %v470
        %v492 = vpack.c.bf16 %v473, %v472
        %v493 = vpack.c.bf16 %v475, %v474
        %v494 = vpack.c.bf16 %v477, %v476
        %v495 = vpack.c.bf16 %v479, %v478
        %v496 = vld [vmem:[%s1] sm:$0xf]
        %v497 = vld [vmem:[%s1 + $0x4] sm:$0xf]
        %v498 = vld [vmem:[%s6] sm:$0x1]
        %v500 = vperm.slane %v498, 0
        %v504 = vunpack.c.l.b16 %v496
        %v505 = vunpack.c.l.b16 %v497
        %v506 = vpack.c.b16 %v505, %v504
        %vm508 = vcmask 130048
        %v510 = vsel %vm508, %v480, 0
        %v513 = vsel %vm508, %v481, 0
        %v516 = vsel %vm508, %v482, 0
        %v519 = vsel %vm508, %v483, 0
        %v522 = vsel %vm508, %v484, 0
        %v525 = vsel %vm508, %v485, 0
        %v528 = vsel %vm508, %v486, 0
        %v531 = vsel %vm508, %v487, 0
        %v534 = vsel %vm508, %v488, 0
        %v537 = vsel %vm508, %v489, 0
        %v540 = vsel %vm508, %v490, 0
        %v543 = vsel %vm508, %v491, 0
        %v546 = vsel %vm508, %v492, 0
        %v549 = vsel %vm508, %v493, 0
        %v552 = vsel %vm508, %v494, 0
        %v555 = vsel %vm508, %v495, 0
        %557 = vmatpush.bf16.msra.mxu0 0
        %558 = vmatpush.bf16.msra.mxu0 0
        %559 = vmatpush.bf16.msra.mxu0 0
        %560 = vmatpush.bf16.msra.mxu0 0
        %561 = vmatpush.bf16.msra.mxu0 0
        %562 = vmatpush.bf16.msra.mxu0 0
        %563 = vmatpush.bf16.msra.mxu0 0
        %564 = vmatpush.bf16.msra.mxu0 %v506
        %565 = vmatmul.bf16.gmra.mxu0 %v510
        %v566 = vpop.f32.mrf.mxu0
        %v567 = vadd.f32 %v500, %v566
        %v568 = vpop.f32.mrf.mxu0
        %v569 = vadd.f32 %v500, %v568
        %570 = vmatmul.bf16.gmra.mxu0 %v513
        %v571 = vpop.f32.mrf.mxu0
        %v572 = vadd.f32 %v500, %v571
        %v573 = vpop.f32.mrf.mxu0
        %v574 = vadd.f32 %v500, %v573
        %575 = vmatmul.bf16.gmra.mxu0 %v516
        %v576 = vpop.f32.mrf.mxu0
        %v577 = vadd.f32 %v500, %v576
        %v578 = vpop.f32.mrf.mxu0
        %v579 = vadd.f32 %v500, %v578
        %580 = vmatmul.bf16.gmra.mxu0 %v519
        %v581 = vpop.f32.mrf.mxu0
        %v582 = vadd.f32 %v500, %v581
        %v583 = vpop.f32.mrf.mxu0
        %v584 = vadd.f32 %v500, %v583
        %585 = vmatmul.bf16.gmra.mxu0 %v522
        %v586 = vpop.f32.mrf.mxu0
        %v587 = vadd.f32 %v500, %v586
        %v588 = vpop.f32.mrf.mxu0
        %v589 = vadd.f32 %v500, %v588
        %590 = vmatmul.bf16.gmra.mxu0 %v525
        %v591 = vpop.f32.mrf.mxu0
        %v592 = vadd.f32 %v500, %v591
        %v593 = vpop.f32.mrf.mxu0
        %v594 = vadd.f32 %v500, %v593
        %595 = vmatmul.bf16.gmra.mxu0 %v528
        %v596 = vpop.f32.mrf.mxu0
        %v597 = vadd.f32 %v500, %v596
        %v598 = vpop.f32.mrf.mxu0
        %v599 = vadd.f32 %v500, %v598
        %600 = vmatmul.bf16.gmra.mxu0 %v531
        %v601 = vpop.f32.mrf.mxu0
        %v602 = vadd.f32 %v500, %v601
        %v603 = vpop.f32.mrf.mxu0
        %v604 = vadd.f32 %v500, %v603
        %605 = vmatmul.bf16.gmra.mxu0 %v534
        %v606 = vpop.f32.mrf.mxu0
        %v607 = vadd.f32 %v500, %v606
        %v608 = vpop.f32.mrf.mxu0
        %v609 = vadd.f32 %v500, %v608
        %610 = vmatmul.bf16.gmra.mxu0 %v537
        %v611 = vpop.f32.mrf.mxu0
        %v612 = vadd.f32 %v500, %v611
        %v613 = vpop.f32.mrf.mxu0
        %v614 = vadd.f32 %v500, %v613
        %615 = vmatmul.bf16.gmra.mxu0 %v540
        %v616 = vpop.f32.mrf.mxu0
        %v617 = vadd.f32 %v500, %v616
        %v618 = vpop.f32.mrf.mxu0
        %v619 = vadd.f32 %v500, %v618
        %620 = vmatmul.bf16.gmra.mxu0 %v543
        %v621 = vpop.f32.mrf.mxu0
        %v622 = vadd.f32 %v500, %v621
        %v623 = vpop.f32.mrf.mxu0
        %v624 = vadd.f32 %v500, %v623
        %625 = vmatmul.bf16.gmra.mxu0 %v546
        %v626 = vpop.f32.mrf.mxu0
        %v627 = vadd.f32 %v500, %v626
        %v628 = vpop.f32.mrf.mxu0
        %v629 = vadd.f32 %v500, %v628
        %630 = vmatmul.bf16.gmra.mxu0 %v549
        %v631 = vpop.f32.mrf.mxu0
        %v632 = vadd.f32 %v500, %v631
        %v633 = vpop.f32.mrf.mxu0
        %v634 = vadd.f32 %v500, %v633
        %635 = vmatmul.bf16.gmra.mxu0 %v552
        %v636 = vpop.f32.mrf.mxu0
        %v637 = vadd.f32 %v500, %v636
        %v638 = vpop.f32.mrf.mxu0
        %v639 = vadd.f32 %v500, %v638
        %640 = vmatmul.bf16.gmra.mxu0 %v555
        %v641 = vpop.f32.mrf.mxu0
        %v642 = vadd.f32 %v500, %v641
        %v643 = vpop.f32.mrf.mxu0
        %v644 = vadd.f32 %v500, %v643
        %645 = vdwg.mxu0
        %v646 = vmax.f32 %v567, 0.0
        %v647 = vmax.f32 %v569, 0.0
        %v648 = vmax.f32 %v572, 0.0
        %v649 = vmax.f32 %v574, 0.0
        %v650 = vmax.f32 %v577, 0.0
        %v651 = vmax.f32 %v579, 0.0
        %v652 = vmax.f32 %v582, 0.0
        %v653 = vmax.f32 %v584, 0.0
        %v654 = vmax.f32 %v587, 0.0
        %v655 = vmax.f32 %v589, 0.0
        %v656 = vmax.f32 %v592, 0.0
        %v657 = vmax.f32 %v594, 0.0
        %v658 = vmax.f32 %v597, 0.0
        %v659 = vmax.f32 %v599, 0.0
        %v660 = vmax.f32 %v602, 0.0
        %v661 = vmax.f32 %v604, 0.0
        %v662 = vmax.f32 %v607, 0.0
        %v663 = vmax.f32 %v609, 0.0
        %v664 = vmax.f32 %v612, 0.0
        %v665 = vmax.f32 %v614, 0.0
        %v666 = vmax.f32 %v617, 0.0
        %v667 = vmax.f32 %v619, 0.0
        %v668 = vmax.f32 %v622, 0.0
        %v669 = vmax.f32 %v624, 0.0
        %v670 = vmax.f32 %v627, 0.0
        %v671 = vmax.f32 %v629, 0.0
        %v672 = vmax.f32 %v632, 0.0
        %v673 = vmax.f32 %v634, 0.0
        %v674 = vmax.f32 %v637, 0.0
        %v675 = vmax.f32 %v639, 0.0
        %v676 = vmax.f32 %v642, 0.0
        %v677 = vmax.f32 %v644, 0.0
        %v678 = vpack.c.bf16 %v646, %v646
        %v679 = vpack.c.bf16 %v647, %v647
        %v680 = vpack.c.bf16 %v648, %v648
        %v681 = vpack.c.bf16 %v649, %v649
        %v682 = vpack.c.bf16 %v650, %v650
        %v683 = vpack.c.bf16 %v651, %v651
        %v684 = vpack.c.bf16 %v652, %v652
        %v685 = vpack.c.bf16 %v653, %v653
        %v686 = vpack.c.bf16 %v654, %v654
        %v687 = vpack.c.bf16 %v655, %v655
        %v688 = vpack.c.bf16 %v656, %v656
        %v689 = vpack.c.bf16 %v657, %v657
        %v690 = vpack.c.bf16 %v658, %v658
        %v691 = vpack.c.bf16 %v659, %v659
        %v692 = vpack.c.bf16 %v660, %v660
        %v693 = vpack.c.bf16 %v661, %v661
        %v694 = vpack.c.bf16 %v662, %v662
        %v695 = vpack.c.bf16 %v663, %v663
        %v696 = vpack.c.bf16 %v664, %v664
        %v697 = vpack.c.bf16 %v665, %v665
        %v698 = vpack.c.bf16 %v666, %v666
        %v699 = vpack.c.bf16 %v667, %v667
        %v700 = vpack.c.bf16 %v668, %v668
        %v701 = vpack.c.bf16 %v669, %v669
        %v702 = vpack.c.bf16 %v670, %v670
        %v703 = vpack.c.bf16 %v671, %v671
        %v704 = vpack.c.bf16 %v672, %v672
        %v705 = vpack.c.bf16 %v673, %v673
        %v706 = vpack.c.bf16 %v674, %v674
        %v707 = vpack.c.bf16 %v675, %v675
        %v708 = vpack.c.bf16 %v676, %v676
        %v709 = vpack.c.bf16 %v677, %v677
        %s710 = scalar_lea.vmem [#allocation2], 16
        %711 = vst [vmem:[%s710 + $0x4] sm:$0xf] %v678
        %712 = vst [vmem:[%s710 + $0x8] sm:$0xf] %v679
        %713 = vst [vmem:[%s710 + $0x14] sm:$0xf] %v680
        %714 = vst [vmem:[%s710 + $0x18] sm:$0xf] %v681
        %715 = vst [vmem:[%s710 + $0x24] sm:$0xf] %v682
        %716 = vst [vmem:[%s710 + $0x28] sm:$0xf] %v683
        %717 = vst [vmem:[%s710 + $0x34] sm:$0xf] %v684
        %718 = vst [vmem:[%s710 + $0x38] sm:$0xf] %v685
        %719 = vst [vmem:[%s710 + $0x44] sm:$0xf] %v686
        %720 = vst [vmem:[%s710 + $0x48] sm:$0xf] %v687
        %721 = vst [vmem:[%s710 + $0x54] sm:$0xf] %v688
        %722 = vst [vmem:[%s710 + $0x58] sm:$0xf] %v689
        %723 = vst [vmem:[%s710 + $0x64] sm:$0xf] %v690
        %724 = vst [vmem:[%s710 + $0x68] sm:$0xf] %v691
        %725 = vst [vmem:[%s710 + $0x74] sm:$0xf] %v692
        %726 = vst [vmem:[%s710 + $0x78] sm:$0xf] %v693
        %727 = vst [vmem:[%s710 + $0x84] sm:$0xf] %v694
        %728 = vst [vmem:[%s710 + $0x88] sm:$0xf] %v695
        %729 = vst [vmem:[%s710 + $0x94] sm:$0xf] %v696
        %730 = vst [vmem:[%s710 + $0x98] sm:$0xf] %v697
        %731 = vst [vmem:[%s710 + $0xa4] sm:$0xf] %v698
        %732 = vst [vmem:[%s710 + $0xa8] sm:$0xf] %v699
        %733 = vst [vmem:[%s710 + $0xb4] sm:$0xf] %v700
        %734 = vst [vmem:[%s710 + $0xb8] sm:$0xf] %v701
        %735 = vst [vmem:[%s710 + $0xc4] sm:$0xf] %v702
        %736 = vst [vmem:[%s710 + $0xc8] sm:$0xf] %v703
        %737 = vst [vmem:[%s710 + $0xd4] sm:$0xf] %v704
        %738 = vst [vmem:[%s710 + $0xd8] sm:$0xf] %v705
        %739 = vst [vmem:[%s710 + $0xe4] sm:$0xf] %v706
        %740 = vst [vmem:[%s710 + $0xe8] sm:$0xf] %v707
        %741 = vst [vmem:[%s710 + $0xf4] sm:$0xf] %v708
        %742 = vst [vmem:[%s710 + $0xf8] sm:$0xf] %v709
        %743 = vst [vmem:[#allocation2] sm:$0xf] 0
        %744 = vst [vmem:[#allocation2 + $0x4] sm:$0xf] 0
        %745 = vst [vmem:[#allocation2 + $0x8] sm:$0xf] 0
        %746 = vst [vmem:[#allocation2 + $0xc] sm:$0xf] 0
        %s747 = scalar_lea.vmem [#allocation2], 272
        %748 = vst [vmem:[%s747] sm:$0xf] 0
        %749 = vst [vmem:[%s747 + $0x4] sm:$0xf] 0
        %750 = vst [vmem:[%s747 + $0x8] sm:$0xf] 0
        %751 = vst [vmem:[%s747 + $0xc] sm:$0xf] 0
        %vm752 = vcmask 1043459
        %vm753 = vsmask.f32 7950
        %vm754 = vmand %vm752, %vm753
        %v755 = vld [vmem:[%s710] sm:$0x8]
        %v756 = vsel %vm754, 0, %v755
        %757 = vst [vmem:[%s710] sm:$0x8] %v756
        %v758 = vld [vmem:[%s710 + $0x10] sm:$0x8]
        %v759 = vsel %vm754, 0, %v758
        %760 = vst [vmem:[%s710 + $0x10] sm:$0x8] %v759
        %v761 = vld [vmem:[%s710 + $0x20] sm:$0x8]
        %v762 = vsel %vm754, 0, %v761
        %763 = vst [vmem:[%s710 + $0x20] sm:$0x8] %v762
        %v764 = vld [vmem:[%s710 + $0x30] sm:$0x8]
        %v765 = vsel %vm754, 0, %v764
        %766 = vst [vmem:[%s710 + $0x30] sm:$0x8] %v765
        %v767 = vld [vmem:[%s710 + $0x40] sm:$0x8]
        %v768 = vsel %vm754, 0, %v767
        %769 = vst [vmem:[%s710 + $0x40] sm:$0x8] %v768
        %v770 = vld [vmem:[%s710 + $0x50] sm:$0x8]
        %v771 = vsel %vm754, 0, %v770
        %772 = vst [vmem:[%s710 + $0x50] sm:$0x8] %v771
        %v773 = vld [vmem:[%s710 + $0x60] sm:$0x8]
        %v774 = vsel %vm754, 0, %v773
        %775 = vst [vmem:[%s710 + $0x60] sm:$0x8] %v774
        %v776 = vld [vmem:[%s710 + $0x70] sm:$0x8]
        %v777 = vsel %vm754, 0, %v776
        %778 = vst [vmem:[%s710 + $0x70] sm:$0x8] %v777
        %v779 = vld [vmem:[%s710 + $0x80] sm:$0x8]
        %v780 = vsel %vm754, 0, %v779
        %781 = vst [vmem:[%s710 + $0x80] sm:$0x8] %v780
        %v782 = vld [vmem:[%s710 + $0x90] sm:$0x8]
        %v783 = vsel %vm754, 0, %v782
        %784 = vst [vmem:[%s710 + $0x90] sm:$0x8] %v783
        %v785 = vld [vmem:[%s710 + $0xa0] sm:$0x8]
        %v786 = vsel %vm754, 0, %v785
        %787 = vst [vmem:[%s710 + $0xa0] sm:$0x8] %v786
        %v788 = vld [vmem:[%s710 + $0xb0] sm:$0x8]
        %v789 = vsel %vm754, 0, %v788
        %790 = vst [vmem:[%s710 + $0xb0] sm:$0x8] %v789
        %v791 = vld [vmem:[%s710 + $0xc0] sm:$0x8]
        %v792 = vsel %vm754, 0, %v791
        %793 = vst [vmem:[%s710 + $0xc0] sm:$0x8] %v792
        %v794 = vld [vmem:[%s710 + $0xd0] sm:$0x8]
        %v795 = vsel %vm754, 0, %v794
        %796 = vst [vmem:[%s710 + $0xd0] sm:$0x8] %v795
        %v797 = vld [vmem:[%s710 + $0xe0] sm:$0x8]
        %v798 = vsel %vm754, 0, %v797
        %799 = vst [vmem:[%s710 + $0xe0] sm:$0x8] %v798
        %v800 = vld [vmem:[%s710 + $0xf0] sm:$0x8]
        %v801 = vsel %vm754, 0, %v800
        %802 = vst [vmem:[%s710 + $0xf0] sm:$0x8] %v801
        %vm803 = vcmask 1040384
        %vm804 = vsmask.f32 256
        %vm805 = vmand %vm803, %vm804
        %v806 = vld [vmem:[%s710 + $0xc] sm:$0x1]
        %v807 = vsel %vm805, 0, %v806
        %808 = vst [vmem:[%s710 + $0xc] sm:$0x1] %v807
        %v809 = vld [vmem:[%s710 + $0x1c] sm:$0x1]
        %v810 = vsel %vm805, 0, %v809
        %811 = vst [vmem:[%s710 + $0x1c] sm:$0x1] %v810
        %v812 = vld [vmem:[%s710 + $0x2c] sm:$0x1]
        %v813 = vsel %vm805, 0, %v812
        %814 = vst [vmem:[%s710 + $0x2c] sm:$0x1] %v813
        %v815 = vld [vmem:[%s710 + $0x3c] sm:$0x1]
        %v816 = vsel %vm805, 0, %v815
        %817 = vst [vmem:[%s710 + $0x3c] sm:$0x1] %v816
        %v818 = vld [vmem:[%s710 + $0x4c] sm:$0x1]
        %v819 = vsel %vm805, 0, %v818
        %820 = vst [vmem:[%s710 + $0x4c] sm:$0x1] %v819
        %v821 = vld [vmem:[%s710 + $0x5c] sm:$0x1]
        %v822 = vsel %vm805, 0, %v821
        %823 = vst [vmem:[%s710 + $0x5c] sm:$0x1] %v822
        %v824 = vld [vmem:[%s710 + $0x6c] sm:$0x1]
        %v825 = vsel %vm805, 0, %v824
        %826 = vst [vmem:[%s710 + $0x6c] sm:$0x1] %v825
        %v827 = vld [vmem:[%s710 + $0x7c] sm:$0x1]
        %v828 = vsel %vm805, 0, %v827
        %829 = vst [vmem:[%s710 + $0x7c] sm:$0x1] %v828
        %v830 = vld [vmem:[%s710 + $0x8c] sm:$0x1]
        %v831 = vsel %vm805, 0, %v830
        %832 = vst [vmem:[%s710 + $0x8c] sm:$0x1] %v831
        %v833 = vld [vmem:[%s710 + $0x9c] sm:$0x1]
        %v834 = vsel %vm805, 0, %v833
        %835 = vst [vmem:[%s710 + $0x9c] sm:$0x1] %v834
        %v836 = vld [vmem:[%s710 + $0xac] sm:$0x1]
        %v837 = vsel %vm805, 0, %v836
        %838 = vst [vmem:[%s710 + $0xac] sm:$0x1] %v837
        %v839 = vld [vmem:[%s710 + $0xbc] sm:$0x1]
        %v840 = vsel %vm805, 0, %v839
        %841 = vst [vmem:[%s710 + $0xbc] sm:$0x1] %v840
        %v842 = vld [vmem:[%s710 + $0xcc] sm:$0x1]
        %v843 = vsel %vm805, 0, %v842
        %844 = vst [vmem:[%s710 + $0xcc] sm:$0x1] %v843
        %v845 = vld [vmem:[%s710 + $0xdc] sm:$0x1]
        %v846 = vsel %vm805, 0, %v845
        %847 = vst [vmem:[%s710 + $0xdc] sm:$0x1] %v846
        %v848 = vld [vmem:[%s710 + $0xec] sm:$0x1]
        %v849 = vsel %vm805, 0, %v848
        %850 = vst [vmem:[%s710 + $0xec] sm:$0x1] %v849
        %v851 = vld [vmem:[%s710 + $0xfc] sm:$0x1]
        %v852 = vsel %vm805, 0, %v851
        %853 = vst [vmem:[%s710 + $0xfc] sm:$0x1] %v852
        %v854 = vld [vmem:[#allocation2] sm:$0x8]
        %v855 = vld [vmem:[#allocation2 + $0x4] sm:$0xf]
        %v856 = vld [vmem:[#allocation2 + $0x8] sm:$0xf]
        %v857 = vld [vmem:[#allocation2 + $0x10] sm:$0x8]
        %v858 = vld [vmem:[#allocation2 + $0x14] sm:$0xf]
        %v859 = vld [vmem:[#allocation2 + $0x18] sm:$0xf]
        %v860 = vld [vmem:[#allocation2 + $0x20] sm:$0x8]
        %v861 = vld [vmem:[#allocation2 + $0x24] sm:$0xf]
        %v862 = vld [vmem:[#allocation2 + $0x28] sm:$0xf]
        %v863 = vld [vmem:[#allocation2 + $0x30] sm:$0x8]
        %v864 = vld [vmem:[#allocation2 + $0x34] sm:$0xf]
        %v865 = vld [vmem:[#allocation2 + $0x38] sm:$0xf]
        %v866 = vld [vmem:[#allocation2 + $0x40] sm:$0x8]
        %v867 = vld [vmem:[#allocation2 + $0x44] sm:$0xf]
        %v868 = vld [vmem:[#allocation2 + $0x48] sm:$0xf]
        %v869 = vld [vmem:[#allocation2 + $0x50] sm:$0x8]
        %v870 = vld [vmem:[#allocation2 + $0x54] sm:$0xf]
        %v871 = vld [vmem:[#allocation2 + $0x58] sm:$0xf]
        %v872 = vld [vmem:[#allocation2 + $0x60] sm:$0x8]
        %v873 = vld [vmem:[#allocation2 + $0x64] sm:$0xf]
        %v874 = vld [vmem:[#allocation2 + $0x68] sm:$0xf]
        %v875 = vld [vmem:[#allocation2 + $0x70] sm:$0x8]
        %v876 = vld [vmem:[#allocation2 + $0x74] sm:$0xf]
        %v877 = vld [vmem:[#allocation2 + $0x78] sm:$0xf]
        %v878 = vld [vmem:[#allocation2 + $0x80] sm:$0x8]
        %v879 = vld [vmem:[#allocation2 + $0x84] sm:$0xf]
        %v880 = vld [vmem:[#allocation2 + $0x88] sm:$0xf]
        %v881 = vld [vmem:[#allocation2 + $0x90] sm:$0x8]
        %v882 = vld [vmem:[#allocation2 + $0x94] sm:$0xf]
        %v883 = vld [vmem:[#allocation2 + $0x98] sm:$0xf]
        %v884 = vld [vmem:[#allocation2 + $0xa0] sm:$0x8]
        %v885 = vld [vmem:[#allocation2 + $0xa4] sm:$0xf]
        %v886 = vld [vmem:[#allocation2 + $0xa8] sm:$0xf]
        %v887 = vld [vmem:[#allocation2 + $0xb0] sm:$0x8]
        %v888 = vld [vmem:[#allocation2 + $0xb4] sm:$0xf]
        %v889 = vld [vmem:[#allocation2 + $0xb8] sm:$0xf]
        %v890 = vld [vmem:[#allocation2 + $0xc0] sm:$0x8]
        %v891 = vld [vmem:[#allocation2 + $0xc4] sm:$0xf]
        %v892 = vld [vmem:[#allocation2 + $0xc8] sm:$0xf]
        %v893 = vld [vmem:[#allocation2 + $0xd0] sm:$0x8]
        %v894 = vld [vmem:[#allocation2 + $0xd4] sm:$0xf]
        %v895 = vld [vmem:[#allocation2 + $0xd8] sm:$0xf]
        %v896 = vld [vmem:[#allocation2 + $0xe0] sm:$0x8]
        %v897 = vld [vmem:[#allocation2 + $0xe4] sm:$0xf]
        %v898 = vld [vmem:[#allocation2 + $0xe8] sm:$0xf]
        %v899 = vld [vmem:[#allocation2 + $0xf0] sm:$0x8]
        %v900 = vld [vmem:[#allocation2 + $0xf4] sm:$0xf]
        %v901 = vld [vmem:[#allocation2 + $0xf8] sm:$0xf]
        %vm902 = vsmask.f32 4368
        %vm903 = vmor %vm804, %vm902
        %v905 = vshrl.u32 %v854, 16
        %v907 = vrot.slane %v905, 7
        %v908 = vrot.slane %v907, 4
        %v910 = vshrl.u32 %v855, 16
        %v912 = vrot.slane %v910, 7
        %v913 = vshll.u32 %v855, 16
        %v915 = vor.u32 %v912, %v913
        %v916 = vsel %vm903, %v908, %v915
        %v917 = vrot.slane %v912, 4
        %v919 = vshrl.u32 %v856, 16
        %v921 = vrot.slane %v919, 7
        %v922 = vshll.u32 %v856, 16
        %v924 = vor.u32 %v921, %v922
        %v925 = vsel %vm903, %v917, %v924
        %v927 = vshrl.u32 %v857, 16
        %v929 = vrot.slane %v927, 7
        %v930 = vrot.slane %v929, 4
        %v932 = vshrl.u32 %v858, 16
        %v934 = vrot.slane %v932, 7
        %v935 = vshll.u32 %v858, 16
        %v937 = vor.u32 %v934, %v935
        %v938 = vsel %vm903, %v930, %v937
        %v939 = vrot.slane %v934, 4
        %v941 = vshrl.u32 %v859, 16
        %v943 = vrot.slane %v941, 7
        %v944 = vshll.u32 %v859, 16
        %v946 = vor.u32 %v943, %v944
        %v947 = vsel %vm903, %v939, %v946
        %v949 = vshrl.u32 %v860, 16
        %v951 = vrot.slane %v949, 7
        %v952 = vrot.slane %v951, 4
        %v954 = vshrl.u32 %v861, 16
        %v956 = vrot.slane %v954, 7
        %v957 = vshll.u32 %v861, 16
        %v959 = vor.u32 %v956, %v957
        %v960 = vsel %vm903, %v952, %v959
        %v961 = vrot.slane %v956, 4
        %v963 = vshrl.u32 %v862, 16
        %v965 = vrot.slane %v963, 7
        %v966 = vshll.u32 %v862, 16
        %v968 = vor.u32 %v965, %v966
        %v969 = vsel %vm903, %v961, %v968
        %v971 = vshrl.u32 %v863, 16
        %v973 = vrot.slane %v971, 7
        %v974 = vrot.slane %v973, 4
        %v976 = vshrl.u32 %v864, 16
        %v978 = vrot.slane %v976, 7
        %v979 = vshll.u32 %v864, 16
        %v981 = vor.u32 %v978, %v979
        %v982 = vsel %vm903, %v974, %v981
        %v983 = vrot.slane %v978, 4
        %v985 = vshrl.u32 %v865, 16
        %v987 = vrot.slane %v985, 7
        %v988 = vshll.u32 %v865, 16
        %v990 = vor.u32 %v987, %v988
        %v991 = vsel %vm903, %v983, %v990
        %v993 = vshrl.u32 %v866, 16
        %v995 = vrot.slane %v993, 7
        %v996 = vrot.slane %v995, 4
        %v998 = vshrl.u32 %v867, 16
        %v1000 = vrot.slane %v998, 7
        %v1001 = vshll.u32 %v867, 16
        %v1003 = vor.u32 %v1000, %v1001
        %v1004 = vsel %vm903, %v996, %v1003
        %v1005 = vrot.slane %v1000, 4
        %v1007 = vshrl.u32 %v868, 16
        %v1009 = vrot.slane %v1007, 7
        %v1010 = vshll.u32 %v868, 16
        %v1012 = vor.u32 %v1009, %v1010
        %v1013 = vsel %vm903, %v1005, %v1012
        %v1015 = vshrl.u32 %v869, 16
        %v1017 = vrot.slane %v1015, 7
        %v1018 = vrot.slane %v1017, 4
        %v1020 = vshrl.u32 %v870, 16
        %v1022 = vrot.slane %v1020, 7
        %v1023 = vshll.u32 %v870, 16
        %v1025 = vor.u32 %v1022, %v1023
        %v1026 = vsel %vm903, %v1018, %v1025
        %v1027 = vrot.slane %v1022, 4
        %v1029 = vshrl.u32 %v871, 16
        %v1031 = vrot.slane %v1029, 7
        %v1032 = vshll.u32 %v871, 16
        %v1034 = vor.u32 %v1031, %v1032
        %v1035 = vsel %vm903, %v1027, %v1034
        %v1037 = vshrl.u32 %v872, 16
        %v1039 = vrot.slane %v1037, 7
        %v1040 = vrot.slane %v1039, 4
        %v1042 = vshrl.u32 %v873, 16
        %v1044 = vrot.slane %v1042, 7
        %v1045 = vshll.u32 %v873, 16
        %v1047 = vor.u32 %v1044, %v1045
        %v1048 = vsel %vm903, %v1040, %v1047
        %v1049 = vrot.slane %v1044, 4
        %v1051 = vshrl.u32 %v874, 16
        %v1053 = vrot.slane %v1051, 7
        %v1054 = vshll.u32 %v874, 16
        %v1056 = vor.u32 %v1053, %v1054
        %v1057 = vsel %vm903, %v1049, %v1056
        %v1059 = vshrl.u32 %v875, 16
        %v1061 = vrot.slane %v1059, 7
        %v1062 = vrot.slane %v1061, 4
        %v1064 = vshrl.u32 %v876, 16
        %v1066 = vrot.slane %v1064, 7
        %v1067 = vshll.u32 %v876, 16
        %v1069 = vor.u32 %v1066, %v1067
        %v1070 = vsel %vm903, %v1062, %v1069
        %v1071 = vrot.slane %v1066, 4
        %v1073 = vshrl.u32 %v877, 16
        %v1075 = vrot.slane %v1073, 7
        %v1076 = vshll.u32 %v877, 16
        %v1078 = vor.u32 %v1075, %v1076
        %v1079 = vsel %vm903, %v1071, %v1078
        %v1081 = vshrl.u32 %v878, 16
        %v1083 = vrot.slane %v1081, 7
        %v1084 = vrot.slane %v1083, 4
        %v1086 = vshrl.u32 %v879, 16
        %v1088 = vrot.slane %v1086, 7
        %v1089 = vshll.u32 %v879, 16
        %v1091 = vor.u32 %v1088, %v1089
        %v1092 = vsel %vm903, %v1084, %v1091
        %v1093 = vrot.slane %v1088, 4
        %v1095 = vshrl.u32 %v880, 16
        %v1097 = vrot.slane %v1095, 7
        %v1098 = vshll.u32 %v880, 16
        %v1100 = vor.u32 %v1097, %v1098
        %v1101 = vsel %vm903, %v1093, %v1100
        %v1103 = vshrl.u32 %v881, 16
        %v1105 = vrot.slane %v1103, 7
        %v1106 = vrot.slane %v1105, 4
        %v1108 = vshrl.u32 %v882, 16
        %v1110 = vrot.slane %v1108, 7
        %v1111 = vshll.u32 %v882, 16
        %v1113 = vor.u32 %v1110, %v1111
        %v1114 = vsel %vm903, %v1106, %v1113
        %v1115 = vrot.slane %v1110, 4
        %v1117 = vshrl.u32 %v883, 16
        %v1119 = vrot.slane %v1117, 7
        %v1120 = vshll.u32 %v883, 16
        %v1122 = vor.u32 %v1119, %v1120
        %v1123 = vsel %vm903, %v1115, %v1122
        %v1125 = vshrl.u32 %v884, 16
        %v1127 = vrot.slane %v1125, 7
        %v1128 = vrot.slane %v1127, 4
        %v1130 = vshrl.u32 %v885, 16
        %v1132 = vrot.slane %v1130, 7
        %v1133 = vshll.u32 %v885, 16
        %v1135 = vor.u32 %v1132, %v1133
        %v1136 = vsel %vm903, %v1128, %v1135
        %v1137 = vrot.slane %v1132, 4
        %v1139 = vshrl.u32 %v886, 16
        %v1141 = vrot.slane %v1139, 7
        %v1142 = vshll.u32 %v886, 16
        %v1144 = vor.u32 %v1141, %v1142
        %v1145 = vsel %vm903, %v1137, %v1144
        %v1147 = vshrl.u32 %v887, 16
        %v1149 = vrot.slane %v1147, 7
        %v1150 = vrot.slane %v1149, 4
        %v1152 = vshrl.u32 %v888, 16
        %v1154 = vrot.slane %v1152, 7
        %v1155 = vshll.u32 %v888, 16
        %v1157 = vor.u32 %v1154, %v1155
        %v1158 = vsel %vm903, %v1150, %v1157
        %v1159 = vrot.slane %v1154, 4
        %v1161 = vshrl.u32 %v889, 16
        %v1163 = vrot.slane %v1161, 7
        %v1164 = vshll.u32 %v889, 16
        %v1166 = vor.u32 %v1163, %v1164
        %v1167 = vsel %vm903, %v1159, %v1166
        %v1169 = vshrl.u32 %v890, 16
        %v1171 = vrot.slane %v1169, 7
        %v1172 = vrot.slane %v1171, 4
        %v1174 = vshrl.u32 %v891, 16
        %v1176 = vrot.slane %v1174, 7
        %v1177 = vshll.u32 %v891, 16
        %v1179 = vor.u32 %v1176, %v1177
        %v1180 = vsel %vm903, %v1172, %v1179
        %v1181 = vrot.slane %v1176, 4
        %v1183 = vshrl.u32 %v892, 16
        %v1185 = vrot.slane %v1183, 7
        %v1186 = vshll.u32 %v892, 16
        %v1188 = vor.u32 %v1185, %v1186
        %v1189 = vsel %vm903, %v1181, %v1188
        %v1191 = vshrl.u32 %v893, 16
        %v1193 = vrot.slane %v1191, 7
        %v1194 = vrot.slane %v1193, 4
        %v1196 = vshrl.u32 %v894, 16
        %v1198 = vrot.slane %v1196, 7
        %v1199 = vshll.u32 %v894, 16
        %v1201 = vor.u32 %v1198, %v1199
        %v1202 = vsel %vm903, %v1194, %v1201
        %v1203 = vrot.slane %v1198, 4
        %v1205 = vshrl.u32 %v895, 16
        %v1207 = vrot.slane %v1205, 7
        %v1208 = vshll.u32 %v895, 16
        %v1210 = vor.u32 %v1207, %v1208
        %v1211 = vsel %vm903, %v1203, %v1210
        %v1213 = vshrl.u32 %v896, 16
        %v1215 = vrot.slane %v1213, 7
        %v1216 = vrot.slane %v1215, 4
        %v1218 = vshrl.u32 %v897, 16
        %v1220 = vrot.slane %v1218, 7
        %v1221 = vshll.u32 %v897, 16
        %v1223 = vor.u32 %v1220, %v1221
        %v1224 = vsel %vm903, %v1216, %v1223
        %v1225 = vrot.slane %v1220, 4
        %v1227 = vshrl.u32 %v898, 16
        %v1229 = vrot.slane %v1227, 7
        %v1230 = vshll.u32 %v898, 16
        %v1232 = vor.u32 %v1229, %v1230
        %v1233 = vsel %vm903, %v1225, %v1232
        %v1235 = vshrl.u32 %v899, 16
        %v1237 = vrot.slane %v1235, 7
        %v1238 = vrot.slane %v1237, 4
        %v1240 = vshrl.u32 %v900, 16
        %v1242 = vrot.slane %v1240, 7
        %v1243 = vshll.u32 %v900, 16
        %v1245 = vor.u32 %v1242, %v1243
        %v1246 = vsel %vm903, %v1238, %v1245
        %v1247 = vrot.slane %v1242, 4
        %v1249 = vshrl.u32 %v901, 16
        %v1251 = vrot.slane %v1249, 7
        %v1252 = vshll.u32 %v901, 16
        %v1254 = vor.u32 %v1251, %v1252
        %v1255 = vsel %vm903, %v1247, %v1254
        %v1256 = vld [vmem:[#allocation6] sm:$0xf]
        %v1257 = vld [vmem:[#allocation6 + $0x4] sm:$0xf]
        %v1258 = vld [vmem:[#allocation6 + $0x8] sm:$0xf]
        %v1259 = vld [vmem:[#allocation6 + $0xc] sm:$0xf]
        %v1260 = vld [vmem:[#allocation6 + $0x10] sm:$0xf]
        %v1261 = vld [vmem:[#allocation6 + $0x14] sm:$0xf]
        %v1262 = vld [vmem:[#allocation6 + $0x18] sm:$0xf]
        %v1263 = vld [vmem:[#allocation6 + $0x1c] sm:$0xf]
        %v1264 = vld [vmem:[#allocation6 + $0x20] sm:$0xf]
        %v1265 = vld [vmem:[#allocation6 + $0x24] sm:$0xf]
        %v1266 = vld [vmem:[#allocation6 + $0x28] sm:$0xf]
        %v1267 = vld [vmem:[#allocation6 + $0x2c] sm:$0xf]
        %v1268 = vld [vmem:[#allocation6 + $0x30] sm:$0xf]
        %v1269 = vld [vmem:[#allocation6 + $0x34] sm:$0xf]
        %v1270 = vld [vmem:[#allocation6 + $0x38] sm:$0xf]
        %v1271 = vld [vmem:[#allocation6 + $0x3c] sm:$0xf]
        %s1272 = scalar_lea.vmem [#allocation6], 64
        %v1273 = vld [vmem:[%s1272] sm:$0xf]
        %v1274 = vld [vmem:[%s1272 + $0x4] sm:$0xf]
        %v1275 = vld [vmem:[%s1272 + $0x8] sm:$0xf]
        %v1276 = vld [vmem:[%s1272 + $0xc] sm:$0xf]
        %v1277 = vld [vmem:[%s1272 + $0x10] sm:$0xf]
        %v1278 = vld [vmem:[%s1272 + $0x14] sm:$0xf]
        %v1279 = vld [vmem:[%s1272 + $0x18] sm:$0xf]
        %v1280 = vld [vmem:[%s1272 + $0x1c] sm:$0xf]
        %v1281 = vld [vmem:[%s1272 + $0x20] sm:$0xf]
        %v1282 = vld [vmem:[%s1272 + $0x24] sm:$0xf]
        %v1283 = vld [vmem:[%s1272 + $0x28] sm:$0xf]
        %v1284 = vld [vmem:[%s1272 + $0x2c] sm:$0xf]
        %v1285 = vld [vmem:[%s1272 + $0x30] sm:$0xf]
        %v1286 = vld [vmem:[%s1272 + $0x34] sm:$0xf]
        %v1287 = vld [vmem:[%s1272 + $0x38] sm:$0xf]
        %v1288 = vld [vmem:[%s1272 + $0x3c] sm:$0xf]
        %v1321 = vunpack.c.l.b16 %v855
        %v1322 = vunpack.c.l.b16 %v856
        %v1323 = vunpack.c.l.b16 %v858
        %v1324 = vunpack.c.l.b16 %v859
        %v1325 = vunpack.c.l.b16 %v861
        %v1326 = vunpack.c.l.b16 %v862
        %v1327 = vunpack.c.l.b16 %v864
        %v1328 = vunpack.c.l.b16 %v865
        %v1329 = vunpack.c.l.b16 %v867
        %v1330 = vunpack.c.l.b16 %v868
        %v1331 = vunpack.c.l.b16 %v870
        %v1332 = vunpack.c.l.b16 %v871
        %v1333 = vunpack.c.l.b16 %v873
        %v1334 = vunpack.c.l.b16 %v874
        %v1335 = vunpack.c.l.b16 %v876
        %v1336 = vunpack.c.l.b16 %v877
        %v1337 = vunpack.c.l.b16 %v879
        %v1338 = vunpack.c.l.b16 %v880
        %v1339 = vunpack.c.l.b16 %v882
        %v1340 = vunpack.c.l.b16 %v883
        %v1341 = vunpack.c.l.b16 %v885
        %v1342 = vunpack.c.l.b16 %v886
        %v1343 = vunpack.c.l.b16 %v888
        %v1344 = vunpack.c.l.b16 %v889
        %v1345 = vunpack.c.l.b16 %v891
        %v1346 = vunpack.c.l.b16 %v892
        %v1347 = vunpack.c.l.b16 %v894
        %v1348 = vunpack.c.l.b16 %v895
        %v1349 = vunpack.c.l.b16 %v897
        %v1350 = vunpack.c.l.b16 %v898
        %v1351 = vunpack.c.l.b16 %v900
        %v1352 = vunpack.c.l.b16 %v901
        %v1353 = vpack.c.b16 %v1322, %v1321
        %v1354 = vpack.c.b16 %v1324, %v1323
        %v1355 = vpack.c.b16 %v1326, %v1325
        %v1356 = vpack.c.b16 %v1328, %v1327
        %v1357 = vpack.c.b16 %v1330, %v1329
        %v1358 = vpack.c.b16 %v1332, %v1331
        %v1359 = vpack.c.b16 %v1334, %v1333
        %v1360 = vpack.c.b16 %v1336, %v1335
        %v1361 = vpack.c.b16 %v1338, %v1337
        %v1362 = vpack.c.b16 %v1340, %v1339
        %v1363 = vpack.c.b16 %v1342, %v1341
        %v1364 = vpack.c.b16 %v1344, %v1343
        %v1365 = vpack.c.b16 %v1346, %v1345
        %v1366 = vpack.c.b16 %v1348, %v1347
        %v1367 = vpack.c.b16 %v1350, %v1349
        %v1368 = vpack.c.b16 %v1352, %v1351
        %v1401 = vunpack.c.l.b16 %v1273
        %v1402 = vunpack.c.l.b16 %v1274
        %v1403 = vunpack.c.l.b16 %v1275
        %v1404 = vunpack.c.l.b16 %v1276
        %v1405 = vunpack.c.l.b16 %v1277
        %v1406 = vunpack.c.l.b16 %v1278
        %v1407 = vunpack.c.l.b16 %v1279
        %v1408 = vunpack.c.l.b16 %v1280
        %v1409 = vunpack.c.l.b16 %v1281
        %v1410 = vunpack.c.l.b16 %v1282
        %v1411 = vunpack.c.l.b16 %v1283
        %v1412 = vunpack.c.l.b16 %v1284
        %v1413 = vunpack.c.l.b16 %v1285
        %v1414 = vunpack.c.l.b16 %v1286
        %v1415 = vunpack.c.l.b16 %v1287
        %v1416 = vunpack.c.l.b16 %v1288
        %v1417 = vpack.c.b16 %v1402, %v1401
        %v1418 = vpack.c.b16 %v1404, %v1403
        %v1419 = vpack.c.b16 %v1406, %v1405
        %v1420 = vpack.c.b16 %v1408, %v1407
        %v1421 = vpack.c.b16 %v1410, %v1409
        %v1422 = vpack.c.b16 %v1412, %v1411
        %v1423 = vpack.c.b16 %v1414, %v1413
        %v1424 = vpack.c.b16 %v1416, %v1415
        %1433 = vmatpush.bf16.msra.mxu0 %v1424
        %1434 = vmatpush.bf16.msra.mxu0 %v1423
        %1435 = vmatpush.bf16.msra.mxu0 %v1422
        %1436 = vmatpush.bf16.msra.mxu0 %v1421
        %1437 = vmatpush.bf16.msra.mxu0 %v1420
        %1438 = vmatpush.bf16.msra.mxu0 %v1419
        %1439 = vmatpush.bf16.msra.mxu0 %v1418
        %1440 = vmatpush.bf16.msra.mxu0 %v1417
        %1441 = vmatmul.bf16.gmra.mxu0 %v1353
        %v1442 = vpop.f32.mrf.mxu0
        %v1443 = vadd.f32 0.0, %v1442
        %v1444 = vpop.f32.mrf.mxu0
        %v1445 = vadd.f32 0.0, %v1444
        %1446 = vmatmul.bf16.gmra.mxu0 %v1354
        %v1447 = vpop.f32.mrf.mxu0
        %v1448 = vadd.f32 0.0, %v1447
        %v1449 = vpop.f32.mrf.mxu0
        %v1450 = vadd.f32 0.0, %v1449
        %1451 = vmatmul.bf16.gmra.mxu0 %v1355
        %v1452 = vpop.f32.mrf.mxu0
        %v1453 = vadd.f32 0.0, %v1452
        %v1454 = vpop.f32.mrf.mxu0
        %v1455 = vadd.f32 0.0, %v1454
        %1456 = vmatmul.bf16.gmra.mxu0 %v1356
        %v1457 = vpop.f32.mrf.mxu0
        %v1458 = vadd.f32 0.0, %v1457
        %v1459 = vpop.f32.mrf.mxu0
        %v1460 = vadd.f32 0.0, %v1459
        %1461 = vmatmul.bf16.gmra.mxu0 %v1357
        %v1462 = vpop.f32.mrf.mxu0
        %v1463 = vadd.f32 0.0, %v1462
        %v1464 = vpop.f32.mrf.mxu0
        %v1465 = vadd.f32 0.0, %v1464
        %1466 = vmatmul.bf16.gmra.mxu0 %v1358
        %v1467 = vpop.f32.mrf.mxu0
        %v1468 = vadd.f32 0.0, %v1467
        %v1469 = vpop.f32.mrf.mxu0
        %v1470 = vadd.f32 0.0, %v1469
        %1471 = vmatmul.bf16.gmra.mxu0 %v1359
        %v1472 = vpop.f32.mrf.mxu0
        %v1473 = vadd.f32 0.0, %v1472
        %v1474 = vpop.f32.mrf.mxu0
        %v1475 = vadd.f32 0.0, %v1474
        %1476 = vmatmul.bf16.gmra.mxu0 %v1360
        %v1477 = vpop.f32.mrf.mxu0
        %v1478 = vadd.f32 0.0, %v1477
        %v1479 = vpop.f32.mrf.mxu0
        %v1480 = vadd.f32 0.0, %v1479
        %1481 = vmatmul.bf16.gmra.mxu0 %v1361
        %v1482 = vpop.f32.mrf.mxu0
        %v1483 = vadd.f32 0.0, %v1482
        %v1484 = vpop.f32.mrf.mxu0
        %v1485 = vadd.f32 0.0, %v1484
        %1486 = vmatmul.bf16.gmra.mxu0 %v1362
        %v1487 = vpop.f32.mrf.mxu0
        %v1488 = vadd.f32 0.0, %v1487
        %v1489 = vpop.f32.mrf.mxu0
        %v1490 = vadd.f32 0.0, %v1489
        %1491 = vmatmul.bf16.gmra.mxu0 %v1363
        %v1492 = vpop.f32.mrf.mxu0
        %v1493 = vadd.f32 0.0, %v1492
        %v1494 = vpop.f32.mrf.mxu0
        %v1495 = vadd.f32 0.0, %v1494
        %1496 = vmatmul.bf16.gmra.mxu0 %v1364
        %v1497 = vpop.f32.mrf.mxu0
        %v1498 = vadd.f32 0.0, %v1497
        %v1499 = vpop.f32.mrf.mxu0
        %v1500 = vadd.f32 0.0, %v1499
        %1501 = vmatmul.bf16.gmra.mxu0 %v1365
        %v1502 = vpop.f32.mrf.mxu0
        %v1503 = vadd.f32 0.0, %v1502
        %v1504 = vpop.f32.mrf.mxu0
        %v1505 = vadd.f32 0.0, %v1504
        %1506 = vmatmul.bf16.gmra.mxu0 %v1366
        %v1507 = vpop.f32.mrf.mxu0
        %v1508 = vadd.f32 0.0, %v1507
        %v1509 = vpop.f32.mrf.mxu0
        %v1510 = vadd.f32 0.0, %v1509
        %1511 = vmatmul.bf16.gmra.mxu0 %v1367
        %v1512 = vpop.f32.mrf.mxu0
        %v1513 = vadd.f32 0.0, %v1512
        %v1514 = vpop.f32.mrf.mxu0
        %v1515 = vadd.f32 0.0, %v1514
        %1516 = vmatmul.bf16.gmra.mxu0 %v1368
        %v1517 = vpop.f32.mrf.mxu0
        %v1518 = vadd.f32 0.0, %v1517
        %v1519 = vpop.f32.mrf.mxu0
        %v1520 = vadd.f32 0.0, %v1519
        %1521 = vdwg.mxu0
        %v1522 = vunpack.c.l.b16 %v916
        %v1523 = vunpack.c.l.b16 %v925
        %v1524 = vunpack.c.l.b16 %v938
        %v1525 = vunpack.c.l.b16 %v947
        %v1526 = vunpack.c.l.b16 %v960
        %v1527 = vunpack.c.l.b16 %v969
        %v1528 = vunpack.c.l.b16 %v982
        %v1529 = vunpack.c.l.b16 %v991
        %v1530 = vunpack.c.l.b16 %v1004
        %v1531 = vunpack.c.l.b16 %v1013
        %v1532 = vunpack.c.l.b16 %v1026
        %v1533 = vunpack.c.l.b16 %v1035
        %v1534 = vunpack.c.l.b16 %v1048
        %v1535 = vunpack.c.l.b16 %v1057
        %v1536 = vunpack.c.l.b16 %v1070
        %v1537 = vunpack.c.l.b16 %v1079
        %v1538 = vunpack.c.l.b16 %v1092
        %v1539 = vunpack.c.l.b16 %v1101
        %v1540 = vunpack.c.l.b16 %v1114
        %v1541 = vunpack.c.l.b16 %v1123
        %v1542 = vunpack.c.l.b16 %v1136
        %v1543 = vunpack.c.l.b16 %v1145
        %v1544 = vunpack.c.l.b16 %v1158
        %v1545 = vunpack.c.l.b16 %v1167
        %v1546 = vunpack.c.l.b16 %v1180
        %v1547 = vunpack.c.l.b16 %v1189
        %v1548 = vunpack.c.l.b16 %v1202
        %v1549 = vunpack.c.l.b16 %v1211
        %v1550 = vunpack.c.l.b16 %v1224
        %v1551 = vunpack.c.l.b16 %v1233
        %v1552 = vunpack.c.l.b16 %v1246
        %v1553 = vunpack.c.l.b16 %v1255
        %v1554 = vpack.c.b16 %v1523, %v1522
        %v1555 = vpack.c.b16 %v1525, %v1524
        %v1556 = vpack.c.b16 %v1527, %v1526
        %v1557 = vpack.c.b16 %v1529, %v1528
        %v1558 = vpack.c.b16 %v1531, %v1530
        %v1559 = vpack.c.b16 %v1533, %v1532
        %v1560 = vpack.c.b16 %v1535, %v1534
        %v1561 = vpack.c.b16 %v1537, %v1536
        %v1562 = vpack.c.b16 %v1539, %v1538
        %v1563 = vpack.c.b16 %v1541, %v1540
        %v1564 = vpack.c.b16 %v1543, %v1542
        %v1565 = vpack.c.b16 %v1545, %v1544
        %v1566 = vpack.c.b16 %v1547, %v1546
        %v1567 = vpack.c.b16 %v1549, %v1548
        %v1568 = vpack.c.b16 %v1551, %v1550
        %v1569 = vpack.c.b16 %v1553, %v1552
        %v1602 = vunpack.c.l.b16 %v1256
        %v1603 = vunpack.c.l.b16 %v1257
        %v1604 = vunpack.c.l.b16 %v1258
        %v1605 = vunpack.c.l.b16 %v1259
        %v1606 = vunpack.c.l.b16 %v1260
        %v1607 = vunpack.c.l.b16 %v1261
        %v1608 = vunpack.c.l.b16 %v1262
        %v1609 = vunpack.c.l.b16 %v1263
        %v1610 = vunpack.c.l.b16 %v1264
        %v1611 = vunpack.c.l.b16 %v1265
        %v1612 = vunpack.c.l.b16 %v1266
        %v1613 = vunpack.c.l.b16 %v1267
        %v1614 = vunpack.c.l.b16 %v1268
        %v1615 = vunpack.c.l.b16 %v1269
        %v1616 = vunpack.c.l.b16 %v1270
        %v1617 = vunpack.c.l.b16 %v1271
        %v1618 = vpack.c.b16 %v1603, %v1602
        %v1619 = vpack.c.b16 %v1605, %v1604
        %v1620 = vpack.c.b16 %v1607, %v1606
        %v1621 = vpack.c.b16 %v1609, %v1608
        %v1622 = vpack.c.b16 %v1611, %v1610
        %v1623 = vpack.c.b16 %v1613, %v1612
        %v1624 = vpack.c.b16 %v1615, %v1614
        %v1625 = vpack.c.b16 %v1617, %v1616
        %1634 = vmatpush.bf16.msra.mxu0 %v1625
        %1635 = vmatpush.bf16.msra.mxu0 %v1624
        %1636 = vmatpush.bf16.msra.mxu0 %v1623
        %1637 = vmatpush.bf16.msra.mxu0 %v1622
        %1638 = vmatpush.bf16.msra.mxu0 %v1621
        %1639 = vmatpush.bf16.msra.mxu0 %v1620
        %1640 = vmatpush.bf16.msra.mxu0 %v1619
        %1641 = vmatpush.bf16.msra.mxu0 %v1618
        %1642 = vmatmul.bf16.gmra.mxu0 %v1554
        %v1643 = vpop.f32.mrf.mxu0
        %v1644 = vadd.f32 %v1443, %v1643
        %v1645 = vpop.f32.mrf.mxu0
        %v1646 = vadd.f32 %v1445, %v1645
        %1647 = vmatmul.bf16.gmra.mxu0 %v1555
        %v1648 = vpop.f32.mrf.mxu0
        %v1649 = vadd.f32 %v1448, %v1648
        %v1650 = vpop.f32.mrf.mxu0
        %v1651 = vadd.f32 %v1450, %v1650
        %1652 = vmatmul.bf16.gmra.mxu0 %v1556
        %v1653 = vpop.f32.mrf.mxu0
        %v1654 = vadd.f32 %v1453, %v1653
        %v1655 = vpop.f32.mrf.mxu0
        %v1656 = vadd.f32 %v1455, %v1655
        %1657 = vmatmul.bf16.gmra.mxu0 %v1557
        %v1658 = vpop.f32.mrf.mxu0
        %v1659 = vadd.f32 %v1458, %v1658
        %v1660 = vpop.f32.mrf.mxu0
        %v1661 = vadd.f32 %v1460, %v1660
        %1662 = vmatmul.bf16.gmra.mxu0 %v1558
        %v1663 = vpop.f32.mrf.mxu0
        %v1664 = vadd.f32 %v1463, %v1663
        %v1665 = vpop.f32.mrf.mxu0
        %v1666 = vadd.f32 %v1465, %v1665
        %1667 = vmatmul.bf16.gmra.mxu0 %v1559
        %v1668 = vpop.f32.mrf.mxu0
        %v1669 = vadd.f32 %v1468, %v1668
        %v1670 = vpop.f32.mrf.mxu0
        %v1671 = vadd.f32 %v1470, %v1670
        %1672 = vmatmul.bf16.gmra.mxu0 %v1560
        %v1673 = vpop.f32.mrf.mxu0
        %v1674 = vadd.f32 %v1473, %v1673
        %v1675 = vpop.f32.mrf.mxu0
        %v1676 = vadd.f32 %v1475, %v1675
        %1677 = vmatmul.bf16.gmra.mxu0 %v1561
        %v1678 = vpop.f32.mrf.mxu0
        %v1679 = vadd.f32 %v1478, %v1678
        %v1680 = vpop.f32.mrf.mxu0
        %v1681 = vadd.f32 %v1480, %v1680
        %1682 = vmatmul.bf16.gmra.mxu0 %v1562
        %v1683 = vpop.f32.mrf.mxu0
        %v1684 = vadd.f32 %v1483, %v1683
        %v1685 = vpop.f32.mrf.mxu0
        %v1686 = vadd.f32 %v1485, %v1685
        %1687 = vmatmul.bf16.gmra.mxu0 %v1563
        %v1688 = vpop.f32.mrf.mxu0
        %v1689 = vadd.f32 %v1488, %v1688
        %v1690 = vpop.f32.mrf.mxu0
        %v1691 = vadd.f32 %v1490, %v1690
        %1692 = vmatmul.bf16.gmra.mxu0 %v1564
        %v1693 = vpop.f32.mrf.mxu0
        %v1694 = vadd.f32 %v1493, %v1693
        %v1695 = vpop.f32.mrf.mxu0
        %v1696 = vadd.f32 %v1495, %v1695
        %1697 = vmatmul.bf16.gmra.mxu0 %v1565
        %v1698 = vpop.f32.mrf.mxu0
        %v1699 = vadd.f32 %v1498, %v1698
        %v1700 = vpop.f32.mrf.mxu0
        %v1701 = vadd.f32 %v1500, %v1700
        %1702 = vmatmul.bf16.gmra.mxu0 %v1566
        %v1703 = vpop.f32.mrf.mxu0
        %v1704 = vadd.f32 %v1503, %v1703
        %v1705 = vpop.f32.mrf.mxu0
        %v1706 = vadd.f32 %v1505, %v1705
        %1707 = vmatmul.bf16.gmra.mxu0 %v1567
        %v1708 = vpop.f32.mrf.mxu0
        %v1709 = vadd.f32 %v1508, %v1708
        %v1710 = vpop.f32.mrf.mxu0
        %v1711 = vadd.f32 %v1510, %v1710
        %1712 = vmatmul.bf16.gmra.mxu0 %v1568
        %v1713 = vpop.f32.mrf.mxu0
        %v1714 = vadd.f32 %v1513, %v1713
        %v1715 = vpop.f32.mrf.mxu0
        %v1716 = vadd.f32 %v1515, %v1715
        %1717 = vmatmul.bf16.gmra.mxu0 %v1569
        %v1718 = vpop.f32.mrf.mxu0
        %v1719 = vadd.f32 %v1518, %v1718
        %v1720 = vpop.f32.mrf.mxu0
        %v1721 = vadd.f32 %v1520, %v1720
        %1722 = vdwg.mxu0
        %v1723 = vld [vmem:[#allocation2 + $0x4] sm:$0xf]
        %v1724 = vld [vmem:[#allocation2 + $0x8] sm:$0xf]
        %v1725 = vld [vmem:[#allocation2 + $0xc] sm:$0x1]
        %v1726 = vld [vmem:[#allocation2 + $0x14] sm:$0xf]
        %v1727 = vld [vmem:[#allocation2 + $0x18] sm:$0xf]
        %v1728 = vld [vmem:[#allocation2 + $0x1c] sm:$0x1]
        %v1729 = vld [vmem:[#allocation2 + $0x24] sm:$0xf]
        %v1730 = vld [vmem:[#allocation2 + $0x28] sm:$0xf]
        %v1731 = vld [vmem:[#allocation2 + $0x2c] sm:$0x1]
        %v1732 = vld [vmem:[#allocation2 + $0x34] sm:$0xf]
        %v1733 = vld [vmem:[#allocation2 + $0x38] sm:$0xf]
        %v1734 = vld [vmem:[#allocation2 + $0x3c] sm:$0x1]
        %v1735 = vld [vmem:[#allocation2 + $0x44] sm:$0xf]
        %v1736 = vld [vmem:[#allocation2 + $0x48] sm:$0xf]
        %v1737 = vld [vmem:[#allocation2 + $0x4c] sm:$0x1]
        %v1738 = vld [vmem:[#allocation2 + $0x54] sm:$0xf]
        %v1739 = vld [vmem:[#allocation2 + $0x58] sm:$0xf]
        %v1740 = vld [vmem:[#allocation2 + $0x5c] sm:$0x1]
        %v1741 = vld [vmem:[#allocation2 + $0x64] sm:$0xf]
        %v1742 = vld [vmem:[#allocation2 + $0x68] sm:$0xf]
        %v1743 = vld [vmem:[#allocation2 + $0x6c] sm:$0x1]
        %v1744 = vld [vmem:[#allocation2 + $0x74] sm:$0xf]
        %v1745 = vld [vmem:[#allocation2 + $0x78] sm:$0xf]
        %v1746 = vld [vmem:[#allocation2 + $0x7c] sm:$0x1]
        %v1747 = vld [vmem:[#allocation2 + $0x84] sm:$0xf]
        %v1748 = vld [vmem:[#allocation2 + $0x88] sm:$0xf]
        %v1749 = vld [vmem:[#allocation2 + $0x8c] sm:$0x1]
        %v1750 = vld [vmem:[#allocation2 + $0x94] sm:$0xf]
        %v1751 = vld [vmem:[#allocation2 + $0x98] sm:$0xf]
        %v1752 = vld [vmem:[#allocation2 + $0x9c] sm:$0x1]
        %v1753 = vld [vmem:[#allocation2 + $0xa4] sm:$0xf]
        %v1754 = vld [vmem:[#allocation2 + $0xa8] sm:$0xf]
        %v1755 = vld [vmem:[#allocation2 + $0xac] sm:$0x1]
        %v1756 = vld [vmem:[#allocation2 + $0xb4] sm:$0xf]
        %v1757 = vld [vmem:[#allocation2 + $0xb8] sm:$0xf]
        %v1758 = vld [vmem:[#allocation2 + $0xbc] sm:$0x1]
        %v1759 = vld [vmem:[#allocation2 + $0xc4] sm:$0xf]
        %v1760 = vld [vmem:[#allocation2 + $0xc8] sm:$0xf]
        %v1761 = vld [vmem:[#allocation2 + $0xcc] sm:$0x1]
        %v1762 = vld [vmem:[#allocation2 + $0xd4] sm:$0xf]
        %v1763 = vld [vmem:[#allocation2 + $0xd8] sm:$0xf]
        %v1764 = vld [vmem:[#allocation2 + $0xdc] sm:$0x1]
        %v1765 = vld [vmem:[#allocation2 + $0xe4] sm:$0xf]
        %v1766 = vld [vmem:[#allocation2 + $0xe8] sm:$0xf]
        %v1767 = vld [vmem:[#allocation2 + $0xec] sm:$0x1]
        %v1768 = vld [vmem:[#allocation2 + $0xf4] sm:$0xf]
        %v1769 = vld [vmem:[#allocation2 + $0xf8] sm:$0xf]
        %v1770 = vld [vmem:[#allocation2 + $0xfc] sm:$0x1]
        %vm1771 = vsmask.f32 3328
        %vm1772 = vsmask.f32 7440
        %vm1773 = vmor %vm1771, %vm1772
        %v1775 = vshrl.u32 %v1723, 16
        %v1777 = vrot.slane %v1775, 4
        %v1778 = vshll.u32 %v1723, 16
        %v1780 = vrot.slane %v1778, 5
        %v1781 = vor.u32 %v1777, %v1780
        %v1782 = vrot.slane %v1781, 4
        %v1784 = vshll.u32 %v1724, 16
        %v1786 = vrot.slane %v1784, 5
        %v1787 = vsel %vm1773, %v1782, %v1786
        %v1788 = vshrl.u32 %v1724, 16
        %v1790 = vrot.slane %v1788, 4
        %v1791 = vor.u32 %v1790, %v1786
        %v1792 = vrot.slane %v1791, 4
        %v1794 = vshll.u32 %v1725, 16
        %v1796 = vrot.slane %v1794, 5
        %v1797 = vsel %vm1773, %v1792, %v1796
        %v1799 = vshrl.u32 %v1726, 16
        %v1801 = vrot.slane %v1799, 4
        %v1802 = vshll.u32 %v1726, 16
        %v1804 = vrot.slane %v1802, 5
        %v1805 = vor.u32 %v1801, %v1804
        %v1806 = vrot.slane %v1805, 4
        %v1808 = vshll.u32 %v1727, 16
        %v1810 = vrot.slane %v1808, 5
        %v1811 = vsel %vm1773, %v1806, %v1810
        %v1812 = vshrl.u32 %v1727, 16
        %v1814 = vrot.slane %v1812, 4
        %v1815 = vor.u32 %v1814, %v1810
        %v1816 = vrot.slane %v1815, 4
        %v1818 = vshll.u32 %v1728, 16
        %v1820 = vrot.slane %v1818, 5
        %v1821 = vsel %vm1773, %v1816, %v1820
        %v1823 = vshrl.u32 %v1729, 16
        %v1825 = vrot.slane %v1823, 4
        %v1826 = vshll.u32 %v1729, 16
        %v1828 = vrot.slane %v1826, 5
        %v1829 = vor.u32 %v1825, %v1828
        %v1830 = vrot.slane %v1829, 4
        %v1832 = vshll.u32 %v1730, 16
        %v1834 = vrot.slane %v1832, 5
        %v1835 = vsel %vm1773, %v1830, %v1834
        %v1836 = vshrl.u32 %v1730, 16
        %v1838 = vrot.slane %v1836, 4
        %v1839 = vor.u32 %v1838, %v1834
        %v1840 = vrot.slane %v1839, 4
        %v1842 = vshll.u32 %v1731, 16
        %v1844 = vrot.slane %v1842, 5
        %v1845 = vsel %vm1773, %v1840, %v1844
        %v1847 = vshrl.u32 %v1732, 16
        %v1849 = vrot.slane %v1847, 4
        %v1850 = vshll.u32 %v1732, 16
        %v1852 = vrot.slane %v1850, 5
        %v1853 = vor.u32 %v1849, %v1852
        %v1854 = vrot.slane %v1853, 4
        %v1856 = vshll.u32 %v1733, 16
        %v1858 = vrot.slane %v1856, 5
        %v1859 = vsel %vm1773, %v1854, %v1858
        %v1860 = vshrl.u32 %v1733, 16
        %v1862 = vrot.slane %v1860, 4
        %v1863 = vor.u32 %v1862, %v1858
        %v1864 = vrot.slane %v1863, 4
        %v1866 = vshll.u32 %v1734, 16
        %v1868 = vrot.slane %v1866, 5
        %v1869 = vsel %vm1773, %v1864, %v1868
        %v1871 = vshrl.u32 %v1735, 16
        %v1873 = vrot.slane %v1871, 4
        %v1874 = vshll.u32 %v1735, 16
        %v1876 = vrot.slane %v1874, 5
        %v1877 = vor.u32 %v1873, %v1876
        %v1878 = vrot.slane %v1877, 4
        %v1880 = vshll.u32 %v1736, 16
        %v1882 = vrot.slane %v1880, 5
        %v1883 = vsel %vm1773, %v1878, %v1882
        %v1884 = vshrl.u32 %v1736, 16
        %v1886 = vrot.slane %v1884, 4
        %v1887 = vor.u32 %v1886, %v1882
        %v1888 = vrot.slane %v1887, 4
        %v1890 = vshll.u32 %v1737, 16
        %v1892 = vrot.slane %v1890, 5
        %v1893 = vsel %vm1773, %v1888, %v1892
        %v1895 = vshrl.u32 %v1738, 16
        %v1897 = vrot.slane %v1895, 4
        %v1898 = vshll.u32 %v1738, 16
        %v1900 = vrot.slane %v1898, 5
        %v1901 = vor.u32 %v1897, %v1900
        %v1902 = vrot.slane %v1901, 4
        %v1904 = vshll.u32 %v1739, 16
        %v1906 = vrot.slane %v1904, 5
        %v1907 = vsel %vm1773, %v1902, %v1906
        %v1908 = vshrl.u32 %v1739, 16
        %v1910 = vrot.slane %v1908, 4
        %v1911 = vor.u32 %v1910, %v1906
        %v1912 = vrot.slane %v1911, 4
        %v1914 = vshll.u32 %v1740, 16
        %v1916 = vrot.slane %v1914, 5
        %v1917 = vsel %vm1773, %v1912, %v1916
        %v1919 = vshrl.u32 %v1741, 16
        %v1921 = vrot.slane %v1919, 4
        %v1922 = vshll.u32 %v1741, 16
        %v1924 = vrot.slane %v1922, 5
        %v1925 = vor.u32 %v1921, %v1924
        %v1926 = vrot.slane %v1925, 4
        %v1928 = vshll.u32 %v1742, 16
        %v1930 = vrot.slane %v1928, 5
        %v1931 = vsel %vm1773, %v1926, %v1930
        %v1932 = vshrl.u32 %v1742, 16
        %v1934 = vrot.slane %v1932, 4
        %v1935 = vor.u32 %v1934, %v1930
        %v1936 = vrot.slane %v1935, 4
        %v1938 = vshll.u32 %v1743, 16
        %v1940 = vrot.slane %v1938, 5
        %v1941 = vsel %vm1773, %v1936, %v1940
        %v1943 = vshrl.u32 %v1744, 16
        %v1945 = vrot.slane %v1943, 4
        %v1946 = vshll.u32 %v1744, 16
        %v1948 = vrot.slane %v1946, 5
        %v1949 = vor.u32 %v1945, %v1948
        %v1950 = vrot.slane %v1949, 4
        %v1952 = vshll.u32 %v1745, 16
        %v1954 = vrot.slane %v1952, 5
        %v1955 = vsel %vm1773, %v1950, %v1954
        %v1956 = vshrl.u32 %v1745, 16
        %v1958 = vrot.slane %v1956, 4
        %v1959 = vor.u32 %v1958, %v1954
        %v1960 = vrot.slane %v1959, 4
        %v1962 = vshll.u32 %v1746, 16
        %v1964 = vrot.slane %v1962, 5
        %v1965 = vsel %vm1773, %v1960, %v1964
        %v1967 = vshrl.u32 %v1747, 16
        %v1969 = vrot.slane %v1967, 4
        %v1970 = vshll.u32 %v1747, 16
        %v1972 = vrot.slane %v1970, 5
        %v1973 = vor.u32 %v1969, %v1972
        %v1974 = vrot.slane %v1973, 4
        %v1976 = vshll.u32 %v1748, 16
        %v1978 = vrot.slane %v1976, 5
        %v1979 = vsel %vm1773, %v1974, %v1978
        %v1980 = vshrl.u32 %v1748, 16
        %v1982 = vrot.slane %v1980, 4
        %v1983 = vor.u32 %v1982, %v1978
        %v1984 = vrot.slane %v1983, 4
        %v1986 = vshll.u32 %v1749, 16
        %v1988 = vrot.slane %v1986, 5
        %v1989 = vsel %vm1773, %v1984, %v1988
        %v1991 = vshrl.u32 %v1750, 16
        %v1993 = vrot.slane %v1991, 4
        %v1994 = vshll.u32 %v1750, 16
        %v1996 = vrot.slane %v1994, 5
        %v1997 = vor.u32 %v1993, %v1996
        %v1998 = vrot.slane %v1997, 4
        %v2000 = vshll.u32 %v1751, 16
        %v2002 = vrot.slane %v2000, 5
        %v2003 = vsel %vm1773, %v1998, %v2002
        %v2004 = vshrl.u32 %v1751, 16
        %v2006 = vrot.slane %v2004, 4
        %v2007 = vor.u32 %v2006, %v2002
        %v2008 = vrot.slane %v2007, 4
        %v2010 = vshll.u32 %v1752, 16
        %v2012 = vrot.slane %v2010, 5
        %v2013 = vsel %vm1773, %v2008, %v2012
        %v2015 = vshrl.u32 %v1753, 16
        %v2017 = vrot.slane %v2015, 4
        %v2018 = vshll.u32 %v1753, 16
        %v2020 = vrot.slane %v2018, 5
        %v2021 = vor.u32 %v2017, %v2020
        %v2022 = vrot.slane %v2021, 4
        %v2024 = vshll.u32 %v1754, 16
        %v2026 = vrot.slane %v2024, 5
        %v2027 = vsel %vm1773, %v2022, %v2026
        %v2028 = vshrl.u32 %v1754, 16
        %v2030 = vrot.slane %v2028, 4
        %v2031 = vor.u32 %v2030, %v2026
        %v2032 = vrot.slane %v2031, 4
        %v2034 = vshll.u32 %v1755, 16
        %v2036 = vrot.slane %v2034, 5
        %v2037 = vsel %vm1773, %v2032, %v2036
        %v2039 = vshrl.u32 %v1756, 16
        %v2041 = vrot.slane %v2039, 4
        %v2042 = vshll.u32 %v1756, 16
        %v2044 = vrot.slane %v2042, 5
        %v2045 = vor.u32 %v2041, %v2044
        %v2046 = vrot.slane %v2045, 4
        %v2048 = vshll.u32 %v1757, 16
        %v2050 = vrot.slane %v2048, 5
        %v2051 = vsel %vm1773, %v2046, %v2050
        %v2052 = vshrl.u32 %v1757, 16
        %v2054 = vrot.slane %v2052, 4
        %v2055 = vor.u32 %v2054, %v2050
        %v2056 = vrot.slane %v2055, 4
        %v2058 = vshll.u32 %v1758, 16
        %v2060 = vrot.slane %v2058, 5
        %v2061 = vsel %vm1773, %v2056, %v2060
        %v2063 = vshrl.u32 %v1759, 16
        %v2065 = vrot.slane %v2063, 4
        %v2066 = vshll.u32 %v1759, 16
        %v2068 = vrot.slane %v2066, 5
        %v2069 = vor.u32 %v2065, %v2068
        %v2070 = vrot.slane %v2069, 4
        %v2072 = vshll.u32 %v1760, 16
        %v2074 = vrot.slane %v2072, 5
        %v2075 = vsel %vm1773, %v2070, %v2074
        %v2076 = vshrl.u32 %v1760, 16
        %v2078 = vrot.slane %v2076, 4
        %v2079 = vor.u32 %v2078, %v2074
        %v2080 = vrot.slane %v2079, 4
        %v2082 = vshll.u32 %v1761, 16
        %v2084 = vrot.slane %v2082, 5
        %v2085 = vsel %vm1773, %v2080, %v2084
        %v2087 = vshrl.u32 %v1762, 16
        %v2089 = vrot.slane %v2087, 4
        %v2090 = vshll.u32 %v1762, 16
        %v2092 = vrot.slane %v2090, 5
        %v2093 = vor.u32 %v2089, %v2092
        %v2094 = vrot.slane %v2093, 4
        %v2096 = vshll.u32 %v1763, 16
        %v2098 = vrot.slane %v2096, 5
        %v2099 = vsel %vm1773, %v2094, %v2098
        %v2100 = vshrl.u32 %v1763, 16
        %v2102 = vrot.slane %v2100, 4
        %v2103 = vor.u32 %v2102, %v2098
        %v2104 = vrot.slane %v2103, 4
        %v2106 = vshll.u32 %v1764, 16
        %v2108 = vrot.slane %v2106, 5
        %v2109 = vsel %vm1773, %v2104, %v2108
        %v2111 = vshrl.u32 %v1765, 16
        %v2113 = vrot.slane %v2111, 4
        %v2114 = vshll.u32 %v1765, 16
        %v2116 = vrot.slane %v2114, 5
        %v2117 = vor.u32 %v2113, %v2116
        %v2118 = vrot.slane %v2117, 4
        %v2120 = vshll.u32 %v1766, 16
        %v2122 = vrot.slane %v2120, 5
        %v2123 = vsel %vm1773, %v2118, %v2122
        %v2124 = vshrl.u32 %v1766, 16
        %v2126 = vrot.slane %v2124, 4
        %v2127 = vor.u32 %v2126, %v2122
        %v2128 = vrot.slane %v2127, 4
        %v2130 = vshll.u32 %v1767, 16
        %v2132 = vrot.slane %v2130, 5
        %v2133 = vsel %vm1773, %v2128, %v2132
        %v2135 = vshrl.u32 %v1768, 16
        %v2137 = vrot.slane %v2135, 4
        %v2138 = vshll.u32 %v1768, 16
        %v2140 = vrot.slane %v2138, 5
        %v2141 = vor.u32 %v2137, %v2140
        %v2142 = vrot.slane %v2141, 4
        %v2144 = vshll.u32 %v1769, 16
        %v2146 = vrot.slane %v2144, 5
        %v2147 = vsel %vm1773, %v2142, %v2146
        %v2148 = vshrl.u32 %v1769, 16
        %v2150 = vrot.slane %v2148, 4
        %v2151 = vor.u32 %v2150, %v2146
        %v2152 = vrot.slane %v2151, 4
        %v2154 = vshll.u32 %v1770, 16
        %v2156 = vrot.slane %v2154, 5
        %v2157 = vsel %vm1773, %v2152, %v2156
        %s2158 = scalar_lea.vmem [#allocation6], 128
        %v2159 = vld [vmem:[%s2158] sm:$0xf]
        %v2160 = vld [vmem:[%s2158 + $0x4] sm:$0xf]
        %v2161 = vld [vmem:[%s2158 + $0x8] sm:$0xf]
        %v2162 = vld [vmem:[%s2158 + $0xc] sm:$0xf]
        %v2163 = vld [vmem:[%s2158 + $0x10] sm:$0xf]
        %v2164 = vld [vmem:[%s2158 + $0x14] sm:$0xf]
        %v2165 = vld [vmem:[%s2158 + $0x18] sm:$0xf]
        %v2166 = vld [vmem:[%s2158 + $0x1c] sm:$0xf]
        %v2167 = vld [vmem:[%s2158 + $0x20] sm:$0xf]
        %v2168 = vld [vmem:[%s2158 + $0x24] sm:$0xf]
        %v2169 = vld [vmem:[%s2158 + $0x28] sm:$0xf]
        %v2170 = vld [vmem:[%s2158 + $0x2c] sm:$0xf]
        %v2171 = vld [vmem:[%s2158 + $0x30] sm:$0xf]
        %v2172 = vld [vmem:[%s2158 + $0x34] sm:$0xf]
        %v2173 = vld [vmem:[%s2158 + $0x38] sm:$0xf]
        %v2174 = vld [vmem:[%s2158 + $0x3c] sm:$0xf]
        %v2175 = vunpack.c.l.b16 %v1787
        %v2176 = vunpack.c.l.b16 %v1797
        %v2177 = vunpack.c.l.b16 %v1811
        %v2178 = vunpack.c.l.b16 %v1821
        %v2179 = vunpack.c.l.b16 %v1835
        %v2180 = vunpack.c.l.b16 %v1845
        %v2181 = vunpack.c.l.b16 %v1859
        %v2182 = vunpack.c.l.b16 %v1869
        %v2183 = vunpack.c.l.b16 %v1883
        %v2184 = vunpack.c.l.b16 %v1893
        %v2185 = vunpack.c.l.b16 %v1907
        %v2186 = vunpack.c.l.b16 %v1917
        %v2187 = vunpack.c.l.b16 %v1931
        %v2188 = vunpack.c.l.b16 %v1941
        %v2189 = vunpack.c.l.b16 %v1955
        %v2190 = vunpack.c.l.b16 %v1965
        %v2191 = vunpack.c.l.b16 %v1979
        %v2192 = vunpack.c.l.b16 %v1989
        %v2193 = vunpack.c.l.b16 %v2003
        %v2194 = vunpack.c.l.b16 %v2013
        %v2195 = vunpack.c.l.b16 %v2027
        %v2196 = vunpack.c.l.b16 %v2037
        %v2197 = vunpack.c.l.b16 %v2051
        %v2198 = vunpack.c.l.b16 %v2061
        %v2199 = vunpack.c.l.b16 %v2075
        %v2200 = vunpack.c.l.b16 %v2085
        %v2201 = vunpack.c.l.b16 %v2099
        %v2202 = vunpack.c.l.b16 %v2109
        %v2203 = vunpack.c.l.b16 %v2123
        %v2204 = vunpack.c.l.b16 %v2133
        %v2205 = vunpack.c.l.b16 %v2147
        %v2206 = vunpack.c.l.b16 %v2157
        %v2207 = vpack.c.b16 %v2176, %v2175
        %v2208 = vpack.c.b16 %v2178, %v2177
        %v2209 = vpack.c.b16 %v2180, %v2179
        %v2210 = vpack.c.b16 %v2182, %v2181
        %v2211 = vpack.c.b16 %v2184, %v2183
        %v2212 = vpack.c.b16 %v2186, %v2185
        %v2213 = vpack.c.b16 %v2188, %v2187
        %v2214 = vpack.c.b16 %v2190, %v2189
        %v2215 = vpack.c.b16 %v2192, %v2191
        %v2216 = vpack.c.b16 %v2194, %v2193
        %v2217 = vpack.c.b16 %v2196, %v2195
        %v2218 = vpack.c.b16 %v2198, %v2197
        %v2219 = vpack.c.b16 %v2200, %v2199
        %v2220 = vpack.c.b16 %v2202, %v2201
        %v2221 = vpack.c.b16 %v2204, %v2203
        %v2222 = vpack.c.b16 %v2206, %v2205
        %v2255 = vunpack.c.l.b16 %v2159
        %v2256 = vunpack.c.l.b16 %v2160
        %v2257 = vunpack.c.l.b16 %v2161
        %v2258 = vunpack.c.l.b16 %v2162
        %v2259 = vunpack.c.l.b16 %v2163
        %v2260 = vunpack.c.l.b16 %v2164
        %v2261 = vunpack.c.l.b16 %v2165
        %v2262 = vunpack.c.l.b16 %v2166
        %v2263 = vunpack.c.l.b16 %v2167
        %v2264 = vunpack.c.l.b16 %v2168
        %v2265 = vunpack.c.l.b16 %v2169
        %v2266 = vunpack.c.l.b16 %v2170
        %v2267 = vunpack.c.l.b16 %v2171
        %v2268 = vunpack.c.l.b16 %v2172
        %v2269 = vunpack.c.l.b16 %v2173
        %v2270 = vunpack.c.l.b16 %v2174
        %v2271 = vpack.c.b16 %v2256, %v2255
        %v2272 = vpack.c.b16 %v2258, %v2257
        %v2273 = vpack.c.b16 %v2260, %v2259
        %v2274 = vpack.c.b16 %v2262, %v2261
        %v2275 = vpack.c.b16 %v2264, %v2263
        %v2276 = vpack.c.b16 %v2266, %v2265
        %v2277 = vpack.c.b16 %v2268, %v2267
        %v2278 = vpack.c.b16 %v2270, %v2269
        %2287 = vmatpush.bf16.msra.mxu0 %v2278
        %2288 = vmatpush.bf16.msra.mxu0 %v2277
        %2289 = vmatpush.bf16.msra.mxu0 %v2276
        %2290 = vmatpush.bf16.msra.mxu0 %v2275
        %2291 = vmatpush.bf16.msra.mxu0 %v2274
        %2292 = vmatpush.bf16.msra.mxu0 %v2273
        %2293 = vmatpush.bf16.msra.mxu0 %v2272
        %2294 = vmatpush.bf16.msra.mxu0 %v2271
        %2295 = vmatmul.bf16.gmra.mxu0 %v2207
        %v2296 = vpop.f32.mrf.mxu0
        %v2297 = vadd.f32 0.0, %v2296
        %v2298 = vpop.f32.mrf.mxu0
        %v2299 = vadd.f32 0.0, %v2298
        %2300 = vmatmul.bf16.gmra.mxu0 %v2208
        %v2301 = vpop.f32.mrf.mxu0
        %v2302 = vadd.f32 0.0, %v2301
        %v2303 = vpop.f32.mrf.mxu0
        %v2304 = vadd.f32 0.0, %v2303
        %2305 = vmatmul.bf16.gmra.mxu0 %v2209
        %v2306 = vpop.f32.mrf.mxu0
        %v2307 = vadd.f32 0.0, %v2306
        %v2308 = vpop.f32.mrf.mxu0
        %v2309 = vadd.f32 0.0, %v2308
        %2310 = vmatmul.bf16.gmra.mxu0 %v2210
        %v2311 = vpop.f32.mrf.mxu0
        %v2312 = vadd.f32 0.0, %v2311
        %v2313 = vpop.f32.mrf.mxu0
        %v2314 = vadd.f32 0.0, %v2313
        %2315 = vmatmul.bf16.gmra.mxu0 %v2211
        %v2316 = vpop.f32.mrf.mxu0
        %v2317 = vadd.f32 0.0, %v2316
        %v2318 = vpop.f32.mrf.mxu0
        %v2319 = vadd.f32 0.0, %v2318
        %2320 = vmatmul.bf16.gmra.mxu0 %v2212
        %v2321 = vpop.f32.mrf.mxu0
        %v2322 = vadd.f32 0.0, %v2321
        %v2323 = vpop.f32.mrf.mxu0
        %v2324 = vadd.f32 0.0, %v2323
        %2325 = vmatmul.bf16.gmra.mxu0 %v2213
        %v2326 = vpop.f32.mrf.mxu0
        %v2327 = vadd.f32 0.0, %v2326
        %v2328 = vpop.f32.mrf.mxu0
        %v2329 = vadd.f32 0.0, %v2328
        %2330 = vmatmul.bf16.gmra.mxu0 %v2214
        %v2331 = vpop.f32.mrf.mxu0
        %v2332 = vadd.f32 0.0, %v2331
        %v2333 = vpop.f32.mrf.mxu0
        %v2334 = vadd.f32 0.0, %v2333
        %2335 = vmatmul.bf16.gmra.mxu0 %v2215
        %v2336 = vpop.f32.mrf.mxu0
        %v2337 = vadd.f32 0.0, %v2336
        %v2338 = vpop.f32.mrf.mxu0
        %v2339 = vadd.f32 0.0, %v2338
        %2340 = vmatmul.bf16.gmra.mxu0 %v2216
        %v2341 = vpop.f32.mrf.mxu0
        %v2342 = vadd.f32 0.0, %v2341
        %v2343 = vpop.f32.mrf.mxu0
        %v2344 = vadd.f32 0.0, %v2343
        %2345 = vmatmul.bf16.gmra.mxu0 %v2217
        %v2346 = vpop.f32.mrf.mxu0
        %v2347 = vadd.f32 0.0, %v2346
        %v2348 = vpop.f32.mrf.mxu0
        %v2349 = vadd.f32 0.0, %v2348
        %2350 = vmatmul.bf16.gmra.mxu0 %v2218
        %v2351 = vpop.f32.mrf.mxu0
        %v2352 = vadd.f32 0.0, %v2351
        %v2353 = vpop.f32.mrf.mxu0
        %v2354 = vadd.f32 0.0, %v2353
        %2355 = vmatmul.bf16.gmra.mxu0 %v2219
        %v2356 = vpop.f32.mrf.mxu0
        %v2357 = vadd.f32 0.0, %v2356
        %v2358 = vpop.f32.mrf.mxu0
        %v2359 = vadd.f32 0.0, %v2358
        %2360 = vmatmul.bf16.gmra.mxu0 %v2220
        %v2361 = vpop.f32.mrf.mxu0
        %v2362 = vadd.f32 0.0, %v2361
        %v2363 = vpop.f32.mrf.mxu0
        %v2364 = vadd.f32 0.0, %v2363
        %2365 = vmatmul.bf16.gmra.mxu0 %v2221
        %v2366 = vpop.f32.mrf.mxu0
        %v2367 = vadd.f32 0.0, %v2366
        %v2368 = vpop.f32.mrf.mxu0
        %v2369 = vadd.f32 0.0, %v2368
        %2370 = vmatmul.bf16.gmra.mxu0 %v2222
        %v2371 = vpop.f32.mrf.mxu0
        %v2372 = vadd.f32 0.0, %v2371
        %v2373 = vpop.f32.mrf.mxu0
        %v2374 = vadd.f32 0.0, %v2373
        %2375 = vdwg.mxu0
        %v2376 = vadd.f32 %v1644, %v2297
        %v2377 = vadd.f32 %v1646, %v2299
        %v2378 = vadd.f32 %v1649, %v2302
        %v2379 = vadd.f32 %v1651, %v2304
        %v2380 = vadd.f32 %v1654, %v2307
        %v2381 = vadd.f32 %v1656, %v2309
        %v2382 = vadd.f32 %v1659, %v2312
        %v2383 = vadd.f32 %v1661, %v2314
        %v2384 = vadd.f32 %v1664, %v2317
        %v2385 = vadd.f32 %v1666, %v2319
        %v2386 = vadd.f32 %v1669, %v2322
        %v2387 = vadd.f32 %v1671, %v2324
        %v2388 = vadd.f32 %v1674, %v2327
        %v2389 = vadd.f32 %v1676, %v2329
        %v2390 = vadd.f32 %v1679, %v2332
        %v2391 = vadd.f32 %v1681, %v2334
        %v2392 = vadd.f32 %v1684, %v2337
        %v2393 = vadd.f32 %v1686, %v2339
        %v2394 = vadd.f32 %v1689, %v2342
        %v2395 = vadd.f32 %v1691, %v2344
        %v2396 = vadd.f32 %v1694, %v2347
        %v2397 = vadd.f32 %v1696, %v2349
        %v2398 = vadd.f32 %v1699, %v2352
        %v2399 = vadd.f32 %v1701, %v2354
        %v2400 = vadd.f32 %v1704, %v2357
        %v2401 = vadd.f32 %v1706, %v2359
        %v2402 = vadd.f32 %v1709, %v2362
        %v2403 = vadd.f32 %v1711, %v2364
        %v2404 = vadd.f32 %v1714, %v2367
        %v2405 = vadd.f32 %v1716, %v2369
        %v2406 = vadd.f32 %v1719, %v2372
        %v2407 = vadd.f32 %v1721, %v2374
        %v2408 = vld [vmem:[%s710] sm:$0x8]
        %v2409 = vld [vmem:[%s710 + $0x4] sm:$0xf]
        %v2410 = vld [vmem:[%s710 + $0x8] sm:$0xf]
        %v2411 = vld [vmem:[%s710 + $0x10] sm:$0x8]
        %v2412 = vld [vmem:[%s710 + $0x14] sm:$0xf]
        %v2413 = vld [vmem:[%s710 + $0x18] sm:$0xf]
        %v2414 = vld [vmem:[%s710 + $0x20] sm:$0x8]
        %v2415 = vld [vmem:[%s710 + $0x24] sm:$0xf]
        %v2416 = vld [vmem:[%s710 + $0x28] sm:$0xf]
        %v2417 = vld [vmem:[%s710 + $0x30] sm:$0x8]
        %v2418 = vld [vmem:[%s710 + $0x34] sm:$0xf]
        %v2419 = vld [vmem:[%s710 + $0x38] sm:$0xf]
        %v2420 = vld [vmem:[%s710 + $0x40] sm:$0x8]
        %v2421 = vld [vmem:[%s710 + $0x44] sm:$0xf]
        %v2422 = vld [vmem:[%s710 + $0x48] sm:$0xf]
        %v2423 = vld [vmem:[%s710 + $0x50] sm:$0x8]
        %v2424 = vld [vmem:[%s710 + $0x54] sm:$0xf]
        %v2425 = vld [vmem:[%s710 + $0x58] sm:$0xf]
        %v2426 = vld [vmem:[%s710 + $0x60] sm:$0x8]
        %v2427 = vld [vmem:[%s710 + $0x64] sm:$0xf]
        %v2428 = vld [vmem:[%s710 + $0x68] sm:$0xf]
        %v2429 = vld [vmem:[%s710 + $0x70] sm:$0x8]
        %v2430 = vld [vmem:[%s710 + $0x74] sm:$0xf]
        %v2431 = vld [vmem:[%s710 + $0x78] sm:$0xf]
        %v2432 = vld [vmem:[%s710 + $0x80] sm:$0x8]
        %v2433 = vld [vmem:[%s710 + $0x84] sm:$0xf]
        %v2434 = vld [vmem:[%s710 + $0x88] sm:$0xf]
        %v2435 = vld [vmem:[%s710 + $0x90] sm:$0x8]
        %v2436 = vld [vmem:[%s710 + $0x94] sm:$0xf]
        %v2437 = vld [vmem:[%s710 + $0x98] sm:$0xf]
        %v2438 = vld [vmem:[%s710 + $0xa0] sm:$0x8]
        %v2439 = vld [vmem:[%s710 + $0xa4] sm:$0xf]
        %v2440 = vld [vmem:[%s710 + $0xa8] sm:$0xf]
        %v2441 = vld [vmem:[%s710 + $0xb0] sm:$0x8]
        %v2442 = vld [vmem:[%s710 + $0xb4] sm:$0xf]
        %v2443 = vld [vmem:[%s710 + $0xb8] sm:$0xf]
        %v2444 = vld [vmem:[%s710 + $0xc0] sm:$0x8]
        %v2445 = vld [vmem:[%s710 + $0xc4] sm:$0xf]
        %v2446 = vld [vmem:[%s710 + $0xc8] sm:$0xf]
        %v2447 = vld [vmem:[%s710 + $0xd0] sm:$0x8]
        %v2448 = vld [vmem:[%s710 + $0xd4] sm:$0xf]
        %v2449 = vld [vmem:[%s710 + $0xd8] sm:$0xf]
        %v2450 = vld [vmem:[%s710 + $0xe0] sm:$0x8]
        %v2451 = vld [vmem:[%s710 + $0xe4] sm:$0xf]
        %v2452 = vld [vmem:[%s710 + $0xe8] sm:$0xf]
        %v2453 = vld [vmem:[%s710 + $0xf0] sm:$0x8]
        %v2454 = vld [vmem:[%s710 + $0xf4] sm:$0xf]
        %v2455 = vld [vmem:[%s710 + $0xf8] sm:$0xf]
        %v2457 = vshrl.u32 %v2408, 16
        %v2459 = vrot.slane %v2457, 7
        %v2460 = vrot.slane %v2459, 4
        %v2462 = vshrl.u32 %v2409, 16
        %v2464 = vrot.slane %v2462, 7
        %v2465 = vshll.u32 %v2409, 16
        %v2467 = vor.u32 %v2464, %v2465
        %v2468 = vsel %vm903, %v2460, %v2467
        %v2469 = vrot.slane %v2464, 4
        %v2471 = vshrl.u32 %v2410, 16
        %v2473 = vrot.slane %v2471, 7
        %v2474 = vshll.u32 %v2410, 16
        %v2476 = vor.u32 %v2473, %v2474
        %v2477 = vsel %vm903, %v2469, %v2476
        %v2479 = vshrl.u32 %v2411, 16
        %v2481 = vrot.slane %v2479, 7
        %v2482 = vrot.slane %v2481, 4
        %v2484 = vshrl.u32 %v2412, 16
        %v2486 = vrot.slane %v2484, 7
        %v2487 = vshll.u32 %v2412, 16
        %v2489 = vor.u32 %v2486, %v2487
        %v2490 = vsel %vm903, %v2482, %v2489
        %v2491 = vrot.slane %v2486, 4
        %v2493 = vshrl.u32 %v2413, 16
        %v2495 = vrot.slane %v2493, 7
        %v2496 = vshll.u32 %v2413, 16
        %v2498 = vor.u32 %v2495, %v2496
        %v2499 = vsel %vm903, %v2491, %v2498
        %v2501 = vshrl.u32 %v2414, 16
        %v2503 = vrot.slane %v2501, 7
        %v2504 = vrot.slane %v2503, 4
        %v2506 = vshrl.u32 %v2415, 16
        %v2508 = vrot.slane %v2506, 7
        %v2509 = vshll.u32 %v2415, 16
        %v2511 = vor.u32 %v2508, %v2509
        %v2512 = vsel %vm903, %v2504, %v2511
        %v2513 = vrot.slane %v2508, 4
        %v2515 = vshrl.u32 %v2416, 16
        %v2517 = vrot.slane %v2515, 7
        %v2518 = vshll.u32 %v2416, 16
        %v2520 = vor.u32 %v2517, %v2518
        %v2521 = vsel %vm903, %v2513, %v2520
        %v2523 = vshrl.u32 %v2417, 16
        %v2525 = vrot.slane %v2523, 7
        %v2526 = vrot.slane %v2525, 4
        %v2528 = vshrl.u32 %v2418, 16
        %v2530 = vrot.slane %v2528, 7
        %v2531 = vshll.u32 %v2418, 16
        %v2533 = vor.u32 %v2530, %v2531
        %v2534 = vsel %vm903, %v2526, %v2533
        %v2535 = vrot.slane %v2530, 4
        %v2537 = vshrl.u32 %v2419, 16
        %v2539 = vrot.slane %v2537, 7
        %v2540 = vshll.u32 %v2419, 16
        %v2542 = vor.u32 %v2539, %v2540
        %v2543 = vsel %vm903, %v2535, %v2542
        %v2545 = vshrl.u32 %v2420, 16
        %v2547 = vrot.slane %v2545, 7
        %v2548 = vrot.slane %v2547, 4
        %v2550 = vshrl.u32 %v2421, 16
        %v2552 = vrot.slane %v2550, 7
        %v2553 = vshll.u32 %v2421, 16
        %v2555 = vor.u32 %v2552, %v2553
        %v2556 = vsel %vm903, %v2548, %v2555
        %v2557 = vrot.slane %v2552, 4
        %v2559 = vshrl.u32 %v2422, 16
        %v2561 = vrot.slane %v2559, 7
        %v2562 = vshll.u32 %v2422, 16
        %v2564 = vor.u32 %v2561, %v2562
        %v2565 = vsel %vm903, %v2557, %v2564
        %v2567 = vshrl.u32 %v2423, 16
        %v2569 = vrot.slane %v2567, 7
        %v2570 = vrot.slane %v2569, 4
        %v2572 = vshrl.u32 %v2424, 16
        %v2574 = vrot.slane %v2572, 7
        %v2575 = vshll.u32 %v2424, 16
        %v2577 = vor.u32 %v2574, %v2575
        %v2578 = vsel %vm903, %v2570, %v2577
        %v2579 = vrot.slane %v2574, 4
        %v2581 = vshrl.u32 %v2425, 16
        %v2583 = vrot.slane %v2581, 7
        %v2584 = vshll.u32 %v2425, 16
        %v2586 = vor.u32 %v2583, %v2584
        %v2587 = vsel %vm903, %v2579, %v2586
        %v2589 = vshrl.u32 %v2426, 16
        %v2591 = vrot.slane %v2589, 7
        %v2592 = vrot.slane %v2591, 4
        %v2594 = vshrl.u32 %v2427, 16
        %v2596 = vrot.slane %v2594, 7
        %v2597 = vshll.u32 %v2427, 16
        %v2599 = vor.u32 %v2596, %v2597
        %v2600 = vsel %vm903, %v2592, %v2599
        %v2601 = vrot.slane %v2596, 4
        %v2603 = vshrl.u32 %v2428, 16
        %v2605 = vrot.slane %v2603, 7
        %v2606 = vshll.u32 %v2428, 16
        %v2608 = vor.u32 %v2605, %v2606
        %v2609 = vsel %vm903, %v2601, %v2608
        %v2611 = vshrl.u32 %v2429, 16
        %v2613 = vrot.slane %v2611, 7
        %v2614 = vrot.slane %v2613, 4
        %v2616 = vshrl.u32 %v2430, 16
        %v2618 = vrot.slane %v2616, 7
        %v2619 = vshll.u32 %v2430, 16
        %v2621 = vor.u32 %v2618, %v2619
        %v2622 = vsel %vm903, %v2614, %v2621
        %v2623 = vrot.slane %v2618, 4
        %v2625 = vshrl.u32 %v2431, 16
        %v2627 = vrot.slane %v2625, 7
        %v2628 = vshll.u32 %v2431, 16
        %v2630 = vor.u32 %v2627, %v2628
        %v2631 = vsel %vm903, %v2623, %v2630
        %v2633 = vshrl.u32 %v2432, 16
        %v2635 = vrot.slane %v2633, 7
        %v2636 = vrot.slane %v2635, 4
        %v2638 = vshrl.u32 %v2433, 16
        %v2640 = vrot.slane %v2638, 7
        %v2641 = vshll.u32 %v2433, 16
        %v2643 = vor.u32 %v2640, %v2641
        %v2644 = vsel %vm903, %v2636, %v2643
        %v2645 = vrot.slane %v2640, 4
        %v2647 = vshrl.u32 %v2434, 16
        %v2649 = vrot.slane %v2647, 7
        %v2650 = vshll.u32 %v2434, 16
        %v2652 = vor.u32 %v2649, %v2650
        %v2653 = vsel %vm903, %v2645, %v2652
        %v2655 = vshrl.u32 %v2435, 16
        %v2657 = vrot.slane %v2655, 7
        %v2658 = vrot.slane %v2657, 4
        %v2660 = vshrl.u32 %v2436, 16
        %v2662 = vrot.slane %v2660, 7
        %v2663 = vshll.u32 %v2436, 16
        %v2665 = vor.u32 %v2662, %v2663
        %v2666 = vsel %vm903, %v2658, %v2665
        %v2667 = vrot.slane %v2662, 4
        %v2669 = vshrl.u32 %v2437, 16
        %v2671 = vrot.slane %v2669, 7
        %v2672 = vshll.u32 %v2437, 16
        %v2674 = vor.u32 %v2671, %v2672
        %v2675 = vsel %vm903, %v2667, %v2674
        %v2677 = vshrl.u32 %v2438, 16
        %v2679 = vrot.slane %v2677, 7
        %v2680 = vrot.slane %v2679, 4
        %v2682 = vshrl.u32 %v2439, 16
        %v2684 = vrot.slane %v2682, 7
        %v2685 = vshll.u32 %v2439, 16
        %v2687 = vor.u32 %v2684, %v2685
        %v2688 = vsel %vm903, %v2680, %v2687
        %v2689 = vrot.slane %v2684, 4
        %v2691 = vshrl.u32 %v2440, 16
        %v2693 = vrot.slane %v2691, 7
        %v2694 = vshll.u32 %v2440, 16
        %v2696 = vor.u32 %v2693, %v2694
        %v2697 = vsel %vm903, %v2689, %v2696
        %v2699 = vshrl.u32 %v2441, 16
        %v2701 = vrot.slane %v2699, 7
        %v2702 = vrot.slane %v2701, 4
        %v2704 = vshrl.u32 %v2442, 16
        %v2706 = vrot.slane %v2704, 7
        %v2707 = vshll.u32 %v2442, 16
        %v2709 = vor.u32 %v2706, %v2707
        %v2710 = vsel %vm903, %v2702, %v2709
        %v2711 = vrot.slane %v2706, 4
        %v2713 = vshrl.u32 %v2443, 16
        %v2715 = vrot.slane %v2713, 7
        %v2716 = vshll.u32 %v2443, 16
        %v2718 = vor.u32 %v2715, %v2716
        %v2719 = vsel %vm903, %v2711, %v2718
        %v2721 = vshrl.u32 %v2444, 16
        %v2723 = vrot.slane %v2721, 7
        %v2724 = vrot.slane %v2723, 4
        %v2726 = vshrl.u32 %v2445, 16
        %v2728 = vrot.slane %v2726, 7
        %v2729 = vshll.u32 %v2445, 16
        %v2731 = vor.u32 %v2728, %v2729
        %v2732 = vsel %vm903, %v2724, %v2731
        %v2733 = vrot.slane %v2728, 4
        %v2735 = vshrl.u32 %v2446, 16
        %v2737 = vrot.slane %v2735, 7
        %v2738 = vshll.u32 %v2446, 16
        %v2740 = vor.u32 %v2737, %v2738
        %v2741 = vsel %vm903, %v2733, %v2740
        %v2743 = vshrl.u32 %v2447, 16
        %v2745 = vrot.slane %v2743, 7
        %v2746 = vrot.slane %v2745, 4
        %v2748 = vshrl.u32 %v2448, 16
        %v2750 = vrot.slane %v2748, 7
        %v2751 = vshll.u32 %v2448, 16
        %v2753 = vor.u32 %v2750, %v2751
        %v2754 = vsel %vm903, %v2746, %v2753
        %v2755 = vrot.slane %v2750, 4
        %v2757 = vshrl.u32 %v2449, 16
        %v2759 = vrot.slane %v2757, 7
        %v2760 = vshll.u32 %v2449, 16
        %v2762 = vor.u32 %v2759, %v2760
        %v2763 = vsel %vm903, %v2755, %v2762
        %v2765 = vshrl.u32 %v2450, 16
        %v2767 = vrot.slane %v2765, 7
        %v2768 = vrot.slane %v2767, 4
        %v2770 = vshrl.u32 %v2451, 16
        %v2772 = vrot.slane %v2770, 7
        %v2773 = vshll.u32 %v2451, 16
        %v2775 = vor.u32 %v2772, %v2773
        %v2776 = vsel %vm903, %v2768, %v2775
        %v2777 = vrot.slane %v2772, 4
        %v2779 = vshrl.u32 %v2452, 16
        %v2781 = vrot.slane %v2779, 7
        %v2782 = vshll.u32 %v2452, 16
        %v2784 = vor.u32 %v2781, %v2782
        %v2785 = vsel %vm903, %v2777, %v2784
        %v2787 = vshrl.u32 %v2453, 16
        %v2789 = vrot.slane %v2787, 7
        %v2790 = vrot.slane %v2789, 4
        %v2792 = vshrl.u32 %v2454, 16
        %v2794 = vrot.slane %v2792, 7
        %v2795 = vshll.u32 %v2454, 16
        %v2797 = vor.u32 %v2794, %v2795
        %v2798 = vsel %vm903, %v2790, %v2797
        %v2799 = vrot.slane %v2794, 4
        %v2801 = vshrl.u32 %v2455, 16
        %v2803 = vrot.slane %v2801, 7
        %v2804 = vshll.u32 %v2455, 16
        %v2806 = vor.u32 %v2803, %v2804
        %v2807 = vsel %vm903, %v2799, %v2806
        %s2808 = scalar_lea.vmem [#allocation6], 192
        %v2809 = vld [vmem:[%s2808] sm:$0xf]
        %v2810 = vld [vmem:[%s2808 + $0x4] sm:$0xf]
        %v2811 = vld [vmem:[%s2808 + $0x8] sm:$0xf]
        %v2812 = vld [vmem:[%s2808 + $0xc] sm:$0xf]
        %v2813 = vld [vmem:[%s2808 + $0x10] sm:$0xf]
        %v2814 = vld [vmem:[%s2808 + $0x14] sm:$0xf]
        %v2815 = vld [vmem:[%s2808 + $0x18] sm:$0xf]
        %v2816 = vld [vmem:[%s2808 + $0x1c] sm:$0xf]
        %v2817 = vld [vmem:[%s2808 + $0x20] sm:$0xf]
        %v2818 = vld [vmem:[%s2808 + $0x24] sm:$0xf]
        %v2819 = vld [vmem:[%s2808 + $0x28] sm:$0xf]
        %v2820 = vld [vmem:[%s2808 + $0x2c] sm:$0xf]
        %v2821 = vld [vmem:[%s2808 + $0x30] sm:$0xf]
        %v2822 = vld [vmem:[%s2808 + $0x34] sm:$0xf]
        %v2823 = vld [vmem:[%s2808 + $0x38] sm:$0xf]
        %v2824 = vld [vmem:[%s2808 + $0x3c] sm:$0xf]
        %v2825 = vunpack.c.l.b16 %v2468
        %v2826 = vunpack.c.l.b16 %v2477
        %v2827 = vunpack.c.l.b16 %v2490
        %v2828 = vunpack.c.l.b16 %v2499
        %v2829 = vunpack.c.l.b16 %v2512
        %v2830 = vunpack.c.l.b16 %v2521
        %v2831 = vunpack.c.l.b16 %v2534
        %v2832 = vunpack.c.l.b16 %v2543
        %v2833 = vunpack.c.l.b16 %v2556
        %v2834 = vunpack.c.l.b16 %v2565
        %v2835 = vunpack.c.l.b16 %v2578
        %v2836 = vunpack.c.l.b16 %v2587
        %v2837 = vunpack.c.l.b16 %v2600
        %v2838 = vunpack.c.l.b16 %v2609
        %v2839 = vunpack.c.l.b16 %v2622
        %v2840 = vunpack.c.l.b16 %v2631
        %v2841 = vunpack.c.l.b16 %v2644
        %v2842 = vunpack.c.l.b16 %v2653
        %v2843 = vunpack.c.l.b16 %v2666
        %v2844 = vunpack.c.l.b16 %v2675
        %v2845 = vunpack.c.l.b16 %v2688
        %v2846 = vunpack.c.l.b16 %v2697
        %v2847 = vunpack.c.l.b16 %v2710
        %v2848 = vunpack.c.l.b16 %v2719
        %v2849 = vunpack.c.l.b16 %v2732
        %v2850 = vunpack.c.l.b16 %v2741
        %v2851 = vunpack.c.l.b16 %v2754
        %v2852 = vunpack.c.l.b16 %v2763
        %v2853 = vunpack.c.l.b16 %v2776
        %v2854 = vunpack.c.l.b16 %v2785
        %v2855 = vunpack.c.l.b16 %v2798
        %v2856 = vunpack.c.l.b16 %v2807
        %v2857 = vpack.c.b16 %v2826, %v2825
        %v2858 = vpack.c.b16 %v2828, %v2827
        %v2859 = vpack.c.b16 %v2830, %v2829
        %v2860 = vpack.c.b16 %v2832, %v2831
        %v2861 = vpack.c.b16 %v2834, %v2833
        %v2862 = vpack.c.b16 %v2836, %v2835
        %v2863 = vpack.c.b16 %v2838, %v2837
        %v2864 = vpack.c.b16 %v2840, %v2839
        %v2865 = vpack.c.b16 %v2842, %v2841
        %v2866 = vpack.c.b16 %v2844, %v2843
        %v2867 = vpack.c.b16 %v2846, %v2845
        %v2868 = vpack.c.b16 %v2848, %v2847
        %v2869 = vpack.c.b16 %v2850, %v2849
        %v2870 = vpack.c.b16 %v2852, %v2851
        %v2871 = vpack.c.b16 %v2854, %v2853
        %v2872 = vpack.c.b16 %v2856, %v2855
        %v2905 = vunpack.c.l.b16 %v2809
        %v2906 = vunpack.c.l.b16 %v2810
        %v2907 = vunpack.c.l.b16 %v2811
        %v2908 = vunpack.c.l.b16 %v2812
        %v2909 = vunpack.c.l.b16 %v2813
        %v2910 = vunpack.c.l.b16 %v2814
        %v2911 = vunpack.c.l.b16 %v2815
        %v2912 = vunpack.c.l.b16 %v2816
        %v2913 = vunpack.c.l.b16 %v2817
        %v2914 = vunpack.c.l.b16 %v2818
        %v2915 = vunpack.c.l.b16 %v2819
        %v2916 = vunpack.c.l.b16 %v2820
        %v2917 = vunpack.c.l.b16 %v2821
        %v2918 = vunpack.c.l.b16 %v2822
        %v2919 = vunpack.c.l.b16 %v2823
        %v2920 = vunpack.c.l.b16 %v2824
        %v2921 = vpack.c.b16 %v2906, %v2905
        %v2922 = vpack.c.b16 %v2908, %v2907
        %v2923 = vpack.c.b16 %v2910, %v2909
        %v2924 = vpack.c.b16 %v2912, %v2911
        %v2925 = vpack.c.b16 %v2914, %v2913
        %v2926 = vpack.c.b16 %v2916, %v2915
        %v2927 = vpack.c.b16 %v2918, %v2917
        %v2928 = vpack.c.b16 %v2920, %v2919
        %2937 = vmatpush.bf16.msra.mxu0 %v2928
        %2938 = vmatpush.bf16.msra.mxu0 %v2927
        %2939 = vmatpush.bf16.msra.mxu0 %v2926
        %2940 = vmatpush.bf16.msra.mxu0 %v2925
        %2941 = vmatpush.bf16.msra.mxu0 %v2924
        %2942 = vmatpush.bf16.msra.mxu0 %v2923
        %2943 = vmatpush.bf16.msra.mxu0 %v2922
        %2944 = vmatpush.bf16.msra.mxu0 %v2921
        %2945 = vmatmul.bf16.gmra.mxu0 %v2857
        %v2946 = vpop.f32.mrf.mxu0
        %v2947 = vadd.f32 0.0, %v2946
        %v2948 = vpop.f32.mrf.mxu0
        %v2949 = vadd.f32 0.0, %v2948
        %2950 = vmatmul.bf16.gmra.mxu0 %v2858
        %v2951 = vpop.f32.mrf.mxu0
        %v2952 = vadd.f32 0.0, %v2951
        %v2953 = vpop.f32.mrf.mxu0
        %v2954 = vadd.f32 0.0, %v2953
        %2955 = vmatmul.bf16.gmra.mxu0 %v2859
        %v2956 = vpop.f32.mrf.mxu0
        %v2957 = vadd.f32 0.0, %v2956
        %v2958 = vpop.f32.mrf.mxu0
        %v2959 = vadd.f32 0.0, %v2958
        %2960 = vmatmul.bf16.gmra.mxu0 %v2860
        %v2961 = vpop.f32.mrf.mxu0
        %v2962 = vadd.f32 0.0, %v2961
        %v2963 = vpop.f32.mrf.mxu0
        %v2964 = vadd.f32 0.0, %v2963
        %2965 = vmatmul.bf16.gmra.mxu0 %v2861
        %v2966 = vpop.f32.mrf.mxu0
        %v2967 = vadd.f32 0.0, %v2966
        %v2968 = vpop.f32.mrf.mxu0
        %v2969 = vadd.f32 0.0, %v2968
        %2970 = vmatmul.bf16.gmra.mxu0 %v2862
        %v2971 = vpop.f32.mrf.mxu0
        %v2972 = vadd.f32 0.0, %v2971
        %v2973 = vpop.f32.mrf.mxu0
        %v2974 = vadd.f32 0.0, %v2973
        %2975 = vmatmul.bf16.gmra.mxu0 %v2863
        %v2976 = vpop.f32.mrf.mxu0
        %v2977 = vadd.f32 0.0, %v2976
        %v2978 = vpop.f32.mrf.mxu0
        %v2979 = vadd.f32 0.0, %v2978
        %2980 = vmatmul.bf16.gmra.mxu0 %v2864
        %v2981 = vpop.f32.mrf.mxu0
        %v2982 = vadd.f32 0.0, %v2981
        %v2983 = vpop.f32.mrf.mxu0
        %v2984 = vadd.f32 0.0, %v2983
        %2985 = vmatmul.bf16.gmra.mxu0 %v2865
        %v2986 = vpop.f32.mrf.mxu0
        %v2987 = vadd.f32 0.0, %v2986
        %v2988 = vpop.f32.mrf.mxu0
        %v2989 = vadd.f32 0.0, %v2988
        %2990 = vmatmul.bf16.gmra.mxu0 %v2866
        %v2991 = vpop.f32.mrf.mxu0
        %v2992 = vadd.f32 0.0, %v2991
        %v2993 = vpop.f32.mrf.mxu0
        %v2994 = vadd.f32 0.0, %v2993
        %2995 = vmatmul.bf16.gmra.mxu0 %v2867
        %v2996 = vpop.f32.mrf.mxu0
        %v2997 = vadd.f32 0.0, %v2996
        %v2998 = vpop.f32.mrf.mxu0
        %v2999 = vadd.f32 0.0, %v2998
        %3000 = vmatmul.bf16.gmra.mxu0 %v2868
        %v3001 = vpop.f32.mrf.mxu0
        %v3002 = vadd.f32 0.0, %v3001
        %v3003 = vpop.f32.mrf.mxu0
        %v3004 = vadd.f32 0.0, %v3003
        %3005 = vmatmul.bf16.gmra.mxu0 %v2869
        %v3006 = vpop.f32.mrf.mxu0
        %v3007 = vadd.f32 0.0, %v3006
        %v3008 = vpop.f32.mrf.mxu0
        %v3009 = vadd.f32 0.0, %v3008
        %3010 = vmatmul.bf16.gmra.mxu0 %v2870
        %v3011 = vpop.f32.mrf.mxu0
        %v3012 = vadd.f32 0.0, %v3011
        %v3013 = vpop.f32.mrf.mxu0
        %v3014 = vadd.f32 0.0, %v3013
        %3015 = vmatmul.bf16.gmra.mxu0 %v2871
        %v3016 = vpop.f32.mrf.mxu0
        %v3017 = vadd.f32 0.0, %v3016
        %v3018 = vpop.f32.mrf.mxu0
        %v3019 = vadd.f32 0.0, %v3018
        %3020 = vmatmul.bf16.gmra.mxu0 %v2872
        %v3021 = vpop.f32.mrf.mxu0
        %v3022 = vadd.f32 0.0, %v3021
        %v3023 = vpop.f32.mrf.mxu0
        %v3024 = vadd.f32 0.0, %v3023
        %3025 = vdwg.mxu0
        %v3026 = vadd.f32 %v2376, %v2947
        %v3027 = vadd.f32 %v2377, %v2949
        %v3028 = vadd.f32 %v2378, %v2952
        %v3029 = vadd.f32 %v2379, %v2954
        %v3030 = vadd.f32 %v2380, %v2957
        %v3031 = vadd.f32 %v2381, %v2959
        %v3032 = vadd.f32 %v2382, %v2962
        %v3033 = vadd.f32 %v2383, %v2964
        %v3034 = vadd.f32 %v2384, %v2967
        %v3035 = vadd.f32 %v2385, %v2969
        %v3036 = vadd.f32 %v2386, %v2972
        %v3037 = vadd.f32 %v2387, %v2974
        %v3038 = vadd.f32 %v2388, %v2977
        %v3039 = vadd.f32 %v2389, %v2979
        %v3040 = vadd.f32 %v2390, %v2982
        %v3041 = vadd.f32 %v2391, %v2984
        %v3042 = vadd.f32 %v2392, %v2987
        %v3043 = vadd.f32 %v2393, %v2989
        %v3044 = vadd.f32 %v2394, %v2992
        %v3045 = vadd.f32 %v2395, %v2994
        %v3046 = vadd.f32 %v2396, %v2997
        %v3047 = vadd.f32 %v2397, %v2999
        %v3048 = vadd.f32 %v2398, %v3002
        %v3049 = vadd.f32 %v2399, %v3004
        %v3050 = vadd.f32 %v2400, %v3007
        %v3051 = vadd.f32 %v2401, %v3009
        %v3052 = vadd.f32 %v2402, %v3012
        %v3053 = vadd.f32 %v2403, %v3014
        %v3054 = vadd.f32 %v2404, %v3017
        %v3055 = vadd.f32 %v2405, %v3019
        %v3056 = vadd.f32 %v2406, %v3022
        %v3057 = vadd.f32 %v2407, %v3024
        %s3058 = scalar_lea.vmem [#allocation6], 256
        %v3059 = vld [vmem:[%s3058] sm:$0xf]
        %v3060 = vld [vmem:[%s3058 + $0x4] sm:$0xf]
        %v3061 = vld [vmem:[%s3058 + $0x8] sm:$0xf]
        %v3062 = vld [vmem:[%s3058 + $0xc] sm:$0xf]
        %v3063 = vld [vmem:[%s3058 + $0x10] sm:$0xf]
        %v3064 = vld [vmem:[%s3058 + $0x14] sm:$0xf]
        %v3065 = vld [vmem:[%s3058 + $0x18] sm:$0xf]
        %v3066 = vld [vmem:[%s3058 + $0x1c] sm:$0xf]
        %v3067 = vld [vmem:[%s3058 + $0x20] sm:$0xf]
        %v3068 = vld [vmem:[%s3058 + $0x24] sm:$0xf]
        %v3069 = vld [vmem:[%s3058 + $0x28] sm:$0xf]
        %v3070 = vld [vmem:[%s3058 + $0x2c] sm:$0xf]
        %v3071 = vld [vmem:[%s3058 + $0x30] sm:$0xf]
        %v3072 = vld [vmem:[%s3058 + $0x34] sm:$0xf]
        %v3073 = vld [vmem:[%s3058 + $0x38] sm:$0xf]
        %v3074 = vld [vmem:[%s3058 + $0x3c] sm:$0xf]
        %v3107 = vunpack.c.l.b16 %v2409
        %v3108 = vunpack.c.l.b16 %v2410
        %v3109 = vunpack.c.l.b16 %v2412
        %v3110 = vunpack.c.l.b16 %v2413
        %v3111 = vunpack.c.l.b16 %v2415
        %v3112 = vunpack.c.l.b16 %v2416
        %v3113 = vunpack.c.l.b16 %v2418
        %v3114 = vunpack.c.l.b16 %v2419
        %v3115 = vunpack.c.l.b16 %v2421
        %v3116 = vunpack.c.l.b16 %v2422
        %v3117 = vunpack.c.l.b16 %v2424
        %v3118 = vunpack.c.l.b16 %v2425
        %v3119 = vunpack.c.l.b16 %v2427
        %v3120 = vunpack.c.l.b16 %v2428
        %v3121 = vunpack.c.l.b16 %v2430
        %v3122 = vunpack.c.l.b16 %v2431
        %v3123 = vunpack.c.l.b16 %v2433
        %v3124 = vunpack.c.l.b16 %v2434
        %v3125 = vunpack.c.l.b16 %v2436
        %v3126 = vunpack.c.l.b16 %v2437
        %v3127 = vunpack.c.l.b16 %v2439
        %v3128 = vunpack.c.l.b16 %v2440
        %v3129 = vunpack.c.l.b16 %v2442
        %v3130 = vunpack.c.l.b16 %v2443
        %v3131 = vunpack.c.l.b16 %v2445
        %v3132 = vunpack.c.l.b16 %v2446
        %v3133 = vunpack.c.l.b16 %v2448
        %v3134 = vunpack.c.l.b16 %v2449
        %v3135 = vunpack.c.l.b16 %v2451
        %v3136 = vunpack.c.l.b16 %v2452
        %v3137 = vunpack.c.l.b16 %v2454
        %v3138 = vunpack.c.l.b16 %v2455
        %v3139 = vpack.c.b16 %v3108, %v3107
        %v3140 = vpack.c.b16 %v3110, %v3109
        %v3141 = vpack.c.b16 %v3112, %v3111
        %v3142 = vpack.c.b16 %v3114, %v3113
        %v3143 = vpack.c.b16 %v3116, %v3115
        %v3144 = vpack.c.b16 %v3118, %v3117
        %v3145 = vpack.c.b16 %v3120, %v3119
        %v3146 = vpack.c.b16 %v3122, %v3121
        %v3147 = vpack.c.b16 %v3124, %v3123
        %v3148 = vpack.c.b16 %v3126, %v3125
        %v3149 = vpack.c.b16 %v3128, %v3127
        %v3150 = vpack.c.b16 %v3130, %v3129
        %v3151 = vpack.c.b16 %v3132, %v3131
        %v3152 = vpack.c.b16 %v3134, %v3133
        %v3153 = vpack.c.b16 %v3136, %v3135
        %v3154 = vpack.c.b16 %v3138, %v3137
        %v3187 = vunpack.c.l.b16 %v3059
        %v3188 = vunpack.c.l.b16 %v3060
        %v3189 = vunpack.c.l.b16 %v3061
        %v3190 = vunpack.c.l.b16 %v3062
        %v3191 = vunpack.c.l.b16 %v3063
        %v3192 = vunpack.c.l.b16 %v3064
        %v3193 = vunpack.c.l.b16 %v3065
        %v3194 = vunpack.c.l.b16 %v3066
        %v3195 = vunpack.c.l.b16 %v3067
        %v3196 = vunpack.c.l.b16 %v3068
        %v3197 = vunpack.c.l.b16 %v3069
        %v3198 = vunpack.c.l.b16 %v3070
        %v3199 = vunpack.c.l.b16 %v3071
        %v3200 = vunpack.c.l.b16 %v3072
        %v3201 = vunpack.c.l.b16 %v3073
        %v3202 = vunpack.c.l.b16 %v3074
        %v3203 = vpack.c.b16 %v3188, %v3187
        %v3204 = vpack.c.b16 %v3190, %v3189
        %v3205 = vpack.c.b16 %v3192, %v3191
        %v3206 = vpack.c.b16 %v3194, %v3193
        %v3207 = vpack.c.b16 %v3196, %v3195
        %v3208 = vpack.c.b16 %v3198, %v3197
        %v3209 = vpack.c.b16 %v3200, %v3199
        %v3210 = vpack.c.b16 %v3202, %v3201
        %3219 = vmatpush.bf16.msra.mxu0 %v3210
        %3220 = vmatpush.bf16.msra.mxu0 %v3209
        %3221 = vmatpush.bf16.msra.mxu0 %v3208
        %3222 = vmatpush.bf16.msra.mxu0 %v3207
        %3223 = vmatpush.bf16.msra.mxu0 %v3206
        %3224 = vmatpush.bf16.msra.mxu0 %v3205
        %3225 = vmatpush.bf16.msra.mxu0 %v3204
        %3226 = vmatpush.bf16.msra.mxu0 %v3203
        %3227 = vmatmul.bf16.gmra.mxu0 %v3139
        %v3228 = vpop.f32.mrf.mxu0
        %v3229 = vadd.f32 0.0, %v3228
        %v3230 = vpop.f32.mrf.mxu0
        %v3231 = vadd.f32 0.0, %v3230
        %3232 = vmatmul.bf16.gmra.mxu0 %v3140
        %v3233 = vpop.f32.mrf.mxu0
        %v3234 = vadd.f32 0.0, %v3233
        %v3235 = vpop.f32.mrf.mxu0
        %v3236 = vadd.f32 0.0, %v3235
        %3237 = vmatmul.bf16.gmra.mxu0 %v3141
        %v3238 = vpop.f32.mrf.mxu0
        %v3239 = vadd.f32 0.0, %v3238
        %v3240 = vpop.f32.mrf.mxu0
        %v3241 = vadd.f32 0.0, %v3240
        %3242 = vmatmul.bf16.gmra.mxu0 %v3142
        %v3243 = vpop.f32.mrf.mxu0
        %v3244 = vadd.f32 0.0, %v3243
        %v3245 = vpop.f32.mrf.mxu0
        %v3246 = vadd.f32 0.0, %v3245
        %3247 = vmatmul.bf16.gmra.mxu0 %v3143
        %v3248 = vpop.f32.mrf.mxu0
        %v3249 = vadd.f32 0.0, %v3248
        %v3250 = vpop.f32.mrf.mxu0
        %v3251 = vadd.f32 0.0, %v3250
        %3252 = vmatmul.bf16.gmra.mxu0 %v3144
        %v3253 = vpop.f32.mrf.mxu0
        %v3254 = vadd.f32 0.0, %v3253
        %v3255 = vpop.f32.mrf.mxu0
        %v3256 = vadd.f32 0.0, %v3255
        %3257 = vmatmul.bf16.gmra.mxu0 %v3145
        %v3258 = vpop.f32.mrf.mxu0
        %v3259 = vadd.f32 0.0, %v3258
        %v3260 = vpop.f32.mrf.mxu0
        %v3261 = vadd.f32 0.0, %v3260
        %3262 = vmatmul.bf16.gmra.mxu0 %v3146
        %v3263 = vpop.f32.mrf.mxu0
        %v3264 = vadd.f32 0.0, %v3263
        %v3265 = vpop.f32.mrf.mxu0
        %v3266 = vadd.f32 0.0, %v3265
        %3267 = vmatmul.bf16.gmra.mxu0 %v3147
        %v3268 = vpop.f32.mrf.mxu0
        %v3269 = vadd.f32 0.0, %v3268
        %v3270 = vpop.f32.mrf.mxu0
        %v3271 = vadd.f32 0.0, %v3270
        %3272 = vmatmul.bf16.gmra.mxu0 %v3148
        %v3273 = vpop.f32.mrf.mxu0
        %v3274 = vadd.f32 0.0, %v3273
        %v3275 = vpop.f32.mrf.mxu0
        %v3276 = vadd.f32 0.0, %v3275
        %3277 = vmatmul.bf16.gmra.mxu0 %v3149
        %v3278 = vpop.f32.mrf.mxu0
        %v3279 = vadd.f32 0.0, %v3278
        %v3280 = vpop.f32.mrf.mxu0
        %v3281 = vadd.f32 0.0, %v3280
        %3282 = vmatmul.bf16.gmra.mxu0 %v3150
        %v3283 = vpop.f32.mrf.mxu0
        %v3284 = vadd.f32 0.0, %v3283
        %v3285 = vpop.f32.mrf.mxu0
        %v3286 = vadd.f32 0.0, %v3285
        %3287 = vmatmul.bf16.gmra.mxu0 %v3151
        %v3288 = vpop.f32.mrf.mxu0
        %v3289 = vadd.f32 0.0, %v3288
        %v3290 = vpop.f32.mrf.mxu0
        %v3291 = vadd.f32 0.0, %v3290
        %3292 = vmatmul.bf16.gmra.mxu0 %v3152
        %v3293 = vpop.f32.mrf.mxu0
        %v3294 = vadd.f32 0.0, %v3293
        %v3295 = vpop.f32.mrf.mxu0
        %v3296 = vadd.f32 0.0, %v3295
        %3297 = vmatmul.bf16.gmra.mxu0 %v3153
        %v3298 = vpop.f32.mrf.mxu0
        %v3299 = vadd.f32 0.0, %v3298
        %v3300 = vpop.f32.mrf.mxu0
        %v3301 = vadd.f32 0.0, %v3300
        %3302 = vmatmul.bf16.gmra.mxu0 %v3154
        %v3303 = vpop.f32.mrf.mxu0
        %v3304 = vadd.f32 0.0, %v3303
        %v3305 = vpop.f32.mrf.mxu0
        %v3306 = vadd.f32 0.0, %v3305
        %3307 = vdwg.mxu0
        %v3308 = vadd.f32 %v3026, %v3229
        %v3309 = vadd.f32 %v3027, %v3231
        %v3310 = vadd.f32 %v3028, %v3234
        %v3311 = vadd.f32 %v3029, %v3236
        %v3312 = vadd.f32 %v3030, %v3239
        %v3313 = vadd.f32 %v3031, %v3241
        %v3314 = vadd.f32 %v3032, %v3244
        %v3315 = vadd.f32 %v3033, %v3246
        %v3316 = vadd.f32 %v3034, %v3249
        %v3317 = vadd.f32 %v3035, %v3251
        %v3318 = vadd.f32 %v3036, %v3254
        %v3319 = vadd.f32 %v3037, %v3256
        %v3320 = vadd.f32 %v3038, %v3259
        %v3321 = vadd.f32 %v3039, %v3261
        %v3322 = vadd.f32 %v3040, %v3264
        %v3323 = vadd.f32 %v3041, %v3266
        %v3324 = vadd.f32 %v3042, %v3269
        %v3325 = vadd.f32 %v3043, %v3271
        %v3326 = vadd.f32 %v3044, %v3274
        %v3327 = vadd.f32 %v3045, %v3276
        %v3328 = vadd.f32 %v3046, %v3279
        %v3329 = vadd.f32 %v3047, %v3281
        %v3330 = vadd.f32 %v3048, %v3284
        %v3331 = vadd.f32 %v3049, %v3286
        %v3332 = vadd.f32 %v3050, %v3289
        %v3333 = vadd.f32 %v3051, %v3291
        %v3334 = vadd.f32 %v3052, %v3294
        %v3335 = vadd.f32 %v3053, %v3296
        %v3336 = vadd.f32 %v3054, %v3299
        %v3337 = vadd.f32 %v3055, %v3301
        %v3338 = vadd.f32 %v3056, %v3304
        %v3339 = vadd.f32 %v3057, %v3306
        %v3340 = vld [vmem:[%s710 + $0x4] sm:$0xf]
        %v3341 = vld [vmem:[%s710 + $0x8] sm:$0xf]
        %v3342 = vld [vmem:[%s710 + $0xc] sm:$0x1]
        %v3343 = vld [vmem:[%s710 + $0x14] sm:$0xf]
        %v3344 = vld [vmem:[%s710 + $0x18] sm:$0xf]
        %v3345 = vld [vmem:[%s710 + $0x1c] sm:$0x1]
        %v3346 = vld [vmem:[%s710 + $0x24] sm:$0xf]
        %v3347 = vld [vmem:[%s710 + $0x28] sm:$0xf]
        %v3348 = vld [vmem:[%s710 + $0x2c] sm:$0x1]
        %v3349 = vld [vmem:[%s710 + $0x34] sm:$0xf]
        %v3350 = vld [vmem:[%s710 + $0x38] sm:$0xf]
        %v3351 = vld [vmem:[%s710 + $0x3c] sm:$0x1]
        %v3352 = vld [vmem:[%s710 + $0x44] sm:$0xf]
        %v3353 = vld [vmem:[%s710 + $0x48] sm:$0xf]
        %v3354 = vld [vmem:[%s710 + $0x4c] sm:$0x1]
        %v3355 = vld [vmem:[%s710 + $0x54] sm:$0xf]
        %v3356 = vld [vmem:[%s710 + $0x58] sm:$0xf]
        %v3357 = vld [vmem:[%s710 + $0x5c] sm:$0x1]
        %v3358 = vld [vmem:[%s710 + $0x64] sm:$0xf]
        %v3359 = vld [vmem:[%s710 + $0x68] sm:$0xf]
        %v3360 = vld [vmem:[%s710 + $0x6c] sm:$0x1]
        %v3361 = vld [vmem:[%s710 + $0x74] sm:$0xf]
        %v3362 = vld [vmem:[%s710 + $0x78] sm:$0xf]
        %v3363 = vld [vmem:[%s710 + $0x7c] sm:$0x1]
        %v3364 = vld [vmem:[%s710 + $0x84] sm:$0xf]
        %v3365 = vld [vmem:[%s710 + $0x88] sm:$0xf]
        %v3366 = vld [vmem:[%s710 + $0x8c] sm:$0x1]
        %v3367 = vld [vmem:[%s710 + $0x94] sm:$0xf]
        %v3368 = vld [vmem:[%s710 + $0x98] sm:$0xf]
        %v3369 = vld [vmem:[%s710 + $0x9c] sm:$0x1]
        %v3370 = vld [vmem:[%s710 + $0xa4] sm:$0xf]
        %v3371 = vld [vmem:[%s710 + $0xa8] sm:$0xf]
        %v3372 = vld [vmem:[%s710 + $0xac] sm:$0x1]
        %v3373 = vld [vmem:[%s710 + $0xb4] sm:$0xf]
        %v3374 = vld [vmem:[%s710 + $0xb8] sm:$0xf]
        %v3375 = vld [vmem:[%s710 + $0xbc] sm:$0x1]
        %v3376 = vld [vmem:[%s710 + $0xc4] sm:$0xf]
        %v3377 = vld [vmem:[%s710 + $0xc8] sm:$0xf]
        %v3378 = vld [vmem:[%s710 + $0xcc] sm:$0x1]
        %v3379 = vld [vmem:[%s710 + $0xd4] sm:$0xf]
        %v3380 = vld [vmem:[%s710 + $0xd8] sm:$0xf]
        %v3381 = vld [vmem:[%s710 + $0xdc] sm:$0x1]
        %v3382 = vld [vmem:[%s710 + $0xe4] sm:$0xf]
        %v3383 = vld [vmem:[%s710 + $0xe8] sm:$0xf]
        %v3384 = vld [vmem:[%s710 + $0xec] sm:$0x1]
        %v3385 = vld [vmem:[%s710 + $0xf4] sm:$0xf]
        %v3386 = vld [vmem:[%s710 + $0xf8] sm:$0xf]
        %v3387 = vld [vmem:[%s710 + $0xfc] sm:$0x1]
        %v3389 = vshrl.u32 %v3340, 16
        %v3391 = vrot.slane %v3389, 4
        %v3392 = vshll.u32 %v3340, 16
        %v3394 = vrot.slane %v3392, 5
        %v3395 = vor.u32 %v3391, %v3394
        %v3396 = vrot.slane %v3395, 4
        %v3398 = vshll.u32 %v3341, 16
        %v3400 = vrot.slane %v3398, 5
        %v3401 = vsel %vm1773, %v3396, %v3400
        %v3402 = vshrl.u32 %v3341, 16
        %v3404 = vrot.slane %v3402, 4
        %v3405 = vor.u32 %v3404, %v3400
        %v3406 = vrot.slane %v3405, 4
        %v3408 = vshll.u32 %v3342, 16
        %v3410 = vrot.slane %v3408, 5
        %v3411 = vsel %vm1773, %v3406, %v3410
        %v3413 = vshrl.u32 %v3343, 16
        %v3415 = vrot.slane %v3413, 4
        %v3416 = vshll.u32 %v3343, 16
        %v3418 = vrot.slane %v3416, 5
        %v3419 = vor.u32 %v3415, %v3418
        %v3420 = vrot.slane %v3419, 4
        %v3422 = vshll.u32 %v3344, 16
        %v3424 = vrot.slane %v3422, 5
        %v3425 = vsel %vm1773, %v3420, %v3424
        %v3426 = vshrl.u32 %v3344, 16
        %v3428 = vrot.slane %v3426, 4
        %v3429 = vor.u32 %v3428, %v3424
        %v3430 = vrot.slane %v3429, 4
        %v3432 = vshll.u32 %v3345, 16
        %v3434 = vrot.slane %v3432, 5
        %v3435 = vsel %vm1773, %v3430, %v3434
        %v3437 = vshrl.u32 %v3346, 16
        %v3439 = vrot.slane %v3437, 4
        %v3440 = vshll.u32 %v3346, 16
        %v3442 = vrot.slane %v3440, 5
        %v3443 = vor.u32 %v3439, %v3442
        %v3444 = vrot.slane %v3443, 4
        %v3446 = vshll.u32 %v3347, 16
        %v3448 = vrot.slane %v3446, 5
        %v3449 = vsel %vm1773, %v3444, %v3448
        %v3450 = vshrl.u32 %v3347, 16
        %v3452 = vrot.slane %v3450, 4
        %v3453 = vor.u32 %v3452, %v3448
        %v3454 = vrot.slane %v3453, 4
        %v3456 = vshll.u32 %v3348, 16
        %v3458 = vrot.slane %v3456, 5
        %v3459 = vsel %vm1773, %v3454, %v3458
        %v3461 = vshrl.u32 %v3349, 16
        %v3463 = vrot.slane %v3461, 4
        %v3464 = vshll.u32 %v3349, 16
        %v3466 = vrot.slane %v3464, 5
        %v3467 = vor.u32 %v3463, %v3466
        %v3468 = vrot.slane %v3467, 4
        %v3470 = vshll.u32 %v3350, 16
        %v3472 = vrot.slane %v3470, 5
        %v3473 = vsel %vm1773, %v3468, %v3472
        %v3474 = vshrl.u32 %v3350, 16
        %v3476 = vrot.slane %v3474, 4
        %v3477 = vor.u32 %v3476, %v3472
        %v3478 = vrot.slane %v3477, 4
        %v3480 = vshll.u32 %v3351, 16
        %v3482 = vrot.slane %v3480, 5
        %v3483 = vsel %vm1773, %v3478, %v3482
        %v3485 = vshrl.u32 %v3352, 16
        %v3487 = vrot.slane %v3485, 4
        %v3488 = vshll.u32 %v3352, 16
        %v3490 = vrot.slane %v3488, 5
        %v3491 = vor.u32 %v3487, %v3490
        %v3492 = vrot.slane %v3491, 4
        %v3494 = vshll.u32 %v3353, 16
        %v3496 = vrot.slane %v3494, 5
        %v3497 = vsel %vm1773, %v3492, %v3496
        %v3498 = vshrl.u32 %v3353, 16
        %v3500 = vrot.slane %v3498, 4
        %v3501 = vor.u32 %v3500, %v3496
        %v3502 = vrot.slane %v3501, 4
        %v3504 = vshll.u32 %v3354, 16
        %v3506 = vrot.slane %v3504, 5
        %v3507 = vsel %vm1773, %v3502, %v3506
        %v3509 = vshrl.u32 %v3355, 16
        %v3511 = vrot.slane %v3509, 4
        %v3512 = vshll.u32 %v3355, 16
        %v3514 = vrot.slane %v3512, 5
        %v3515 = vor.u32 %v3511, %v3514
        %v3516 = vrot.slane %v3515, 4
        %v3518 = vshll.u32 %v3356, 16
        %v3520 = vrot.slane %v3518, 5
        %v3521 = vsel %vm1773, %v3516, %v3520
        %v3522 = vshrl.u32 %v3356, 16
        %v3524 = vrot.slane %v3522, 4
        %v3525 = vor.u32 %v3524, %v3520
        %v3526 = vrot.slane %v3525, 4
        %v3528 = vshll.u32 %v3357, 16
        %v3530 = vrot.slane %v3528, 5
        %v3531 = vsel %vm1773, %v3526, %v3530
        %v3533 = vshrl.u32 %v3358, 16
        %v3535 = vrot.slane %v3533, 4
        %v3536 = vshll.u32 %v3358, 16
        %v3538 = vrot.slane %v3536, 5
        %v3539 = vor.u32 %v3535, %v3538
        %v3540 = vrot.slane %v3539, 4
        %v3542 = vshll.u32 %v3359, 16
        %v3544 = vrot.slane %v3542, 5
        %v3545 = vsel %vm1773, %v3540, %v3544
        %v3546 = vshrl.u32 %v3359, 16
        %v3548 = vrot.slane %v3546, 4
        %v3549 = vor.u32 %v3548, %v3544
        %v3550 = vrot.slane %v3549, 4
        %v3552 = vshll.u32 %v3360, 16
        %v3554 = vrot.slane %v3552, 5
        %v3555 = vsel %vm1773, %v3550, %v3554
        %v3557 = vshrl.u32 %v3361, 16
        %v3559 = vrot.slane %v3557, 4
        %v3560 = vshll.u32 %v3361, 16
        %v3562 = vrot.slane %v3560, 5
        %v3563 = vor.u32 %v3559, %v3562
        %v3564 = vrot.slane %v3563, 4
        %v3566 = vshll.u32 %v3362, 16
        %v3568 = vrot.slane %v3566, 5
        %v3569 = vsel %vm1773, %v3564, %v3568
        %v3570 = vshrl.u32 %v3362, 16
        %v3572 = vrot.slane %v3570, 4
        %v3573 = vor.u32 %v3572, %v3568
        %v3574 = vrot.slane %v3573, 4
        %v3576 = vshll.u32 %v3363, 16
        %v3578 = vrot.slane %v3576, 5
        %v3579 = vsel %vm1773, %v3574, %v3578
        %v3581 = vshrl.u32 %v3364, 16
        %v3583 = vrot.slane %v3581, 4
        %v3584 = vshll.u32 %v3364, 16
        %v3586 = vrot.slane %v3584, 5
        %v3587 = vor.u32 %v3583, %v3586
        %v3588 = vrot.slane %v3587, 4
        %v3590 = vshll.u32 %v3365, 16
        %v3592 = vrot.slane %v3590, 5
        %v3593 = vsel %vm1773, %v3588, %v3592
        %v3594 = vshrl.u32 %v3365, 16
        %v3596 = vrot.slane %v3594, 4
        %v3597 = vor.u32 %v3596, %v3592
        %v3598 = vrot.slane %v3597, 4
        %v3600 = vshll.u32 %v3366, 16
        %v3602 = vrot.slane %v3600, 5
        %v3603 = vsel %vm1773, %v3598, %v3602
        %v3605 = vshrl.u32 %v3367, 16
        %v3607 = vrot.slane %v3605, 4
        %v3608 = vshll.u32 %v3367, 16
        %v3610 = vrot.slane %v3608, 5
        %v3611 = vor.u32 %v3607, %v3610
        %v3612 = vrot.slane %v3611, 4
        %v3614 = vshll.u32 %v3368, 16
        %v3616 = vrot.slane %v3614, 5
        %v3617 = vsel %vm1773, %v3612, %v3616
        %v3618 = vshrl.u32 %v3368, 16
        %v3620 = vrot.slane %v3618, 4
        %v3621 = vor.u32 %v3620, %v3616
        %v3622 = vrot.slane %v3621, 4
        %v3624 = vshll.u32 %v3369, 16
        %v3626 = vrot.slane %v3624, 5
        %v3627 = vsel %vm1773, %v3622, %v3626
        %v3629 = vshrl.u32 %v3370, 16
        %v3631 = vrot.slane %v3629, 4
        %v3632 = vshll.u32 %v3370, 16
        %v3634 = vrot.slane %v3632, 5
        %v3635 = vor.u32 %v3631, %v3634
        %v3636 = vrot.slane %v3635, 4
        %v3638 = vshll.u32 %v3371, 16
        %v3640 = vrot.slane %v3638, 5
        %v3641 = vsel %vm1773, %v3636, %v3640
        %v3642 = vshrl.u32 %v3371, 16
        %v3644 = vrot.slane %v3642, 4
        %v3645 = vor.u32 %v3644, %v3640
        %v3646 = vrot.slane %v3645, 4
        %v3648 = vshll.u32 %v3372, 16
        %v3650 = vrot.slane %v3648, 5
        %v3651 = vsel %vm1773, %v3646, %v3650
        %v3653 = vshrl.u32 %v3373, 16
        %v3655 = vrot.slane %v3653, 4
        %v3656 = vshll.u32 %v3373, 16
        %v3658 = vrot.slane %v3656, 5
        %v3659 = vor.u32 %v3655, %v3658
        %v3660 = vrot.slane %v3659, 4
        %v3662 = vshll.u32 %v3374, 16
        %v3664 = vrot.slane %v3662, 5
        %v3665 = vsel %vm1773, %v3660, %v3664
        %v3666 = vshrl.u32 %v3374, 16
        %v3668 = vrot.slane %v3666, 4
        %v3669 = vor.u32 %v3668, %v3664
        %v3670 = vrot.slane %v3669, 4
        %v3672 = vshll.u32 %v3375, 16
        %v3674 = vrot.slane %v3672, 5
        %v3675 = vsel %vm1773, %v3670, %v3674
        %v3677 = vshrl.u32 %v3376, 16
        %v3679 = vrot.slane %v3677, 4
        %v3680 = vshll.u32 %v3376, 16
        %v3682 = vrot.slane %v3680, 5
        %v3683 = vor.u32 %v3679, %v3682
        %v3684 = vrot.slane %v3683, 4
        %v3686 = vshll.u32 %v3377, 16
        %v3688 = vrot.slane %v3686, 5
        %v3689 = vsel %vm1773, %v3684, %v3688
        %v3690 = vshrl.u32 %v3377, 16
        %v3692 = vrot.slane %v3690, 4
        %v3693 = vor.u32 %v3692, %v3688
        %v3694 = vrot.slane %v3693, 4
        %v3696 = vshll.u32 %v3378, 16
        %v3698 = vrot.slane %v3696, 5
        %v3699 = vsel %vm1773, %v3694, %v3698
        %v3701 = vshrl.u32 %v3379, 16
        %v3703 = vrot.slane %v3701, 4
        %v3704 = vshll.u32 %v3379, 16
        %v3706 = vrot.slane %v3704, 5
        %v3707 = vor.u32 %v3703, %v3706
        %v3708 = vrot.slane %v3707, 4
        %v3710 = vshll.u32 %v3380, 16
        %v3712 = vrot.slane %v3710, 5
        %v3713 = vsel %vm1773, %v3708, %v3712
        %v3714 = vshrl.u32 %v3380, 16
        %v3716 = vrot.slane %v3714, 4
        %v3717 = vor.u32 %v3716, %v3712
        %v3718 = vrot.slane %v3717, 4
        %v3720 = vshll.u32 %v3381, 16
        %v3722 = vrot.slane %v3720, 5
        %v3723 = vsel %vm1773, %v3718, %v3722
        %v3725 = vshrl.u32 %v3382, 16
        %v3727 = vrot.slane %v3725, 4
        %v3728 = vshll.u32 %v3382, 16
        %v3730 = vrot.slane %v3728, 5
        %v3731 = vor.u32 %v3727, %v3730
        %v3732 = vrot.slane %v3731, 4
        %v3734 = vshll.u32 %v3383, 16
        %v3736 = vrot.slane %v3734, 5
        %v3737 = vsel %vm1773, %v3732, %v3736
        %v3738 = vshrl.u32 %v3383, 16
        %v3740 = vrot.slane %v3738, 4
        %v3741 = vor.u32 %v3740, %v3736
        %v3742 = vrot.slane %v3741, 4
        %v3744 = vshll.u32 %v3384, 16
        %v3746 = vrot.slane %v3744, 5
        %v3747 = vsel %vm1773, %v3742, %v3746
        %v3749 = vshrl.u32 %v3385, 16
        %v3751 = vrot.slane %v3749, 4
        %v3752 = vshll.u32 %v3385, 16
        %v3754 = vrot.slane %v3752, 5
        %v3755 = vor.u32 %v3751, %v3754
        %v3756 = vrot.slane %v3755, 4
        %v3758 = vshll.u32 %v3386, 16
        %v3760 = vrot.slane %v3758, 5
        %v3761 = vsel %vm1773, %v3756, %v3760
        %v3762 = vshrl.u32 %v3386, 16
        %v3764 = vrot.slane %v3762, 4
        %v3765 = vor.u32 %v3764, %v3760
        %v3766 = vrot.slane %v3765, 4
        %v3768 = vshll.u32 %v3387, 16
        %v3770 = vrot.slane %v3768, 5
        %v3771 = vsel %vm1773, %v3766, %v3770
        %s3772 = scalar_lea.vmem [#allocation6], 320
        %v3773 = vld [vmem:[%s3772] sm:$0xf]
        %v3774 = vld [vmem:[%s3772 + $0x4] sm:$0xf]
        %v3775 = vld [vmem:[%s3772 + $0x8] sm:$0xf]
        %v3776 = vld [vmem:[%s3772 + $0xc] sm:$0xf]
        %v3777 = vld [vmem:[%s3772 + $0x10] sm:$0xf]
        %v3778 = vld [vmem:[%s3772 + $0x14] sm:$0xf]
        %v3779 = vld [vmem:[%s3772 + $0x18] sm:$0xf]
        %v3780 = vld [vmem:[%s3772 + $0x1c] sm:$0xf]
        %v3781 = vld [vmem:[%s3772 + $0x20] sm:$0xf]
        %v3782 = vld [vmem:[%s3772 + $0x24] sm:$0xf]
        %v3783 = vld [vmem:[%s3772 + $0x28] sm:$0xf]
        %v3784 = vld [vmem:[%s3772 + $0x2c] sm:$0xf]
        %v3785 = vld [vmem:[%s3772 + $0x30] sm:$0xf]
        %v3786 = vld [vmem:[%s3772 + $0x34] sm:$0xf]
        %v3787 = vld [vmem:[%s3772 + $0x38] sm:$0xf]
        %v3788 = vld [vmem:[%s3772 + $0x3c] sm:$0xf]
        %v3789 = vunpack.c.l.b16 %v3401
        %v3790 = vunpack.c.l.b16 %v3411
        %v3791 = vunpack.c.l.b16 %v3425
        %v3792 = vunpack.c.l.b16 %v3435
        %v3793 = vunpack.c.l.b16 %v3449
        %v3794 = vunpack.c.l.b16 %v3459
        %v3795 = vunpack.c.l.b16 %v3473
        %v3796 = vunpack.c.l.b16 %v3483
        %v3797 = vunpack.c.l.b16 %v3497
        %v3798 = vunpack.c.l.b16 %v3507
        %v3799 = vunpack.c.l.b16 %v3521
        %v3800 = vunpack.c.l.b16 %v3531
        %v3801 = vunpack.c.l.b16 %v3545
        %v3802 = vunpack.c.l.b16 %v3555
        %v3803 = vunpack.c.l.b16 %v3569
        %v3804 = vunpack.c.l.b16 %v3579
        %v3805 = vunpack.c.l.b16 %v3593
        %v3806 = vunpack.c.l.b16 %v3603
        %v3807 = vunpack.c.l.b16 %v3617
        %v3808 = vunpack.c.l.b16 %v3627
        %v3809 = vunpack.c.l.b16 %v3641
        %v3810 = vunpack.c.l.b16 %v3651
        %v3811 = vunpack.c.l.b16 %v3665
        %v3812 = vunpack.c.l.b16 %v3675
        %v3813 = vunpack.c.l.b16 %v3689
        %v3814 = vunpack.c.l.b16 %v3699
        %v3815 = vunpack.c.l.b16 %v3713
        %v3816 = vunpack.c.l.b16 %v3723
        %v3817 = vunpack.c.l.b16 %v3737
        %v3818 = vunpack.c.l.b16 %v3747
        %v3819 = vunpack.c.l.b16 %v3761
        %v3820 = vunpack.c.l.b16 %v3771
        %v3821 = vpack.c.b16 %v3790, %v3789
        %v3822 = vpack.c.b16 %v3792, %v3791
        %v3823 = vpack.c.b16 %v3794, %v3793
        %v3824 = vpack.c.b16 %v3796, %v3795
        %v3825 = vpack.c.b16 %v3798, %v3797
        %v3826 = vpack.c.b16 %v3800, %v3799
        %v3827 = vpack.c.b16 %v3802, %v3801
        %v3828 = vpack.c.b16 %v3804, %v3803
        %v3829 = vpack.c.b16 %v3806, %v3805
        %v3830 = vpack.c.b16 %v3808, %v3807
        %v3831 = vpack.c.b16 %v3810, %v3809
        %v3832 = vpack.c.b16 %v3812, %v3811
        %v3833 = vpack.c.b16 %v3814, %v3813
        %v3834 = vpack.c.b16 %v3816, %v3815
        %v3835 = vpack.c.b16 %v3818, %v3817
        %v3836 = vpack.c.b16 %v3820, %v3819
        %v3869 = vunpack.c.l.b16 %v3773
        %v3870 = vunpack.c.l.b16 %v3774
        %v3871 = vunpack.c.l.b16 %v3775
        %v3872 = vunpack.c.l.b16 %v3776
        %v3873 = vunpack.c.l.b16 %v3777
        %v3874 = vunpack.c.l.b16 %v3778
        %v3875 = vunpack.c.l.b16 %v3779
        %v3876 = vunpack.c.l.b16 %v3780
        %v3877 = vunpack.c.l.b16 %v3781
        %v3878 = vunpack.c.l.b16 %v3782
        %v3879 = vunpack.c.l.b16 %v3783
        %v3880 = vunpack.c.l.b16 %v3784
        %v3881 = vunpack.c.l.b16 %v3785
        %v3882 = vunpack.c.l.b16 %v3786
        %v3883 = vunpack.c.l.b16 %v3787
        %v3884 = vunpack.c.l.b16 %v3788
        %v3885 = vpack.c.b16 %v3870, %v3869
        %v3886 = vpack.c.b16 %v3872, %v3871
        %v3887 = vpack.c.b16 %v3874, %v3873
        %v3888 = vpack.c.b16 %v3876, %v3875
        %v3889 = vpack.c.b16 %v3878, %v3877
        %v3890 = vpack.c.b16 %v3880, %v3879
        %v3891 = vpack.c.b16 %v3882, %v3881
        %v3892 = vpack.c.b16 %v3884, %v3883
        %3901 = vmatpush.bf16.msra.mxu0 %v3892
        %3902 = vmatpush.bf16.msra.mxu0 %v3891
        %3903 = vmatpush.bf16.msra.mxu0 %v3890
        %3904 = vmatpush.bf16.msra.mxu0 %v3889
        %3905 = vmatpush.bf16.msra.mxu0 %v3888
        %3906 = vmatpush.bf16.msra.mxu0 %v3887
        %3907 = vmatpush.bf16.msra.mxu0 %v3886
        %3908 = vmatpush.bf16.msra.mxu0 %v3885
        %3909 = vmatmul.bf16.gmra.mxu0 %v3821
        %v3910 = vpop.f32.mrf.mxu0
        %v3911 = vadd.f32 0.0, %v3910
        %v3912 = vpop.f32.mrf.mxu0
        %v3913 = vadd.f32 0.0, %v3912
        %3914 = vmatmul.bf16.gmra.mxu0 %v3822
        %v3915 = vpop.f32.mrf.mxu0
        %v3916 = vadd.f32 0.0, %v3915
        %v3917 = vpop.f32.mrf.mxu0
        %v3918 = vadd.f32 0.0, %v3917
        %3919 = vmatmul.bf16.gmra.mxu0 %v3823
        %v3920 = vpop.f32.mrf.mxu0
        %v3921 = vadd.f32 0.0, %v3920
        %v3922 = vpop.f32.mrf.mxu0
        %v3923 = vadd.f32 0.0, %v3922
        %3924 = vmatmul.bf16.gmra.mxu0 %v3824
        %v3925 = vpop.f32.mrf.mxu0
        %v3926 = vadd.f32 0.0, %v3925
        %v3927 = vpop.f32.mrf.mxu0
        %v3928 = vadd.f32 0.0, %v3927
        %3929 = vmatmul.bf16.gmra.mxu0 %v3825
        %v3930 = vpop.f32.mrf.mxu0
        %v3931 = vadd.f32 0.0, %v3930
        %v3932 = vpop.f32.mrf.mxu0
        %v3933 = vadd.f32 0.0, %v3932
        %3934 = vmatmul.bf16.gmra.mxu0 %v3826
        %v3935 = vpop.f32.mrf.mxu0
        %v3936 = vadd.f32 0.0, %v3935
        %v3937 = vpop.f32.mrf.mxu0
        %v3938 = vadd.f32 0.0, %v3937
        %3939 = vmatmul.bf16.gmra.mxu0 %v3827
        %v3940 = vpop.f32.mrf.mxu0
        %v3941 = vadd.f32 0.0, %v3940
        %v3942 = vpop.f32.mrf.mxu0
        %v3943 = vadd.f32 0.0, %v3942
        %3944 = vmatmul.bf16.gmra.mxu0 %v3828
        %v3945 = vpop.f32.mrf.mxu0
        %v3946 = vadd.f32 0.0, %v3945
        %v3947 = vpop.f32.mrf.mxu0
        %v3948 = vadd.f32 0.0, %v3947
        %3949 = vmatmul.bf16.gmra.mxu0 %v3829
        %v3950 = vpop.f32.mrf.mxu0
        %v3951 = vadd.f32 0.0, %v3950
        %v3952 = vpop.f32.mrf.mxu0
        %v3953 = vadd.f32 0.0, %v3952
        %3954 = vmatmul.bf16.gmra.mxu0 %v3830
        %v3955 = vpop.f32.mrf.mxu0
        %v3956 = vadd.f32 0.0, %v3955
        %v3957 = vpop.f32.mrf.mxu0
        %v3958 = vadd.f32 0.0, %v3957
        %3959 = vmatmul.bf16.gmra.mxu0 %v3831
        %v3960 = vpop.f32.mrf.mxu0
        %v3961 = vadd.f32 0.0, %v3960
        %v3962 = vpop.f32.mrf.mxu0
        %v3963 = vadd.f32 0.0, %v3962
        %3964 = vmatmul.bf16.gmra.mxu0 %v3832
        %v3965 = vpop.f32.mrf.mxu0
        %v3966 = vadd.f32 0.0, %v3965
        %v3967 = vpop.f32.mrf.mxu0
        %v3968 = vadd.f32 0.0, %v3967
        %3969 = vmatmul.bf16.gmra.mxu0 %v3833
        %v3970 = vpop.f32.mrf.mxu0
        %v3971 = vadd.f32 0.0, %v3970
        %v3972 = vpop.f32.mrf.mxu0
        %v3973 = vadd.f32 0.0, %v3972
        %3974 = vmatmul.bf16.gmra.mxu0 %v3834
        %v3975 = vpop.f32.mrf.mxu0
        %v3976 = vadd.f32 0.0, %v3975
        %v3977 = vpop.f32.mrf.mxu0
        %v3978 = vadd.f32 0.0, %v3977
        %3979 = vmatmul.bf16.gmra.mxu0 %v3835
        %v3980 = vpop.f32.mrf.mxu0
        %v3981 = vadd.f32 0.0, %v3980
        %v3982 = vpop.f32.mrf.mxu0
        %v3983 = vadd.f32 0.0, %v3982
        %3984 = vmatmul.bf16.gmra.mxu0 %v3836
        %v3985 = vpop.f32.mrf.mxu0
        %v3986 = vadd.f32 0.0, %v3985
        %v3987 = vpop.f32.mrf.mxu0
        %v3988 = vadd.f32 0.0, %v3987
        %3989 = vdwg.mxu0
        %v3990 = vadd.f32 %v3308, %v3911
        %v3991 = vadd.f32 %v3309, %v3913
        %v3992 = vadd.f32 %v3310, %v3916
        %v3993 = vadd.f32 %v3311, %v3918
        %v3994 = vadd.f32 %v3312, %v3921
        %v3995 = vadd.f32 %v3313, %v3923
        %v3996 = vadd.f32 %v3314, %v3926
        %v3997 = vadd.f32 %v3315, %v3928
        %v3998 = vadd.f32 %v3316, %v3931
        %v3999 = vadd.f32 %v3317, %v3933
        %v4000 = vadd.f32 %v3318, %v3936
        %v4001 = vadd.f32 %v3319, %v3938
        %v4002 = vadd.f32 %v3320, %v3941
        %v4003 = vadd.f32 %v3321, %v3943
        %v4004 = vadd.f32 %v3322, %v3946
        %v4005 = vadd.f32 %v3323, %v3948
        %v4006 = vadd.f32 %v3324, %v3951
        %v4007 = vadd.f32 %v3325, %v3953
        %v4008 = vadd.f32 %v3326, %v3956
        %v4009 = vadd.f32 %v3327, %v3958
        %v4010 = vadd.f32 %v3328, %v3961
        %v4011 = vadd.f32 %v3329, %v3963
        %v4012 = vadd.f32 %v3330, %v3966
        %v4013 = vadd.f32 %v3331, %v3968
        %v4014 = vadd.f32 %v3332, %v3971
        %v4015 = vadd.f32 %v3333, %v3973
        %v4016 = vadd.f32 %v3334, %v3976
        %v4017 = vadd.f32 %v3335, %v3978
        %v4018 = vadd.f32 %v3336, %v3981
        %v4019 = vadd.f32 %v3337, %v3983
        %v4020 = vadd.f32 %v3338, %v3986
        %v4021 = vadd.f32 %v3339, %v3988
        %s4022 = scalar_lea.vmem [#allocation2], 32
        %v4023 = vld [vmem:[%s4022] sm:$0x8]
        %v4024 = vld [vmem:[%s4022 + $0x4] sm:$0xf]
        %v4025 = vld [vmem:[%s4022 + $0x8] sm:$0xf]
        %v4026 = vld [vmem:[%s4022 + $0x10] sm:$0x8]
        %v4027 = vld [vmem:[%s4022 + $0x14] sm:$0xf]
        %v4028 = vld [vmem:[%s4022 + $0x18] sm:$0xf]
        %v4029 = vld [vmem:[%s4022 + $0x20] sm:$0x8]
        %v4030 = vld [vmem:[%s4022 + $0x24] sm:$0xf]
        %v4031 = vld [vmem:[%s4022 + $0x28] sm:$0xf]
        %v4032 = vld [vmem:[%s4022 + $0x30] sm:$0x8]
        %v4033 = vld [vmem:[%s4022 + $0x34] sm:$0xf]
        %v4034 = vld [vmem:[%s4022 + $0x38] sm:$0xf]
        %v4035 = vld [vmem:[%s4022 + $0x40] sm:$0x8]
        %v4036 = vld [vmem:[%s4022 + $0x44] sm:$0xf]
        %v4037 = vld [vmem:[%s4022 + $0x48] sm:$0xf]
        %v4038 = vld [vmem:[%s4022 + $0x50] sm:$0x8]
        %v4039 = vld [vmem:[%s4022 + $0x54] sm:$0xf]
        %v4040 = vld [vmem:[%s4022 + $0x58] sm:$0xf]
        %v4041 = vld [vmem:[%s4022 + $0x60] sm:$0x8]
        %v4042 = vld [vmem:[%s4022 + $0x64] sm:$0xf]
        %v4043 = vld [vmem:[%s4022 + $0x68] sm:$0xf]
        %v4044 = vld [vmem:[%s4022 + $0x70] sm:$0x8]
        %v4045 = vld [vmem:[%s4022 + $0x74] sm:$0xf]
        %v4046 = vld [vmem:[%s4022 + $0x78] sm:$0xf]
        %v4047 = vld [vmem:[%s4022 + $0x80] sm:$0x8]
        %v4048 = vld [vmem:[%s4022 + $0x84] sm:$0xf]
        %v4049 = vld [vmem:[%s4022 + $0x88] sm:$0xf]
        %v4050 = vld [vmem:[%s4022 + $0x90] sm:$0x8]
        %v4051 = vld [vmem:[%s4022 + $0x94] sm:$0xf]
        %v4052 = vld [vmem:[%s4022 + $0x98] sm:$0xf]
        %v4053 = vld [vmem:[%s4022 + $0xa0] sm:$0x8]
        %v4054 = vld [vmem:[%s4022 + $0xa4] sm:$0xf]
        %v4055 = vld [vmem:[%s4022 + $0xa8] sm:$0xf]
        %v4056 = vld [vmem:[%s4022 + $0xb0] sm:$0x8]
        %v4057 = vld [vmem:[%s4022 + $0xb4] sm:$0xf]
        %v4058 = vld [vmem:[%s4022 + $0xb8] sm:$0xf]
        %v4059 = vld [vmem:[%s4022 + $0xc0] sm:$0x8]
        %v4060 = vld [vmem:[%s4022 + $0xc4] sm:$0xf]
        %v4061 = vld [vmem:[%s4022 + $0xc8] sm:$0xf]
        %v4062 = vld [vmem:[%s4022 + $0xd0] sm:$0x8]
        %v4063 = vld [vmem:[%s4022 + $0xd4] sm:$0xf]
        %v4064 = vld [vmem:[%s4022 + $0xd8] sm:$0xf]
        %v4065 = vld [vmem:[%s4022 + $0xe0] sm:$0x8]
        %v4066 = vld [vmem:[%s4022 + $0xe4] sm:$0xf]
        %v4067 = vld [vmem:[%s4022 + $0xe8] sm:$0xf]
        %v4068 = vld [vmem:[%s4022 + $0xf0] sm:$0x8]
        %v4069 = vld [vmem:[%s4022 + $0xf4] sm:$0xf]
        %v4070 = vld [vmem:[%s4022 + $0xf8] sm:$0xf]
        %v4072 = vshrl.u32 %v4023, 16
        %v4074 = vrot.slane %v4072, 7
        %v4075 = vrot.slane %v4074, 4
        %v4077 = vshrl.u32 %v4024, 16
        %v4079 = vrot.slane %v4077, 7
        %v4080 = vshll.u32 %v4024, 16
        %v4082 = vor.u32 %v4079, %v4080
        %v4083 = vsel %vm903, %v4075, %v4082
        %v4084 = vrot.slane %v4079, 4
        %v4086 = vshrl.u32 %v4025, 16
        %v4088 = vrot.slane %v4086, 7
        %v4089 = vshll.u32 %v4025, 16
        %v4091 = vor.u32 %v4088, %v4089
        %v4092 = vsel %vm903, %v4084, %v4091
        %v4094 = vshrl.u32 %v4026, 16
        %v4096 = vrot.slane %v4094, 7
        %v4097 = vrot.slane %v4096, 4
        %v4099 = vshrl.u32 %v4027, 16
        %v4101 = vrot.slane %v4099, 7
        %v4102 = vshll.u32 %v4027, 16
        %v4104 = vor.u32 %v4101, %v4102
        %v4105 = vsel %vm903, %v4097, %v4104
        %v4106 = vrot.slane %v4101, 4
        %v4108 = vshrl.u32 %v4028, 16
        %v4110 = vrot.slane %v4108, 7
        %v4111 = vshll.u32 %v4028, 16
        %v4113 = vor.u32 %v4110, %v4111
        %v4114 = vsel %vm903, %v4106, %v4113
        %v4116 = vshrl.u32 %v4029, 16
        %v4118 = vrot.slane %v4116, 7
        %v4119 = vrot.slane %v4118, 4
        %v4121 = vshrl.u32 %v4030, 16
        %v4123 = vrot.slane %v4121, 7
        %v4124 = vshll.u32 %v4030, 16
        %v4126 = vor.u32 %v4123, %v4124
        %v4127 = vsel %vm903, %v4119, %v4126
        %v4128 = vrot.slane %v4123, 4
        %v4130 = vshrl.u32 %v4031, 16
        %v4132 = vrot.slane %v4130, 7
        %v4133 = vshll.u32 %v4031, 16
        %v4135 = vor.u32 %v4132, %v4133
        %v4136 = vsel %vm903, %v4128, %v4135
        %v4138 = vshrl.u32 %v4032, 16
        %v4140 = vrot.slane %v4138, 7
        %v4141 = vrot.slane %v4140, 4
        %v4143 = vshrl.u32 %v4033, 16
        %v4145 = vrot.slane %v4143, 7
        %v4146 = vshll.u32 %v4033, 16
        %v4148 = vor.u32 %v4145, %v4146
        %v4149 = vsel %vm903, %v4141, %v4148
        %v4150 = vrot.slane %v4145, 4
        %v4152 = vshrl.u32 %v4034, 16
        %v4154 = vrot.slane %v4152, 7
        %v4155 = vshll.u32 %v4034, 16
        %v4157 = vor.u32 %v4154, %v4155
        %v4158 = vsel %vm903, %v4150, %v4157
        %v4160 = vshrl.u32 %v4035, 16
        %v4162 = vrot.slane %v4160, 7
        %v4163 = vrot.slane %v4162, 4
        %v4165 = vshrl.u32 %v4036, 16
        %v4167 = vrot.slane %v4165, 7
        %v4168 = vshll.u32 %v4036, 16
        %v4170 = vor.u32 %v4167, %v4168
        %v4171 = vsel %vm903, %v4163, %v4170
        %v4172 = vrot.slane %v4167, 4
        %v4174 = vshrl.u32 %v4037, 16
        %v4176 = vrot.slane %v4174, 7
        %v4177 = vshll.u32 %v4037, 16
        %v4179 = vor.u32 %v4176, %v4177
        %v4180 = vsel %vm903, %v4172, %v4179
        %v4182 = vshrl.u32 %v4038, 16
        %v4184 = vrot.slane %v4182, 7
        %v4185 = vrot.slane %v4184, 4
        %v4187 = vshrl.u32 %v4039, 16
        %v4189 = vrot.slane %v4187, 7
        %v4190 = vshll.u32 %v4039, 16
        %v4192 = vor.u32 %v4189, %v4190
        %v4193 = vsel %vm903, %v4185, %v4192
        %v4194 = vrot.slane %v4189, 4
        %v4196 = vshrl.u32 %v4040, 16
        %v4198 = vrot.slane %v4196, 7
        %v4199 = vshll.u32 %v4040, 16
        %v4201 = vor.u32 %v4198, %v4199
        %v4202 = vsel %vm903, %v4194, %v4201
        %v4204 = vshrl.u32 %v4041, 16
        %v4206 = vrot.slane %v4204, 7
        %v4207 = vrot.slane %v4206, 4
        %v4209 = vshrl.u32 %v4042, 16
        %v4211 = vrot.slane %v4209, 7
        %v4212 = vshll.u32 %v4042, 16
        %v4214 = vor.u32 %v4211, %v4212
        %v4215 = vsel %vm903, %v4207, %v4214
        %v4216 = vrot.slane %v4211, 4
        %v4218 = vshrl.u32 %v4043, 16
        %v4220 = vrot.slane %v4218, 7
        %v4221 = vshll.u32 %v4043, 16
        %v4223 = vor.u32 %v4220, %v4221
        %v4224 = vsel %vm903, %v4216, %v4223
        %v4226 = vshrl.u32 %v4044, 16
        %v4228 = vrot.slane %v4226, 7
        %v4229 = vrot.slane %v4228, 4
        %v4231 = vshrl.u32 %v4045, 16
        %v4233 = vrot.slane %v4231, 7
        %v4234 = vshll.u32 %v4045, 16
        %v4236 = vor.u32 %v4233, %v4234
        %v4237 = vsel %vm903, %v4229, %v4236
        %v4238 = vrot.slane %v4233, 4
        %v4240 = vshrl.u32 %v4046, 16
        %v4242 = vrot.slane %v4240, 7
        %v4243 = vshll.u32 %v4046, 16
        %v4245 = vor.u32 %v4242, %v4243
        %v4246 = vsel %vm903, %v4238, %v4245
        %v4248 = vshrl.u32 %v4047, 16
        %v4250 = vrot.slane %v4248, 7
        %v4251 = vrot.slane %v4250, 4
        %v4253 = vshrl.u32 %v4048, 16
        %v4255 = vrot.slane %v4253, 7
        %v4256 = vshll.u32 %v4048, 16
        %v4258 = vor.u32 %v4255, %v4256
        %v4259 = vsel %vm903, %v4251, %v4258
        %v4260 = vrot.slane %v4255, 4
        %v4262 = vshrl.u32 %v4049, 16
        %v4264 = vrot.slane %v4262, 7
        %v4265 = vshll.u32 %v4049, 16
        %v4267 = vor.u32 %v4264, %v4265
        %v4268 = vsel %vm903, %v4260, %v4267
        %v4270 = vshrl.u32 %v4050, 16
        %v4272 = vrot.slane %v4270, 7
        %v4273 = vrot.slane %v4272, 4
        %v4275 = vshrl.u32 %v4051, 16
        %v4277 = vrot.slane %v4275, 7
        %v4278 = vshll.u32 %v4051, 16
        %v4280 = vor.u32 %v4277, %v4278
        %v4281 = vsel %vm903, %v4273, %v4280
        %v4282 = vrot.slane %v4277, 4
        %v4284 = vshrl.u32 %v4052, 16
        %v4286 = vrot.slane %v4284, 7
        %v4287 = vshll.u32 %v4052, 16
        %v4289 = vor.u32 %v4286, %v4287
        %v4290 = vsel %vm903, %v4282, %v4289
        %v4292 = vshrl.u32 %v4053, 16
        %v4294 = vrot.slane %v4292, 7
        %v4295 = vrot.slane %v4294, 4
        %v4297 = vshrl.u32 %v4054, 16
        %v4299 = vrot.slane %v4297, 7
        %v4300 = vshll.u32 %v4054, 16
        %v4302 = vor.u32 %v4299, %v4300
        %v4303 = vsel %vm903, %v4295, %v4302
        %v4304 = vrot.slane %v4299, 4
        %v4306 = vshrl.u32 %v4055, 16
        %v4308 = vrot.slane %v4306, 7
        %v4309 = vshll.u32 %v4055, 16
        %v4311 = vor.u32 %v4308, %v4309
        %v4312 = vsel %vm903, %v4304, %v4311
        %v4314 = vshrl.u32 %v4056, 16
        %v4316 = vrot.slane %v4314, 7
        %v4317 = vrot.slane %v4316, 4
        %v4319 = vshrl.u32 %v4057, 16
        %v4321 = vrot.slane %v4319, 7
        %v4322 = vshll.u32 %v4057, 16
        %v4324 = vor.u32 %v4321, %v4322
        %v4325 = vsel %vm903, %v4317, %v4324
        %v4326 = vrot.slane %v4321, 4
        %v4328 = vshrl.u32 %v4058, 16
        %v4330 = vrot.slane %v4328, 7
        %v4331 = vshll.u32 %v4058, 16
        %v4333 = vor.u32 %v4330, %v4331
        %v4334 = vsel %vm903, %v4326, %v4333
        %v4336 = vshrl.u32 %v4059, 16
        %v4338 = vrot.slane %v4336, 7
        %v4339 = vrot.slane %v4338, 4
        %v4341 = vshrl.u32 %v4060, 16
        %v4343 = vrot.slane %v4341, 7
        %v4344 = vshll.u32 %v4060, 16
        %v4346 = vor.u32 %v4343, %v4344
        %v4347 = vsel %vm903, %v4339, %v4346
        %v4348 = vrot.slane %v4343, 4
        %v4350 = vshrl.u32 %v4061, 16
        %v4352 = vrot.slane %v4350, 7
        %v4353 = vshll.u32 %v4061, 16
        %v4355 = vor.u32 %v4352, %v4353
        %v4356 = vsel %vm903, %v4348, %v4355
        %v4358 = vshrl.u32 %v4062, 16
        %v4360 = vrot.slane %v4358, 7
        %v4361 = vrot.slane %v4360, 4
        %v4363 = vshrl.u32 %v4063, 16
        %v4365 = vrot.slane %v4363, 7
        %v4366 = vshll.u32 %v4063, 16
        %v4368 = vor.u32 %v4365, %v4366
        %v4369 = vsel %vm903, %v4361, %v4368
        %v4370 = vrot.slane %v4365, 4
        %v4372 = vshrl.u32 %v4064, 16
        %v4374 = vrot.slane %v4372, 7
        %v4375 = vshll.u32 %v4064, 16
        %v4377 = vor.u32 %v4374, %v4375
        %v4378 = vsel %vm903, %v4370, %v4377
        %v4380 = vshrl.u32 %v4065, 16
        %v4382 = vrot.slane %v4380, 7
        %v4383 = vrot.slane %v4382, 4
        %v4385 = vshrl.u32 %v4066, 16
        %v4387 = vrot.slane %v4385, 7
        %v4388 = vshll.u32 %v4066, 16
        %v4390 = vor.u32 %v4387, %v4388
        %v4391 = vsel %vm903, %v4383, %v4390
        %v4392 = vrot.slane %v4387, 4
        %v4394 = vshrl.u32 %v4067, 16
        %v4396 = vrot.slane %v4394, 7
        %v4397 = vshll.u32 %v4067, 16
        %v4399 = vor.u32 %v4396, %v4397
        %v4400 = vsel %vm903, %v4392, %v4399
        %v4402 = vshrl.u32 %v4068, 16
        %v4404 = vrot.slane %v4402, 7
        %v4405 = vrot.slane %v4404, 4
        %v4407 = vshrl.u32 %v4069, 16
        %v4409 = vrot.slane %v4407, 7
        %v4410 = vshll.u32 %v4069, 16
        %v4412 = vor.u32 %v4409, %v4410
        %v4413 = vsel %vm903, %v4405, %v4412
        %v4414 = vrot.slane %v4409, 4
        %v4416 = vshrl.u32 %v4070, 16
        %v4418 = vrot.slane %v4416, 7
        %v4419 = vshll.u32 %v4070, 16
        %v4421 = vor.u32 %v4418, %v4419
        %v4422 = vsel %vm903, %v4414, %v4421
        %s4423 = scalar_lea.vmem [#allocation6], 384
        %v4424 = vld [vmem:[%s4423] sm:$0xf]
        %v4425 = vld [vmem:[%s4423 + $0x4] sm:$0xf]
        %v4426 = vld [vmem:[%s4423 + $0x8] sm:$0xf]
        %v4427 = vld [vmem:[%s4423 + $0xc] sm:$0xf]
        %v4428 = vld [vmem:[%s4423 + $0x10] sm:$0xf]
        %v4429 = vld [vmem:[%s4423 + $0x14] sm:$0xf]
        %v4430 = vld [vmem:[%s4423 + $0x18] sm:$0xf]
        %v4431 = vld [vmem:[%s4423 + $0x1c] sm:$0xf]
        %v4432 = vld [vmem:[%s4423 + $0x20] sm:$0xf]
        %v4433 = vld [vmem:[%s4423 + $0x24] sm:$0xf]
        %v4434 = vld [vmem:[%s4423 + $0x28] sm:$0xf]
        %v4435 = vld [vmem:[%s4423 + $0x2c] sm:$0xf]
        %v4436 = vld [vmem:[%s4423 + $0x30] sm:$0xf]
        %v4437 = vld [vmem:[%s4423 + $0x34] sm:$0xf]
        %v4438 = vld [vmem:[%s4423 + $0x38] sm:$0xf]
        %v4439 = vld [vmem:[%s4423 + $0x3c] sm:$0xf]
        %v4440 = vunpack.c.l.b16 %v4083
        %v4441 = vunpack.c.l.b16 %v4092
        %v4442 = vunpack.c.l.b16 %v4105
        %v4443 = vunpack.c.l.b16 %v4114
        %v4444 = vunpack.c.l.b16 %v4127
        %v4445 = vunpack.c.l.b16 %v4136
        %v4446 = vunpack.c.l.b16 %v4149
        %v4447 = vunpack.c.l.b16 %v4158
        %v4448 = vunpack.c.l.b16 %v4171
        %v4449 = vunpack.c.l.b16 %v4180
        %v4450 = vunpack.c.l.b16 %v4193
        %v4451 = vunpack.c.l.b16 %v4202
        %v4452 = vunpack.c.l.b16 %v4215
        %v4453 = vunpack.c.l.b16 %v4224
        %v4454 = vunpack.c.l.b16 %v4237
        %v4455 = vunpack.c.l.b16 %v4246
        %v4456 = vunpack.c.l.b16 %v4259
        %v4457 = vunpack.c.l.b16 %v4268
        %v4458 = vunpack.c.l.b16 %v4281
        %v4459 = vunpack.c.l.b16 %v4290
        %v4460 = vunpack.c.l.b16 %v4303
        %v4461 = vunpack.c.l.b16 %v4312
        %v4462 = vunpack.c.l.b16 %v4325
        %v4463 = vunpack.c.l.b16 %v4334
        %v4464 = vunpack.c.l.b16 %v4347
        %v4465 = vunpack.c.l.b16 %v4356
        %v4466 = vunpack.c.l.b16 %v4369
        %v4467 = vunpack.c.l.b16 %v4378
        %v4468 = vunpack.c.l.b16 %v4391
        %v4469 = vunpack.c.l.b16 %v4400
        %v4470 = vunpack.c.l.b16 %v4413
        %v4471 = vunpack.c.l.b16 %v4422
        %v4472 = vpack.c.b16 %v4441, %v4440
        %v4473 = vpack.c.b16 %v4443, %v4442
        %v4474 = vpack.c.b16 %v4445, %v4444
        %v4475 = vpack.c.b16 %v4447, %v4446
        %v4476 = vpack.c.b16 %v4449, %v4448
        %v4477 = vpack.c.b16 %v4451, %v4450
        %v4478 = vpack.c.b16 %v4453, %v4452
        %v4479 = vpack.c.b16 %v4455, %v4454
        %v4480 = vpack.c.b16 %v4457, %v4456
        %v4481 = vpack.c.b16 %v4459, %v4458
        %v4482 = vpack.c.b16 %v4461, %v4460
        %v4483 = vpack.c.b16 %v4463, %v4462
        %v4484 = vpack.c.b16 %v4465, %v4464
        %v4485 = vpack.c.b16 %v4467, %v4466
        %v4486 = vpack.c.b16 %v4469, %v4468
        %v4487 = vpack.c.b16 %v4471, %v4470
        %v4520 = vunpack.c.l.b16 %v4424
        %v4521 = vunpack.c.l.b16 %v4425
        %v4522 = vunpack.c.l.b16 %v4426
        %v4523 = vunpack.c.l.b16 %v4427
        %v4524 = vunpack.c.l.b16 %v4428
        %v4525 = vunpack.c.l.b16 %v4429
        %v4526 = vunpack.c.l.b16 %v4430
        %v4527 = vunpack.c.l.b16 %v4431
        %v4528 = vunpack.c.l.b16 %v4432
        %v4529 = vunpack.c.l.b16 %v4433
        %v4530 = vunpack.c.l.b16 %v4434
        %v4531 = vunpack.c.l.b16 %v4435
        %v4532 = vunpack.c.l.b16 %v4436
        %v4533 = vunpack.c.l.b16 %v4437
        %v4534 = vunpack.c.l.b16 %v4438
        %v4535 = vunpack.c.l.b16 %v4439
        %v4536 = vpack.c.b16 %v4521, %v4520
        %v4537 = vpack.c.b16 %v4523, %v4522
        %v4538 = vpack.c.b16 %v4525, %v4524
        %v4539 = vpack.c.b16 %v4527, %v4526
        %v4540 = vpack.c.b16 %v4529, %v4528
        %v4541 = vpack.c.b16 %v4531, %v4530
        %v4542 = vpack.c.b16 %v4533, %v4532
        %v4543 = vpack.c.b16 %v4535, %v4534
        %4552 = vmatpush.bf16.msra.mxu0 %v4543
        %4553 = vmatpush.bf16.msra.mxu0 %v4542
        %4554 = vmatpush.bf16.msra.mxu0 %v4541
        %4555 = vmatpush.bf16.msra.mxu0 %v4540
        %4556 = vmatpush.bf16.msra.mxu0 %v4539
        %4557 = vmatpush.bf16.msra.mxu0 %v4538
        %4558 = vmatpush.bf16.msra.mxu0 %v4537
        %4559 = vmatpush.bf16.msra.mxu0 %v4536
        %4560 = vmatmul.bf16.gmra.mxu0 %v4472
        %v4561 = vpop.f32.mrf.mxu0
        %v4562 = vadd.f32 0.0, %v4561
        %v4563 = vpop.f32.mrf.mxu0
        %v4564 = vadd.f32 0.0, %v4563
        %4565 = vmatmul.bf16.gmra.mxu0 %v4473
        %v4566 = vpop.f32.mrf.mxu0
        %v4567 = vadd.f32 0.0, %v4566
        %v4568 = vpop.f32.mrf.mxu0
        %v4569 = vadd.f32 0.0, %v4568
        %4570 = vmatmul.bf16.gmra.mxu0 %v4474
        %v4571 = vpop.f32.mrf.mxu0
        %v4572 = vadd.f32 0.0, %v4571
        %v4573 = vpop.f32.mrf.mxu0
        %v4574 = vadd.f32 0.0, %v4573
        %4575 = vmatmul.bf16.gmra.mxu0 %v4475
        %v4576 = vpop.f32.mrf.mxu0
        %v4577 = vadd.f32 0.0, %v4576
        %v4578 = vpop.f32.mrf.mxu0
        %v4579 = vadd.f32 0.0, %v4578
        %4580 = vmatmul.bf16.gmra.mxu0 %v4476
        %v4581 = vpop.f32.mrf.mxu0
        %v4582 = vadd.f32 0.0, %v4581
        %v4583 = vpop.f32.mrf.mxu0
        %v4584 = vadd.f32 0.0, %v4583
        %4585 = vmatmul.bf16.gmra.mxu0 %v4477
        %v4586 = vpop.f32.mrf.mxu0
        %v4587 = vadd.f32 0.0, %v4586
        %v4588 = vpop.f32.mrf.mxu0
        %v4589 = vadd.f32 0.0, %v4588
        %4590 = vmatmul.bf16.gmra.mxu0 %v4478
        %v4591 = vpop.f32.mrf.mxu0
        %v4592 = vadd.f32 0.0, %v4591
        %v4593 = vpop.f32.mrf.mxu0
        %v4594 = vadd.f32 0.0, %v4593
        %4595 = vmatmul.bf16.gmra.mxu0 %v4479
        %v4596 = vpop.f32.mrf.mxu0
        %v4597 = vadd.f32 0.0, %v4596
        %v4598 = vpop.f32.mrf.mxu0
        %v4599 = vadd.f32 0.0, %v4598
        %4600 = vmatmul.bf16.gmra.mxu0 %v4480
        %v4601 = vpop.f32.mrf.mxu0
        %v4602 = vadd.f32 0.0, %v4601
        %v4603 = vpop.f32.mrf.mxu0
        %v4604 = vadd.f32 0.0, %v4603
        %4605 = vmatmul.bf16.gmra.mxu0 %v4481
        %v4606 = vpop.f32.mrf.mxu0
        %v4607 = vadd.f32 0.0, %v4606
        %v4608 = vpop.f32.mrf.mxu0
        %v4609 = vadd.f32 0.0, %v4608
        %4610 = vmatmul.bf16.gmra.mxu0 %v4482
        %v4611 = vpop.f32.mrf.mxu0
        %v4612 = vadd.f32 0.0, %v4611
        %v4613 = vpop.f32.mrf.mxu0
        %v4614 = vadd.f32 0.0, %v4613
        %4615 = vmatmul.bf16.gmra.mxu0 %v4483
        %v4616 = vpop.f32.mrf.mxu0
        %v4617 = vadd.f32 0.0, %v4616
        %v4618 = vpop.f32.mrf.mxu0
        %v4619 = vadd.f32 0.0, %v4618
        %4620 = vmatmul.bf16.gmra.mxu0 %v4484
        %v4621 = vpop.f32.mrf.mxu0
        %v4622 = vadd.f32 0.0, %v4621
        %v4623 = vpop.f32.mrf.mxu0
        %v4624 = vadd.f32 0.0, %v4623
        %4625 = vmatmul.bf16.gmra.mxu0 %v4485
        %v4626 = vpop.f32.mrf.mxu0
        %v4627 = vadd.f32 0.0, %v4626
        %v4628 = vpop.f32.mrf.mxu0
        %v4629 = vadd.f32 0.0, %v4628
        %4630 = vmatmul.bf16.gmra.mxu0 %v4486
        %v4631 = vpop.f32.mrf.mxu0
        %v4632 = vadd.f32 0.0, %v4631
        %v4633 = vpop.f32.mrf.mxu0
        %v4634 = vadd.f32 0.0, %v4633
        %4635 = vmatmul.bf16.gmra.mxu0 %v4487
        %v4636 = vpop.f32.mrf.mxu0
        %v4637 = vadd.f32 0.0, %v4636
        %v4638 = vpop.f32.mrf.mxu0
        %v4639 = vadd.f32 0.0, %v4638
        %4640 = vdwg.mxu0
        %v4641 = vadd.f32 %v3990, %v4562
        %v4642 = vadd.f32 %v3991, %v4564
        %v4643 = vadd.f32 %v3992, %v4567
        %v4644 = vadd.f32 %v3993, %v4569
        %v4645 = vadd.f32 %v3994, %v4572
        %v4646 = vadd.f32 %v3995, %v4574
        %v4647 = vadd.f32 %v3996, %v4577
        %v4648 = vadd.f32 %v3997, %v4579
        %v4649 = vadd.f32 %v3998, %v4582
        %v4650 = vadd.f32 %v3999, %v4584
        %v4651 = vadd.f32 %v4000, %v4587
        %v4652 = vadd.f32 %v4001, %v4589
        %v4653 = vadd.f32 %v4002, %v4592
        %v4654 = vadd.f32 %v4003, %v4594
        %v4655 = vadd.f32 %v4004, %v4597
        %v4656 = vadd.f32 %v4005, %v4599
        %v4657 = vadd.f32 %v4006, %v4602
        %v4658 = vadd.f32 %v4007, %v4604
        %v4659 = vadd.f32 %v4008, %v4607
        %v4660 = vadd.f32 %v4009, %v4609
        %v4661 = vadd.f32 %v4010, %v4612
        %v4662 = vadd.f32 %v4011, %v4614
        %v4663 = vadd.f32 %v4012, %v4617
        %v4664 = vadd.f32 %v4013, %v4619
        %v4665 = vadd.f32 %v4014, %v4622
        %v4666 = vadd.f32 %v4015, %v4624
        %v4667 = vadd.f32 %v4016, %v4627
        %v4668 = vadd.f32 %v4017, %v4629
        %v4669 = vadd.f32 %v4018, %v4632
        %v4670 = vadd.f32 %v4019, %v4634
        %v4671 = vadd.f32 %v4020, %v4637
        %v4672 = vadd.f32 %v4021, %v4639
        %s4673 = scalar_lea.vmem [#allocation6], 448
        %v4674 = vld [vmem:[%s4673] sm:$0xf]
        %v4675 = vld [vmem:[%s4673 + $0x4] sm:$0xf]
        %v4676 = vld [vmem:[%s4673 + $0x8] sm:$0xf]
        %v4677 = vld [vmem:[%s4673 + $0xc] sm:$0xf]
        %v4678 = vld [vmem:[%s4673 + $0x10] sm:$0xf]
        %v4679 = vld [vmem:[%s4673 + $0x14] sm:$0xf]
        %v4680 = vld [vmem:[%s4673 + $0x18] sm:$0xf]
        %v4681 = vld [vmem:[%s4673 + $0x1c] sm:$0xf]
        %v4682 = vld [vmem:[%s4673 + $0x20] sm:$0xf]
        %v4683 = vld [vmem:[%s4673 + $0x24] sm:$0xf]
        %v4684 = vld [vmem:[%s4673 + $0x28] sm:$0xf]
        %v4685 = vld [vmem:[%s4673 + $0x2c] sm:$0xf]
        %v4686 = vld [vmem:[%s4673 + $0x30] sm:$0xf]
        %v4687 = vld [vmem:[%s4673 + $0x34] sm:$0xf]
        %v4688 = vld [vmem:[%s4673 + $0x38] sm:$0xf]
        %v4689 = vld [vmem:[%s4673 + $0x3c] sm:$0xf]
        %v4722 = vunpack.c.l.b16 %v4024
        %v4723 = vunpack.c.l.b16 %v4025
        %v4724 = vunpack.c.l.b16 %v4027
        %v4725 = vunpack.c.l.b16 %v4028
        %v4726 = vunpack.c.l.b16 %v4030
        %v4727 = vunpack.c.l.b16 %v4031
        %v4728 = vunpack.c.l.b16 %v4033
        %v4729 = vunpack.c.l.b16 %v4034
        %v4730 = vunpack.c.l.b16 %v4036
        %v4731 = vunpack.c.l.b16 %v4037
        %v4732 = vunpack.c.l.b16 %v4039
        %v4733 = vunpack.c.l.b16 %v4040
        %v4734 = vunpack.c.l.b16 %v4042
        %v4735 = vunpack.c.l.b16 %v4043
        %v4736 = vunpack.c.l.b16 %v4045
        %v4737 = vunpack.c.l.b16 %v4046
        %v4738 = vunpack.c.l.b16 %v4048
        %v4739 = vunpack.c.l.b16 %v4049
        %v4740 = vunpack.c.l.b16 %v4051
        %v4741 = vunpack.c.l.b16 %v4052
        %v4742 = vunpack.c.l.b16 %v4054
        %v4743 = vunpack.c.l.b16 %v4055
        %v4744 = vunpack.c.l.b16 %v4057
        %v4745 = vunpack.c.l.b16 %v4058
        %v4746 = vunpack.c.l.b16 %v4060
        %v4747 = vunpack.c.l.b16 %v4061
        %v4748 = vunpack.c.l.b16 %v4063
        %v4749 = vunpack.c.l.b16 %v4064
        %v4750 = vunpack.c.l.b16 %v4066
        %v4751 = vunpack.c.l.b16 %v4067
        %v4752 = vunpack.c.l.b16 %v4069
        %v4753 = vunpack.c.l.b16 %v4070
        %v4754 = vpack.c.b16 %v4723, %v4722
        %v4755 = vpack.c.b16 %v4725, %v4724
        %v4756 = vpack.c.b16 %v4727, %v4726
        %v4757 = vpack.c.b16 %v4729, %v4728
        %v4758 = vpack.c.b16 %v4731, %v4730
        %v4759 = vpack.c.b16 %v4733, %v4732
        %v4760 = vpack.c.b16 %v4735, %v4734
        %v4761 = vpack.c.b16 %v4737, %v4736
        %v4762 = vpack.c.b16 %v4739, %v4738
        %v4763 = vpack.c.b16 %v4741, %v4740
        %v4764 = vpack.c.b16 %v4743, %v4742
        %v4765 = vpack.c.b16 %v4745, %v4744
        %v4766 = vpack.c.b16 %v4747, %v4746
        %v4767 = vpack.c.b16 %v4749, %v4748
        %v4768 = vpack.c.b16 %v4751, %v4750
        %v4769 = vpack.c.b16 %v4753, %v4752
        %v4802 = vunpack.c.l.b16 %v4674
        %v4803 = vunpack.c.l.b16 %v4675
        %v4804 = vunpack.c.l.b16 %v4676
        %v4805 = vunpack.c.l.b16 %v4677
        %v4806 = vunpack.c.l.b16 %v4678
        %v4807 = vunpack.c.l.b16 %v4679
        %v4808 = vunpack.c.l.b16 %v4680
        %v4809 = vunpack.c.l.b16 %v4681
        %v4810 = vunpack.c.l.b16 %v4682
        %v4811 = vunpack.c.l.b16 %v4683
        %v4812 = vunpack.c.l.b16 %v4684
        %v4813 = vunpack.c.l.b16 %v4685
        %v4814 = vunpack.c.l.b16 %v4686
        %v4815 = vunpack.c.l.b16 %v4687
        %v4816 = vunpack.c.l.b16 %v4688
        %v4817 = vunpack.c.l.b16 %v4689
        %v4818 = vpack.c.b16 %v4803, %v4802
        %v4819 = vpack.c.b16 %v4805, %v4804
        %v4820 = vpack.c.b16 %v4807, %v4806
        %v4821 = vpack.c.b16 %v4809, %v4808
        %v4822 = vpack.c.b16 %v4811, %v4810
        %v4823 = vpack.c.b16 %v4813, %v4812
        %v4824 = vpack.c.b16 %v4815, %v4814
        %v4825 = vpack.c.b16 %v4817, %v4816
        %4834 = vmatpush.bf16.msra.mxu0 %v4825
        %4835 = vmatpush.bf16.msra.mxu0 %v4824
        %4836 = vmatpush.bf16.msra.mxu0 %v4823
        %4837 = vmatpush.bf16.msra.mxu0 %v4822
        %4838 = vmatpush.bf16.msra.mxu0 %v4821
        %4839 = vmatpush.bf16.msra.mxu0 %v4820
        %4840 = vmatpush.bf16.msra.mxu0 %v4819
        %4841 = vmatpush.bf16.msra.mxu0 %v4818
        %4842 = vmatmul.bf16.gmra.mxu0 %v4754
        %v4843 = vpop.f32.mrf.mxu0
        %v4844 = vadd.f32 0.0, %v4843
        %v4845 = vpop.f32.mrf.mxu0
        %v4846 = vadd.f32 0.0, %v4845
        %4847 = vmatmul.bf16.gmra.mxu0 %v4755
        %v4848 = vpop.f32.mrf.mxu0
        %v4849 = vadd.f32 0.0, %v4848
        %v4850 = vpop.f32.mrf.mxu0
        %v4851 = vadd.f32 0.0, %v4850
        %4852 = vmatmul.bf16.gmra.mxu0 %v4756
        %v4853 = vpop.f32.mrf.mxu0
        %v4854 = vadd.f32 0.0, %v4853
        %v4855 = vpop.f32.mrf.mxu0
        %v4856 = vadd.f32 0.0, %v4855
        %4857 = vmatmul.bf16.gmra.mxu0 %v4757
        %v4858 = vpop.f32.mrf.mxu0
        %v4859 = vadd.f32 0.0, %v4858
        %v4860 = vpop.f32.mrf.mxu0
        %v4861 = vadd.f32 0.0, %v4860
        %4862 = vmatmul.bf16.gmra.mxu0 %v4758
        %v4863 = vpop.f32.mrf.mxu0
        %v4864 = vadd.f32 0.0, %v4863
        %v4865 = vpop.f32.mrf.mxu0
        %v4866 = vadd.f32 0.0, %v4865
        %4867 = vmatmul.bf16.gmra.mxu0 %v4759
        %v4868 = vpop.f32.mrf.mxu0
        %v4869 = vadd.f32 0.0, %v4868
        %v4870 = vpop.f32.mrf.mxu0
        %v4871 = vadd.f32 0.0, %v4870
        %4872 = vmatmul.bf16.gmra.mxu0 %v4760
        %v4873 = vpop.f32.mrf.mxu0
        %v4874 = vadd.f32 0.0, %v4873
        %v4875 = vpop.f32.mrf.mxu0
        %v4876 = vadd.f32 0.0, %v4875
        %4877 = vmatmul.bf16.gmra.mxu0 %v4761
        %v4878 = vpop.f32.mrf.mxu0
        %v4879 = vadd.f32 0.0, %v4878
        %v4880 = vpop.f32.mrf.mxu0
        %v4881 = vadd.f32 0.0, %v4880
        %4882 = vmatmul.bf16.gmra.mxu0 %v4762
        %v4883 = vpop.f32.mrf.mxu0
        %v4884 = vadd.f32 0.0, %v4883
        %v4885 = vpop.f32.mrf.mxu0
        %v4886 = vadd.f32 0.0, %v4885
        %4887 = vmatmul.bf16.gmra.mxu0 %v4763
        %v4888 = vpop.f32.mrf.mxu0
        %v4889 = vadd.f32 0.0, %v4888
        %v4890 = vpop.f32.mrf.mxu0
        %v4891 = vadd.f32 0.0, %v4890
        %4892 = vmatmul.bf16.gmra.mxu0 %v4764
        %v4893 = vpop.f32.mrf.mxu0
        %v4894 = vadd.f32 0.0, %v4893
        %v4895 = vpop.f32.mrf.mxu0
        %v4896 = vadd.f32 0.0, %v4895
        %4897 = vmatmul.bf16.gmra.mxu0 %v4765
        %v4898 = vpop.f32.mrf.mxu0
        %v4899 = vadd.f32 0.0, %v4898
        %v4900 = vpop.f32.mrf.mxu0
        %v4901 = vadd.f32 0.0, %v4900
        %4902 = vmatmul.bf16.gmra.mxu0 %v4766
        %v4903 = vpop.f32.mrf.mxu0
        %v4904 = vadd.f32 0.0, %v4903
        %v4905 = vpop.f32.mrf.mxu0
        %v4906 = vadd.f32 0.0, %v4905
        %4907 = vmatmul.bf16.gmra.mxu0 %v4767
        %v4908 = vpop.f32.mrf.mxu0
        %v4909 = vadd.f32 0.0, %v4908
        %v4910 = vpop.f32.mrf.mxu0
        %v4911 = vadd.f32 0.0, %v4910
        %4912 = vmatmul.bf16.gmra.mxu0 %v4768
        %v4913 = vpop.f32.mrf.mxu0
        %v4914 = vadd.f32 0.0, %v4913
        %v4915 = vpop.f32.mrf.mxu0
        %v4916 = vadd.f32 0.0, %v4915
        %4917 = vmatmul.bf16.gmra.mxu0 %v4769
        %v4918 = vpop.f32.mrf.mxu0
        %v4919 = vadd.f32 0.0, %v4918
        %v4920 = vpop.f32.mrf.mxu0
        %v4921 = vadd.f32 0.0, %v4920
        %4922 = vdwg.mxu0
        %v4923 = vadd.f32 %v4641, %v4844
        %v4924 = vadd.f32 %v4642, %v4846
        %v4925 = vadd.f32 %v4643, %v4849
        %v4926 = vadd.f32 %v4644, %v4851
        %v4927 = vadd.f32 %v4645, %v4854
        %v4928 = vadd.f32 %v4646, %v4856
        %v4929 = vadd.f32 %v4647, %v4859
        %v4930 = vadd.f32 %v4648, %v4861
        %v4931 = vadd.f32 %v4649, %v4864
        %v4932 = vadd.f32 %v4650, %v4866
        %v4933 = vadd.f32 %v4651, %v4869
        %v4934 = vadd.f32 %v4652, %v4871
        %v4935 = vadd.f32 %v4653, %v4874
        %v4936 = vadd.f32 %v4654, %v4876
        %v4937 = vadd.f32 %v4655, %v4879
        %v4938 = vadd.f32 %v4656, %v4881
        %v4939 = vadd.f32 %v4657, %v4884
        %v4940 = vadd.f32 %v4658, %v4886
        %v4941 = vadd.f32 %v4659, %v4889
        %v4942 = vadd.f32 %v4660, %v4891
        %v4943 = vadd.f32 %v4661, %v4894
        %v4944 = vadd.f32 %v4662, %v4896
        %v4945 = vadd.f32 %v4663, %v4899
        %v4946 = vadd.f32 %v4664, %v4901
        %v4947 = vadd.f32 %v4665, %v4904
        %v4948 = vadd.f32 %v4666, %v4906
        %v4949 = vadd.f32 %v4667, %v4909
        %v4950 = vadd.f32 %v4668, %v4911
        %v4951 = vadd.f32 %v4669, %v4914
        %v4952 = vadd.f32 %v4670, %v4916
        %v4953 = vadd.f32 %v4671, %v4919
        %v4954 = vadd.f32 %v4672, %v4921
        %v4955 = vld [vmem:[%s4022 + $0x4] sm:$0xf]
        %v4956 = vld [vmem:[%s4022 + $0x8] sm:$0xf]
        %v4957 = vld [vmem:[%s4022 + $0xc] sm:$0x1]
        %v4958 = vld [vmem:[%s4022 + $0x14] sm:$0xf]
        %v4959 = vld [vmem:[%s4022 + $0x18] sm:$0xf]
        %v4960 = vld [vmem:[%s4022 + $0x1c] sm:$0x1]
        %v4961 = vld [vmem:[%s4022 + $0x24] sm:$0xf]
        %v4962 = vld [vmem:[%s4022 + $0x28] sm:$0xf]
        %v4963 = vld [vmem:[%s4022 + $0x2c] sm:$0x1]
        %v4964 = vld [vmem:[%s4022 + $0x34] sm:$0xf]
        %v4965 = vld [vmem:[%s4022 + $0x38] sm:$0xf]
        %v4966 = vld [vmem:[%s4022 + $0x3c] sm:$0x1]
        %v4967 = vld [vmem:[%s4022 + $0x44] sm:$0xf]
        %v4968 = vld [vmem:[%s4022 + $0x48] sm:$0xf]
        %v4969 = vld [vmem:[%s4022 + $0x4c] sm:$0x1]
        %v4970 = vld [vmem:[%s4022 + $0x54] sm:$0xf]
        %v4971 = vld [vmem:[%s4022 + $0x58] sm:$0xf]
        %v4972 = vld [vmem:[%s4022 + $0x5c] sm:$0x1]
        %v4973 = vld [vmem:[%s4022 + $0x64] sm:$0xf]
        %v4974 = vld [vmem:[%s4022 + $0x68] sm:$0xf]
        %v4975 = vld [vmem:[%s4022 + $0x6c] sm:$0x1]
        %v4976 = vld [vmem:[%s4022 + $0x74] sm:$0xf]
        %v4977 = vld [vmem:[%s4022 + $0x78] sm:$0xf]
        %v4978 = vld [vmem:[%s4022 + $0x7c] sm:$0x1]
        %v4979 = vld [vmem:[%s4022 + $0x84] sm:$0xf]
        %v4980 = vld [vmem:[%s4022 + $0x88] sm:$0xf]
        %v4981 = vld [vmem:[%s4022 + $0x8c] sm:$0x1]
        %v4982 = vld [vmem:[%s4022 + $0x94] sm:$0xf]
        %v4983 = vld [vmem:[%s4022 + $0x98] sm:$0xf]
        %v4984 = vld [vmem:[%s4022 + $0x9c] sm:$0x1]
        %v4985 = vld [vmem:[%s4022 + $0xa4] sm:$0xf]
        %v4986 = vld [vmem:[%s4022 + $0xa8] sm:$0xf]
        %v4987 = vld [vmem:[%s4022 + $0xac] sm:$0x1]
        %v4988 = vld [vmem:[%s4022 + $0xb4] sm:$0xf]
        %v4989 = vld [vmem:[%s4022 + $0xb8] sm:$0xf]
        %v4990 = vld [vmem:[%s4022 + $0xbc] sm:$0x1]
        %v4991 = vld [vmem:[%s4022 + $0xc4] sm:$0xf]
        %v4992 = vld [vmem:[%s4022 + $0xc8] sm:$0xf]
        %v4993 = vld [vmem:[%s4022 + $0xcc] sm:$0x1]
        %v4994 = vld [vmem:[%s4022 + $0xd4] sm:$0xf]
        %v4995 = vld [vmem:[%s4022 + $0xd8] sm:$0xf]
        %v4996 = vld [vmem:[%s4022 + $0xdc] sm:$0x1]
        %v4997 = vld [vmem:[%s4022 + $0xe4] sm:$0xf]
        %v4998 = vld [vmem:[%s4022 + $0xe8] sm:$0xf]
        %v4999 = vld [vmem:[%s4022 + $0xec] sm:$0x1]
        %v5000 = vld [vmem:[%s4022 + $0xf4] sm:$0xf]
        %v5001 = vld [vmem:[%s4022 + $0xf8] sm:$0xf]
        %v5002 = vld [vmem:[%s4022 + $0xfc] sm:$0x1]
        %v5004 = vshrl.u32 %v4955, 16
        %v5006 = vrot.slane %v5004, 4
        %v5007 = vshll.u32 %v4955, 16
        %v5009 = vrot.slane %v5007, 5
        %v5010 = vor.u32 %v5006, %v5009
        %v5011 = vrot.slane %v5010, 4
        %v5013 = vshll.u32 %v4956, 16
        %v5015 = vrot.slane %v5013, 5
        %v5016 = vsel %vm1773, %v5011, %v5015
        %v5017 = vshrl.u32 %v4956, 16
        %v5019 = vrot.slane %v5017, 4
        %v5020 = vor.u32 %v5019, %v5015
        %v5021 = vrot.slane %v5020, 4
        %v5023 = vshll.u32 %v4957, 16
        %v5025 = vrot.slane %v5023, 5
        %v5026 = vsel %vm1773, %v5021, %v5025
        %v5028 = vshrl.u32 %v4958, 16
        %v5030 = vrot.slane %v5028, 4
        %v5031 = vshll.u32 %v4958, 16
        %v5033 = vrot.slane %v5031, 5
        %v5034 = vor.u32 %v5030, %v5033
        %v5035 = vrot.slane %v5034, 4
        %v5037 = vshll.u32 %v4959, 16
        %v5039 = vrot.slane %v5037, 5
        %v5040 = vsel %vm1773, %v5035, %v5039
        %v5041 = vshrl.u32 %v4959, 16
        %v5043 = vrot.slane %v5041, 4
        %v5044 = vor.u32 %v5043, %v5039
        %v5045 = vrot.slane %v5044, 4
        %v5047 = vshll.u32 %v4960, 16
        %v5049 = vrot.slane %v5047, 5
        %v5050 = vsel %vm1773, %v5045, %v5049
        %v5052 = vshrl.u32 %v4961, 16
        %v5054 = vrot.slane %v5052, 4
        %v5055 = vshll.u32 %v4961, 16
        %v5057 = vrot.slane %v5055, 5
        %v5058 = vor.u32 %v5054, %v5057
        %v5059 = vrot.slane %v5058, 4
        %v5061 = vshll.u32 %v4962, 16
        %v5063 = vrot.slane %v5061, 5
        %v5064 = vsel %vm1773, %v5059, %v5063
        %v5065 = vshrl.u32 %v4962, 16
        %v5067 = vrot.slane %v5065, 4
        %v5068 = vor.u32 %v5067, %v5063
        %v5069 = vrot.slane %v5068, 4
        %v5071 = vshll.u32 %v4963, 16
        %v5073 = vrot.slane %v5071, 5
        %v5074 = vsel %vm1773, %v5069, %v5073
        %v5076 = vshrl.u32 %v4964, 16
        %v5078 = vrot.slane %v5076, 4
        %v5079 = vshll.u32 %v4964, 16
        %v5081 = vrot.slane %v5079, 5
        %v5082 = vor.u32 %v5078, %v5081
        %v5083 = vrot.slane %v5082, 4
        %v5085 = vshll.u32 %v4965, 16
        %v5087 = vrot.slane %v5085, 5
        %v5088 = vsel %vm1773, %v5083, %v5087
        %v5089 = vshrl.u32 %v4965, 16
        %v5091 = vrot.slane %v5089, 4
        %v5092 = vor.u32 %v5091, %v5087
        %v5093 = vrot.slane %v5092, 4
        %v5095 = vshll.u32 %v4966, 16
        %v5097 = vrot.slane %v5095, 5
        %v5098 = vsel %vm1773, %v5093, %v5097
        %v5100 = vshrl.u32 %v4967, 16
        %v5102 = vrot.slane %v5100, 4
        %v5103 = vshll.u32 %v4967, 16
        %v5105 = vrot.slane %v5103, 5
        %v5106 = vor.u32 %v5102, %v5105
        %v5107 = vrot.slane %v5106, 4
        %v5109 = vshll.u32 %v4968, 16
        %v5111 = vrot.slane %v5109, 5
        %v5112 = vsel %vm1773, %v5107, %v5111
        %v5113 = vshrl.u32 %v4968, 16
        %v5115 = vrot.slane %v5113, 4
        %v5116 = vor.u32 %v5115, %v5111
        %v5117 = vrot.slane %v5116, 4
        %v5119 = vshll.u32 %v4969, 16
        %v5121 = vrot.slane %v5119, 5
        %v5122 = vsel %vm1773, %v5117, %v5121
        %v5124 = vshrl.u32 %v4970, 16
        %v5126 = vrot.slane %v5124, 4
        %v5127 = vshll.u32 %v4970, 16
        %v5129 = vrot.slane %v5127, 5
        %v5130 = vor.u32 %v5126, %v5129
        %v5131 = vrot.slane %v5130, 4
        %v5133 = vshll.u32 %v4971, 16
        %v5135 = vrot.slane %v5133, 5
        %v5136 = vsel %vm1773, %v5131, %v5135
        %v5137 = vshrl.u32 %v4971, 16
        %v5139 = vrot.slane %v5137, 4
        %v5140 = vor.u32 %v5139, %v5135
        %v5141 = vrot.slane %v5140, 4
        %v5143 = vshll.u32 %v4972, 16
        %v5145 = vrot.slane %v5143, 5
        %v5146 = vsel %vm1773, %v5141, %v5145
        %v5148 = vshrl.u32 %v4973, 16
        %v5150 = vrot.slane %v5148, 4
        %v5151 = vshll.u32 %v4973, 16
        %v5153 = vrot.slane %v5151, 5
        %v5154 = vor.u32 %v5150, %v5153
        %v5155 = vrot.slane %v5154, 4
        %v5157 = vshll.u32 %v4974, 16
        %v5159 = vrot.slane %v5157, 5
        %v5160 = vsel %vm1773, %v5155, %v5159
        %v5161 = vshrl.u32 %v4974, 16
        %v5163 = vrot.slane %v5161, 4
        %v5164 = vor.u32 %v5163, %v5159
        %v5165 = vrot.slane %v5164, 4
        %v5167 = vshll.u32 %v4975, 16
        %v5169 = vrot.slane %v5167, 5
        %v5170 = vsel %vm1773, %v5165, %v5169
        %v5172 = vshrl.u32 %v4976, 16
        %v5174 = vrot.slane %v5172, 4
        %v5175 = vshll.u32 %v4976, 16
        %v5177 = vrot.slane %v5175, 5
        %v5178 = vor.u32 %v5174, %v5177
        %v5179 = vrot.slane %v5178, 4
        %v5181 = vshll.u32 %v4977, 16
        %v5183 = vrot.slane %v5181, 5
        %v5184 = vsel %vm1773, %v5179, %v5183
        %v5185 = vshrl.u32 %v4977, 16
        %v5187 = vrot.slane %v5185, 4
        %v5188 = vor.u32 %v5187, %v5183
        %v5189 = vrot.slane %v5188, 4
        %v5191 = vshll.u32 %v4978, 16
        %v5193 = vrot.slane %v5191, 5
        %v5194 = vsel %vm1773, %v5189, %v5193
        %v5196 = vshrl.u32 %v4979, 16
        %v5198 = vrot.slane %v5196, 4
        %v5199 = vshll.u32 %v4979, 16
        %v5201 = vrot.slane %v5199, 5
        %v5202 = vor.u32 %v5198, %v5201
        %v5203 = vrot.slane %v5202, 4
        %v5205 = vshll.u32 %v4980, 16
        %v5207 = vrot.slane %v5205, 5
        %v5208 = vsel %vm1773, %v5203, %v5207
        %v5209 = vshrl.u32 %v4980, 16
        %v5211 = vrot.slane %v5209, 4
        %v5212 = vor.u32 %v5211, %v5207
        %v5213 = vrot.slane %v5212, 4
        %v5215 = vshll.u32 %v4981, 16
        %v5217 = vrot.slane %v5215, 5
        %v5218 = vsel %vm1773, %v5213, %v5217
        %v5220 = vshrl.u32 %v4982, 16
        %v5222 = vrot.slane %v5220, 4
        %v5223 = vshll.u32 %v4982, 16
        %v5225 = vrot.slane %v5223, 5
        %v5226 = vor.u32 %v5222, %v5225
        %v5227 = vrot.slane %v5226, 4
        %v5229 = vshll.u32 %v4983, 16
        %v5231 = vrot.slane %v5229, 5
        %v5232 = vsel %vm1773, %v5227, %v5231
        %v5233 = vshrl.u32 %v4983, 16
        %v5235 = vrot.slane %v5233, 4
        %v5236 = vor.u32 %v5235, %v5231
        %v5237 = vrot.slane %v5236, 4
        %v5239 = vshll.u32 %v4984, 16
        %v5241 = vrot.slane %v5239, 5
        %v5242 = vsel %vm1773, %v5237, %v5241
        %v5244 = vshrl.u32 %v4985, 16
        %v5246 = vrot.slane %v5244, 4
        %v5247 = vshll.u32 %v4985, 16
        %v5249 = vrot.slane %v5247, 5
        %v5250 = vor.u32 %v5246, %v5249
        %v5251 = vrot.slane %v5250, 4
        %v5253 = vshll.u32 %v4986, 16
        %v5255 = vrot.slane %v5253, 5
        %v5256 = vsel %vm1773, %v5251, %v5255
        %v5257 = vshrl.u32 %v4986, 16
        %v5259 = vrot.slane %v5257, 4
        %v5260 = vor.u32 %v5259, %v5255
        %v5261 = vrot.slane %v5260, 4
        %v5263 = vshll.u32 %v4987, 16
        %v5265 = vrot.slane %v5263, 5
        %v5266 = vsel %vm1773, %v5261, %v5265
        %v5268 = vshrl.u32 %v4988, 16
        %v5270 = vrot.slane %v5268, 4
        %v5271 = vshll.u32 %v4988, 16
        %v5273 = vrot.slane %v5271, 5
        %v5274 = vor.u32 %v5270, %v5273
        %v5275 = vrot.slane %v5274, 4
        %v5277 = vshll.u32 %v4989, 16
        %v5279 = vrot.slane %v5277, 5
        %v5280 = vsel %vm1773, %v5275, %v5279
        %v5281 = vshrl.u32 %v4989, 16
        %v5283 = vrot.slane %v5281, 4
        %v5284 = vor.u32 %v5283, %v5279
        %v5285 = vrot.slane %v5284, 4
        %v5287 = vshll.u32 %v4990, 16
        %v5289 = vrot.slane %v5287, 5
        %v5290 = vsel %vm1773, %v5285, %v5289
        %v5292 = vshrl.u32 %v4991, 16
        %v5294 = vrot.slane %v5292, 4
        %v5295 = vshll.u32 %v4991, 16
        %v5297 = vrot.slane %v5295, 5
        %v5298 = vor.u32 %v5294, %v5297
        %v5299 = vrot.slane %v5298, 4
        %v5301 = vshll.u32 %v4992, 16
        %v5303 = vrot.slane %v5301, 5
        %v5304 = vsel %vm1773, %v5299, %v5303
        %v5305 = vshrl.u32 %v4992, 16
        %v5307 = vrot.slane %v5305, 4
        %v5308 = vor.u32 %v5307, %v5303
        %v5309 = vrot.slane %v5308, 4
        %v5311 = vshll.u32 %v4993, 16
        %v5313 = vrot.slane %v5311, 5
        %v5314 = vsel %vm1773, %v5309, %v5313
        %v5316 = vshrl.u32 %v4994, 16
        %v5318 = vrot.slane %v5316, 4
        %v5319 = vshll.u32 %v4994, 16
        %v5321 = vrot.slane %v5319, 5
        %v5322 = vor.u32 %v5318, %v5321
        %v5323 = vrot.slane %v5322, 4
        %v5325 = vshll.u32 %v4995, 16
        %v5327 = vrot.slane %v5325, 5
        %v5328 = vsel %vm1773, %v5323, %v5327
        %v5329 = vshrl.u32 %v4995, 16
        %v5331 = vrot.slane %v5329, 4
        %v5332 = vor.u32 %v5331, %v5327
        %v5333 = vrot.slane %v5332, 4
        %v5335 = vshll.u32 %v4996, 16
        %v5337 = vrot.slane %v5335, 5
        %v5338 = vsel %vm1773, %v5333, %v5337
        %v5340 = vshrl.u32 %v4997, 16
        %v5342 = vrot.slane %v5340, 4
        %v5343 = vshll.u32 %v4997, 16
        %v5345 = vrot.slane %v5343, 5
        %v5346 = vor.u32 %v5342, %v5345
        %v5347 = vrot.slane %v5346, 4
        %v5349 = vshll.u32 %v4998, 16
        %v5351 = vrot.slane %v5349, 5
        %v5352 = vsel %vm1773, %v5347, %v5351
        %v5353 = vshrl.u32 %v4998, 16
        %v5355 = vrot.slane %v5353, 4
        %v5356 = vor.u32 %v5355, %v5351
        %v5357 = vrot.slane %v5356, 4
        %v5359 = vshll.u32 %v4999, 16
        %v5361 = vrot.slane %v5359, 5
        %v5362 = vsel %vm1773, %v5357, %v5361
        %v5364 = vshrl.u32 %v5000, 16
        %v5366 = vrot.slane %v5364, 4
        %v5367 = vshll.u32 %v5000, 16
        %v5369 = vrot.slane %v5367, 5
        %v5370 = vor.u32 %v5366, %v5369
        %v5371 = vrot.slane %v5370, 4
        %v5373 = vshll.u32 %v5001, 16
        %v5375 = vrot.slane %v5373, 5
        %v5376 = vsel %vm1773, %v5371, %v5375
        %v5377 = vshrl.u32 %v5001, 16
        %v5379 = vrot.slane %v5377, 4
        %v5380 = vor.u32 %v5379, %v5375
        %v5381 = vrot.slane %v5380, 4
        %v5383 = vshll.u32 %v5002, 16
        %v5385 = vrot.slane %v5383, 5
        %v5386 = vsel %vm1773, %v5381, %v5385
        %s5387 = scalar_lea.vmem [#allocation6], 512
        %v5388 = vld [vmem:[%s5387] sm:$0xf]
        %v5389 = vld [vmem:[%s5387 + $0x4] sm:$0xf]
        %v5390 = vld [vmem:[%s5387 + $0x8] sm:$0xf]
        %v5391 = vld [vmem:[%s5387 + $0xc] sm:$0xf]
        %v5392 = vld [vmem:[%s5387 + $0x10] sm:$0xf]
        %v5393 = vld [vmem:[%s5387 + $0x14] sm:$0xf]
        %v5394 = vld [vmem:[%s5387 + $0x18] sm:$0xf]
        %v5395 = vld [vmem:[%s5387 + $0x1c] sm:$0xf]
        %v5396 = vld [vmem:[%s5387 + $0x20] sm:$0xf]
        %v5397 = vld [vmem:[%s5387 + $0x24] sm:$0xf]
        %v5398 = vld [vmem:[%s5387 + $0x28] sm:$0xf]
        %v5399 = vld [vmem:[%s5387 + $0x2c] sm:$0xf]
        %v5400 = vld [vmem:[%s5387 + $0x30] sm:$0xf]
        %v5401 = vld [vmem:[%s5387 + $0x34] sm:$0xf]
        %v5402 = vld [vmem:[%s5387 + $0x38] sm:$0xf]
        %v5403 = vld [vmem:[%s5387 + $0x3c] sm:$0xf]
        %v5404 = vunpack.c.l.b16 %v5016
        %v5405 = vunpack.c.l.b16 %v5026
        %v5406 = vunpack.c.l.b16 %v5040
        %v5407 = vunpack.c.l.b16 %v5050
        %v5408 = vunpack.c.l.b16 %v5064
        %v5409 = vunpack.c.l.b16 %v5074
        %v5410 = vunpack.c.l.b16 %v5088
        %v5411 = vunpack.c.l.b16 %v5098
        %v5412 = vunpack.c.l.b16 %v5112
        %v5413 = vunpack.c.l.b16 %v5122
        %v5414 = vunpack.c.l.b16 %v5136
        %v5415 = vunpack.c.l.b16 %v5146
        %v5416 = vunpack.c.l.b16 %v5160
        %v5417 = vunpack.c.l.b16 %v5170
        %v5418 = vunpack.c.l.b16 %v5184
        %v5419 = vunpack.c.l.b16 %v5194
        %v5420 = vunpack.c.l.b16 %v5208
        %v5421 = vunpack.c.l.b16 %v5218
        %v5422 = vunpack.c.l.b16 %v5232
        %v5423 = vunpack.c.l.b16 %v5242
        %v5424 = vunpack.c.l.b16 %v5256
        %v5425 = vunpack.c.l.b16 %v5266
        %v5426 = vunpack.c.l.b16 %v5280
        %v5427 = vunpack.c.l.b16 %v5290
        %v5428 = vunpack.c.l.b16 %v5304
        %v5429 = vunpack.c.l.b16 %v5314
        %v5430 = vunpack.c.l.b16 %v5328
        %v5431 = vunpack.c.l.b16 %v5338
        %v5432 = vunpack.c.l.b16 %v5352
        %v5433 = vunpack.c.l.b16 %v5362
        %v5434 = vunpack.c.l.b16 %v5376
        %v5435 = vunpack.c.l.b16 %v5386
        %v5436 = vpack.c.b16 %v5405, %v5404
        %v5437 = vpack.c.b16 %v5407, %v5406
        %v5438 = vpack.c.b16 %v5409, %v5408
        %v5439 = vpack.c.b16 %v5411, %v5410
        %v5440 = vpack.c.b16 %v5413, %v5412
        %v5441 = vpack.c.b16 %v5415, %v5414
        %v5442 = vpack.c.b16 %v5417, %v5416
        %v5443 = vpack.c.b16 %v5419, %v5418
        %v5444 = vpack.c.b16 %v5421, %v5420
        %v5445 = vpack.c.b16 %v5423, %v5422
        %v5446 = vpack.c.b16 %v5425, %v5424
        %v5447 = vpack.c.b16 %v5427, %v5426
        %v5448 = vpack.c.b16 %v5429, %v5428
        %v5449 = vpack.c.b16 %v5431, %v5430
        %v5450 = vpack.c.b16 %v5433, %v5432
        %v5451 = vpack.c.b16 %v5435, %v5434
        %v5484 = vunpack.c.l.b16 %v5388
        %v5485 = vunpack.c.l.b16 %v5389
        %v5486 = vunpack.c.l.b16 %v5390
        %v5487 = vunpack.c.l.b16 %v5391
        %v5488 = vunpack.c.l.b16 %v5392
        %v5489 = vunpack.c.l.b16 %v5393
        %v5490 = vunpack.c.l.b16 %v5394
        %v5491 = vunpack.c.l.b16 %v5395
        %v5492 = vunpack.c.l.b16 %v5396
        %v5493 = vunpack.c.l.b16 %v5397
        %v5494 = vunpack.c.l.b16 %v5398
        %v5495 = vunpack.c.l.b16 %v5399
        %v5496 = vunpack.c.l.b16 %v5400
        %v5497 = vunpack.c.l.b16 %v5401
        %v5498 = vunpack.c.l.b16 %v5402
        %v5499 = vunpack.c.l.b16 %v5403
        %v5500 = vpack.c.b16 %v5485, %v5484
        %v5501 = vpack.c.b16 %v5487, %v5486
        %v5502 = vpack.c.b16 %v5489, %v5488
        %v5503 = vpack.c.b16 %v5491, %v5490
        %v5504 = vpack.c.b16 %v5493, %v5492
        %v5505 = vpack.c.b16 %v5495, %v5494
        %v5506 = vpack.c.b16 %v5497, %v5496
        %v5507 = vpack.c.b16 %v5499, %v5498
        %5516 = vmatpush.bf16.msra.mxu0 %v5507
        %5517 = vmatpush.bf16.msra.mxu0 %v5506
        %5518 = vmatpush.bf16.msra.mxu0 %v5505
        %5519 = vmatpush.bf16.msra.mxu0 %v5504
        %5520 = vmatpush.bf16.msra.mxu0 %v5503
        %5521 = vmatpush.bf16.msra.mxu0 %v5502
        %5522 = vmatpush.bf16.msra.mxu0 %v5501
        %5523 = vmatpush.bf16.msra.mxu0 %v5500
        %5524 = vmatmul.bf16.gmra.mxu0 %v5436
        %v5525 = vpop.f32.mrf.mxu0
        %v5526 = vadd.f32 0.0, %v5525
        %v5527 = vpop.f32.mrf.mxu0
        %v5528 = vadd.f32 0.0, %v5527
        %5529 = vmatmul.bf16.gmra.mxu0 %v5437
        %v5530 = vpop.f32.mrf.mxu0
        %v5531 = vadd.f32 0.0, %v5530
        %v5532 = vpop.f32.mrf.mxu0
        %v5533 = vadd.f32 0.0, %v5532
        %5534 = vmatmul.bf16.gmra.mxu0 %v5438
        %v5535 = vpop.f32.mrf.mxu0
        %v5536 = vadd.f32 0.0, %v5535
        %v5537 = vpop.f32.mrf.mxu0
        %v5538 = vadd.f32 0.0, %v5537
        %5539 = vmatmul.bf16.gmra.mxu0 %v5439
        %v5540 = vpop.f32.mrf.mxu0
        %v5541 = vadd.f32 0.0, %v5540
        %v5542 = vpop.f32.mrf.mxu0
        %v5543 = vadd.f32 0.0, %v5542
        %5544 = vmatmul.bf16.gmra.mxu0 %v5440
        %v5545 = vpop.f32.mrf.mxu0
        %v5546 = vadd.f32 0.0, %v5545
        %v5547 = vpop.f32.mrf.mxu0
        %v5548 = vadd.f32 0.0, %v5547
        %5549 = vmatmul.bf16.gmra.mxu0 %v5441
        %v5550 = vpop.f32.mrf.mxu0
        %v5551 = vadd.f32 0.0, %v5550
        %v5552 = vpop.f32.mrf.mxu0
        %v5553 = vadd.f32 0.0, %v5552
        %5554 = vmatmul.bf16.gmra.mxu0 %v5442
        %v5555 = vpop.f32.mrf.mxu0
        %v5556 = vadd.f32 0.0, %v5555
        %v5557 = vpop.f32.mrf.mxu0
        %v5558 = vadd.f32 0.0, %v5557
        %5559 = vmatmul.bf16.gmra.mxu0 %v5443
        %v5560 = vpop.f32.mrf.mxu0
        %v5561 = vadd.f32 0.0, %v5560
        %v5562 = vpop.f32.mrf.mxu0
        %v5563 = vadd.f32 0.0, %v5562
        %5564 = vmatmul.bf16.gmra.mxu0 %v5444
        %v5565 = vpop.f32.mrf.mxu0
        %v5566 = vadd.f32 0.0, %v5565
        %v5567 = vpop.f32.mrf.mxu0
        %v5568 = vadd.f32 0.0, %v5567
        %5569 = vmatmul.bf16.gmra.mxu0 %v5445
        %v5570 = vpop.f32.mrf.mxu0
        %v5571 = vadd.f32 0.0, %v5570
        %v5572 = vpop.f32.mrf.mxu0
        %v5573 = vadd.f32 0.0, %v5572
        %5574 = vmatmul.bf16.gmra.mxu0 %v5446
        %v5575 = vpop.f32.mrf.mxu0
        %v5576 = vadd.f32 0.0, %v5575
        %v5577 = vpop.f32.mrf.mxu0
        %v5578 = vadd.f32 0.0, %v5577
        %5579 = vmatmul.bf16.gmra.mxu0 %v5447
        %v5580 = vpop.f32.mrf.mxu0
        %v5581 = vadd.f32 0.0, %v5580
        %v5582 = vpop.f32.mrf.mxu0
        %v5583 = vadd.f32 0.0, %v5582
        %5584 = vmatmul.bf16.gmra.mxu0 %v5448
        %v5585 = vpop.f32.mrf.mxu0
        %v5586 = vadd.f32 0.0, %v5585
        %v5587 = vpop.f32.mrf.mxu0
        %v5588 = vadd.f32 0.0, %v5587
        %5589 = vmatmul.bf16.gmra.mxu0 %v5449
        %v5590 = vpop.f32.mrf.mxu0
        %v5591 = vadd.f32 0.0, %v5590
        %v5592 = vpop.f32.mrf.mxu0
        %v5593 = vadd.f32 0.0, %v5592
        %5594 = vmatmul.bf16.gmra.mxu0 %v5450
        %v5595 = vpop.f32.mrf.mxu0
        %v5596 = vadd.f32 0.0, %v5595
        %v5597 = vpop.f32.mrf.mxu0
        %v5598 = vadd.f32 0.0, %v5597
        %5599 = vmatmul.bf16.gmra.mxu0 %v5451
        %v5600 = vpop.f32.mrf.mxu0
        %v5601 = vadd.f32 0.0, %v5600
        %v5602 = vpop.f32.mrf.mxu0
        %v5603 = vadd.f32 0.0, %v5602
        %5604 = vdwg.mxu0
        %v5605 = vadd.f32 %v4923, %v5526
        %v5606 = vadd.f32 %v4924, %v5528
        %v5607 = vadd.f32 %v4925, %v5531
        %v5608 = vadd.f32 %v4926, %v5533
        %v5609 = vadd.f32 %v4927, %v5536
        %v5610 = vadd.f32 %v4928, %v5538
        %v5611 = vadd.f32 %v4929, %v5541
        %v5612 = vadd.f32 %v4930, %v5543
        %v5613 = vadd.f32 %v4931, %v5546
        %v5614 = vadd.f32 %v4932, %v5548
        %v5615 = vadd.f32 %v4933, %v5551
        %v5616 = vadd.f32 %v4934, %v5553
        %v5617 = vadd.f32 %v4935, %v5556
        %v5618 = vadd.f32 %v4936, %v5558
        %v5619 = vadd.f32 %v4937, %v5561
        %v5620 = vadd.f32 %v4938, %v5563
        %v5621 = vadd.f32 %v4939, %v5566
        %v5622 = vadd.f32 %v4940, %v5568
        %v5623 = vadd.f32 %v4941, %v5571
        %v5624 = vadd.f32 %v4942, %v5573
        %v5625 = vadd.f32 %v4943, %v5576
        %v5626 = vadd.f32 %v4944, %v5578
        %v5627 = vadd.f32 %v4945, %v5581
        %v5628 = vadd.f32 %v4946, %v5583
        %v5629 = vadd.f32 %v4947, %v5586
        %v5630 = vadd.f32 %v4948, %v5588
        %v5631 = vadd.f32 %v4949, %v5591
        %v5632 = vadd.f32 %v4950, %v5593
        %v5633 = vadd.f32 %v4951, %v5596
        %v5634 = vadd.f32 %v4952, %v5598
        %v5635 = vadd.f32 %v4953, %v5601
        %v5636 = vadd.f32 %v4954, %v5603
        %v5637 = vld [vmem:[%s7] sm:$0x1]
        %v5639 = vperm.slane %v5637, 0
        %v5641 = vadd.f32 %v5605, %v5639
        %v5642 = vadd.f32 %v5606, %v5639
        %v5643 = vadd.f32 %v5607, %v5639
        %v5644 = vadd.f32 %v5608, %v5639
        %v5645 = vadd.f32 %v5609, %v5639
        %v5646 = vadd.f32 %v5610, %v5639
        %v5647 = vadd.f32 %v5611, %v5639
        %v5648 = vadd.f32 %v5612, %v5639
        %v5649 = vadd.f32 %v5613, %v5639
        %v5650 = vadd.f32 %v5614, %v5639
        %v5651 = vadd.f32 %v5615, %v5639
        %v5652 = vadd.f32 %v5616, %v5639
        %v5653 = vadd.f32 %v5617, %v5639
        %v5654 = vadd.f32 %v5618, %v5639
        %v5655 = vadd.f32 %v5619, %v5639
        %v5656 = vadd.f32 %v5620, %v5639
        %v5657 = vadd.f32 %v5621, %v5639
        %v5658 = vadd.f32 %v5622, %v5639
        %v5659 = vadd.f32 %v5623, %v5639
        %v5660 = vadd.f32 %v5624, %v5639
        %v5661 = vadd.f32 %v5625, %v5639
        %v5662 = vadd.f32 %v5626, %v5639
        %v5663 = vadd.f32 %v5627, %v5639
        %v5664 = vadd.f32 %v5628, %v5639
        %v5665 = vadd.f32 %v5629, %v5639
        %v5666 = vadd.f32 %v5630, %v5639
        %v5667 = vadd.f32 %v5631, %v5639
        %v5668 = vadd.f32 %v5632, %v5639
        %v5669 = vadd.f32 %v5633, %v5639
        %v5670 = vadd.f32 %v5634, %v5639
        %v5671 = vadd.f32 %v5635, %v5639
        %v5672 = vadd.f32 %v5636, %v5639
        %v5673 = vmax.f32 %v5641, 0.0
        %v5674 = vmax.f32 %v5642, 0.0
        %v5675 = vmax.f32 %v5643, 0.0
        %v5676 = vmax.f32 %v5644, 0.0
        %v5677 = vmax.f32 %v5645, 0.0
        %v5678 = vmax.f32 %v5646, 0.0
        %v5679 = vmax.f32 %v5647, 0.0
        %v5680 = vmax.f32 %v5648, 0.0
        %v5681 = vmax.f32 %v5649, 0.0
        %v5682 = vmax.f32 %v5650, 0.0
        %v5683 = vmax.f32 %v5651, 0.0
        %v5684 = vmax.f32 %v5652, 0.0
        %v5685 = vmax.f32 %v5653, 0.0
        %v5686 = vmax.f32 %v5654, 0.0
        %v5687 = vmax.f32 %v5655, 0.0
        %v5688 = vmax.f32 %v5656, 0.0
        %v5689 = vmax.f32 %v5657, 0.0
        %v5690 = vmax.f32 %v5658, 0.0
        %v5691 = vmax.f32 %v5659, 0.0
        %v5692 = vmax.f32 %v5660, 0.0
        %v5693 = vmax.f32 %v5661, 0.0
        %v5694 = vmax.f32 %v5662, 0.0
        %v5695 = vmax.f32 %v5663, 0.0
        %v5696 = vmax.f32 %v5664, 0.0
        %v5697 = vmax.f32 %v5665, 0.0
        %v5698 = vmax.f32 %v5666, 0.0
        %v5699 = vmax.f32 %v5667, 0.0
        %v5700 = vmax.f32 %v5668, 0.0
        %v5701 = vmax.f32 %v5669, 0.0
        %v5702 = vmax.f32 %v5670, 0.0
        %v5703 = vmax.f32 %v5671, 0.0
        %v5704 = vmax.f32 %v5672, 0.0
        %v5705 = vpack.c.bf16 %v5674, %v5673
        %v5706 = vpack.c.bf16 %v5676, %v5675
        %v5707 = vpack.c.bf16 %v5678, %v5677
        %v5708 = vpack.c.bf16 %v5680, %v5679
        %v5709 = vpack.c.bf16 %v5682, %v5681
        %v5710 = vpack.c.bf16 %v5684, %v5683
        %v5711 = vpack.c.bf16 %v5686, %v5685
        %v5712 = vpack.c.bf16 %v5688, %v5687
        %v5713 = vpack.c.bf16 %v5690, %v5689
        %v5714 = vpack.c.bf16 %v5692, %v5691
        %v5715 = vpack.c.bf16 %v5694, %v5693
        %v5716 = vpack.c.bf16 %v5696, %v5695
        %v5717 = vpack.c.bf16 %v5698, %v5697
        %v5718 = vpack.c.bf16 %v5700, %v5699
        %v5719 = vpack.c.bf16 %v5702, %v5701
        %v5720 = vpack.c.bf16 %v5704, %v5703
        %v5721 = vld [vmem:[%s3] sm:$0xf]
        %v5722 = vld [vmem:[%s3 + $0x4] sm:$0xf]
        %v5723 = vld [vmem:[%s3 + $0x8] sm:$0xf]
        %v5724 = vld [vmem:[%s3 + $0xc] sm:$0xf]
        %v5725 = vld [vmem:[%s3 + $0x10] sm:$0xf]
        %v5726 = vld [vmem:[%s3 + $0x14] sm:$0xf]
        %v5727 = vld [vmem:[%s3 + $0x18] sm:$0xf]
        %v5728 = vld [vmem:[%s3 + $0x1c] sm:$0xf]
        %v5729 = vld [vmem:[%s3 + $0x20] sm:$0xf]
        %v5730 = vld [vmem:[%s3 + $0x24] sm:$0xf]
        %v5731 = vld [vmem:[%s3 + $0x28] sm:$0xf]
        %v5732 = vld [vmem:[%s3 + $0x2c] sm:$0xf]
        %v5733 = vld [vmem:[%s3 + $0x30] sm:$0xf]
        %v5734 = vld [vmem:[%s3 + $0x34] sm:$0xf]
        %v5735 = vld [vmem:[%s3 + $0x38] sm:$0xf]
        %v5736 = vld [vmem:[%s3 + $0x3c] sm:$0xf]
        %v5753 = vunpack.c.l.b16 %v5721
        %v5754 = vunpack.c.l.b16 %v5722
        %v5755 = vunpack.c.l.b16 %v5723
        %v5756 = vunpack.c.l.b16 %v5724
        %v5757 = vunpack.c.l.b16 %v5725
        %v5758 = vunpack.c.l.b16 %v5726
        %v5759 = vunpack.c.l.b16 %v5727
        %v5760 = vunpack.c.l.b16 %v5728
        %v5761 = vunpack.c.l.b16 %v5729
        %v5762 = vunpack.c.l.b16 %v5730
        %v5763 = vunpack.c.l.b16 %v5731
        %v5764 = vunpack.c.l.b16 %v5732
        %v5765 = vunpack.c.l.b16 %v5733
        %v5766 = vunpack.c.l.b16 %v5734
        %v5767 = vunpack.c.l.b16 %v5735
        %v5768 = vunpack.c.l.b16 %v5736
        %v5769 = vpack.c.b16 %v5754, %v5753
        %v5770 = vpack.c.b16 %v5756, %v5755
        %v5771 = vpack.c.b16 %v5758, %v5757
        %v5772 = vpack.c.b16 %v5760, %v5759
        %v5773 = vpack.c.b16 %v5762, %v5761
        %v5774 = vpack.c.b16 %v5764, %v5763
        %v5775 = vpack.c.b16 %v5766, %v5765
        %v5776 = vpack.c.b16 %v5768, %v5767
        %5785 = vmatpush.bf16.msra.mxu0 %v5776
        %5786 = vmatpush.bf16.msra.mxu0 %v5775
        %5787 = vmatpush.bf16.msra.mxu0 %v5774
        %5788 = vmatpush.bf16.msra.mxu0 %v5773
        %5789 = vmatpush.bf16.msra.mxu0 %v5772
        %5790 = vmatpush.bf16.msra.mxu0 %v5771
        %5791 = vmatpush.bf16.msra.mxu0 %v5770
        %5792 = vmatpush.bf16.msra.mxu0 %v5769
        %5793 = vmatmul.bf16.gmra.mxu0 %v5705
        %v5794 = vpop.f32.mrf.mxu0
        %v5795 = vadd.f32 %v344, %v5794
        %v5796 = vpop.f32.mrf.mxu0
        %v5797 = vadd.f32 %v345, %v5796
        %5798 = vmatmul.bf16.gmra.mxu0 %v5706
        %v5799 = vpop.f32.mrf.mxu0
        %v5800 = vadd.f32 %v346, %v5799
        %v5801 = vpop.f32.mrf.mxu0
        %v5802 = vadd.f32 %v347, %v5801
        %5803 = vmatmul.bf16.gmra.mxu0 %v5707
        %v5804 = vpop.f32.mrf.mxu0
        %v5805 = vadd.f32 %v348, %v5804
        %v5806 = vpop.f32.mrf.mxu0
        %v5807 = vadd.f32 %v349, %v5806
        %5808 = vmatmul.bf16.gmra.mxu0 %v5708
        %v5809 = vpop.f32.mrf.mxu0
        %v5810 = vadd.f32 %v350, %v5809
        %v5811 = vpop.f32.mrf.mxu0
        %v5812 = vadd.f32 %v351, %v5811
        %5813 = vmatmul.bf16.gmra.mxu0 %v5709
        %v5814 = vpop.f32.mrf.mxu0
        %v5815 = vadd.f32 %v352, %v5814
        %v5816 = vpop.f32.mrf.mxu0
        %v5817 = vadd.f32 %v353, %v5816
        %5818 = vmatmul.bf16.gmra.mxu0 %v5710
        %v5819 = vpop.f32.mrf.mxu0
        %v5820 = vadd.f32 %v354, %v5819
        %v5821 = vpop.f32.mrf.mxu0
        %v5822 = vadd.f32 %v355, %v5821
        %5823 = vmatmul.bf16.gmra.mxu0 %v5711
        %v5824 = vpop.f32.mrf.mxu0
        %v5825 = vadd.f32 %v356, %v5824
        %v5826 = vpop.f32.mrf.mxu0
        %v5827 = vadd.f32 %v357, %v5826
        %5828 = vmatmul.bf16.gmra.mxu0 %v5712
        %v5829 = vpop.f32.mrf.mxu0
        %v5830 = vadd.f32 %v358, %v5829
        %v5831 = vpop.f32.mrf.mxu0
        %v5832 = vadd.f32 %v359, %v5831
        %5833 = vmatmul.bf16.gmra.mxu0 %v5713
        %v5834 = vpop.f32.mrf.mxu0
        %v5835 = vadd.f32 %v360, %v5834
        %v5836 = vpop.f32.mrf.mxu0
        %v5837 = vadd.f32 %v361, %v5836
        %5838 = vmatmul.bf16.gmra.mxu0 %v5714
        %v5839 = vpop.f32.mrf.mxu0
        %v5840 = vadd.f32 %v362, %v5839
        %v5841 = vpop.f32.mrf.mxu0
        %v5842 = vadd.f32 %v363, %v5841
        %5843 = vmatmul.bf16.gmra.mxu0 %v5715
        %v5844 = vpop.f32.mrf.mxu0
        %v5845 = vadd.f32 %v364, %v5844
        %v5846 = vpop.f32.mrf.mxu0
        %v5847 = vadd.f32 %v365, %v5846
        %5848 = vmatmul.bf16.gmra.mxu0 %v5716
        %v5849 = vpop.f32.mrf.mxu0
        %v5850 = vadd.f32 %v366, %v5849
        %v5851 = vpop.f32.mrf.mxu0
        %v5852 = vadd.f32 %v367, %v5851
        %5853 = vmatmul.bf16.gmra.mxu0 %v5717
        %v5854 = vpop.f32.mrf.mxu0
        %v5855 = vadd.f32 %v368, %v5854
        %v5856 = vpop.f32.mrf.mxu0
        %v5857 = vadd.f32 %v369, %v5856
        %5858 = vmatmul.bf16.gmra.mxu0 %v5718
        %v5859 = vpop.f32.mrf.mxu0
        %v5860 = vadd.f32 %v370, %v5859
        %v5861 = vpop.f32.mrf.mxu0
        %v5862 = vadd.f32 %v371, %v5861
        %5863 = vmatmul.bf16.gmra.mxu0 %v5719
        %v5864 = vpop.f32.mrf.mxu0
        %v5865 = vadd.f32 %v372, %v5864
        %v5866 = vpop.f32.mrf.mxu0
        %v5867 = vadd.f32 %v373, %v5866
        %5868 = vmatmul.bf16.gmra.mxu0 %v5720
        %v5869 = vpop.f32.mrf.mxu0
        %v5870 = vadd.f32 %v374, %v5869
        %v5871 = vpop.f32.mrf.mxu0
        %v5872 = vadd.f32 %v375, %v5871
        %5873 = vdwg.mxu0
        %5874 = vst.msk [vmem:[%s342] sm:$0xff] %vm508, %v5795
        %5875 = vst.msk [vmem:[%s342 + $0x8] sm:$0xff] %vm508, %v5797
        %5876 = vst.msk [vmem:[%s342 + $0x10] sm:$0xff] %vm508, %v5800
        %5877 = vst.msk [vmem:[%s342 + $0x18] sm:$0xff] %vm508, %v5802
        %5878 = vst.msk [vmem:[%s342 + $0x20] sm:$0xff] %vm508, %v5805
        %5879 = vst.msk [vmem:[%s342 + $0x28] sm:$0xff] %vm508, %v5807
        %5880 = vst.msk [vmem:[%s342 + $0x30] sm:$0xff] %vm508, %v5810
        %5881 = vst.msk [vmem:[%s342 + $0x38] sm:$0xff] %vm508, %v5812
        %5882 = vst.msk [vmem:[%s342 + $0x40] sm:$0xff] %vm508, %v5815
        %5883 = vst.msk [vmem:[%s342 + $0x48] sm:$0xff] %vm508, %v5817
        %5884 = vst.msk [vmem:[%s342 + $0x50] sm:$0xff] %vm508, %v5820
        %5885 = vst.msk [vmem:[%s342 + $0x58] sm:$0xff] %vm508, %v5822
        %5886 = vst.msk [vmem:[%s342 + $0x60] sm:$0xff] %vm508, %v5825
        %5887 = vst.msk [vmem:[%s342 + $0x68] sm:$0xff] %vm508, %v5827
        %5888 = vst.msk [vmem:[%s342 + $0x70] sm:$0xff] %vm508, %v5830
        %5889 = vst.msk [vmem:[%s342 + $0x78] sm:$0xff] %vm508, %v5832
        %5890 = vst.msk [vmem:[%s342 + $0x80] sm:$0xff] %vm508, %v5835
        %5891 = vst.msk [vmem:[%s342 + $0x88] sm:$0xff] %vm508, %v5837
        %5892 = vst.msk [vmem:[%s342 + $0x90] sm:$0xff] %vm508, %v5840
        %5893 = vst.msk [vmem:[%s342 + $0x98] sm:$0xff] %vm508, %v5842
        %5894 = vst.msk [vmem:[%s342 + $0xa0] sm:$0xff] %vm508, %v5845
        %5895 = vst.msk [vmem:[%s342 + $0xa8] sm:$0xff] %vm508, %v5847
        %5896 = vst.msk [vmem:[%s342 + $0xb0] sm:$0xff] %vm508, %v5850
        %5897 = vst.msk [vmem:[%s342 + $0xb8] sm:$0xff] %vm508, %v5852
        %5898 = vst.msk [vmem:[%s342 + $0xc0] sm:$0xff] %vm508, %v5855
        %5899 = vst.msk [vmem:[%s342 + $0xc8] sm:$0xff] %vm508, %v5857
        %5900 = vst.msk [vmem:[%s342 + $0xd0] sm:$0xff] %vm508, %v5860
        %5901 = vst.msk [vmem:[%s342 + $0xd8] sm:$0xff] %vm508, %v5862
        %5902 = vst.msk [vmem:[%s342 + $0xe0] sm:$0xff] %vm508, %v5865
        %5903 = vst.msk [vmem:[%s342 + $0xe8] sm:$0xff] %vm508, %v5867
        %5904 = vst.msk [vmem:[%s342 + $0xf0] sm:$0xff] %vm508, %v5870
        %5905 = vst.msk [vmem:[%s342 + $0xf8] sm:$0xff] %vm508, %v5872
        %s5906 = sand.u32 %s207, 1
        %s5907 = scalar_lea.sflag [#allocation5], %s5906
        %s5908 = sand.u32 %s207, 1
        %s5909 = smul.addr %s5908, 256
        %s5910 = scalar_lea.vmem [#allocation8], %s5909
        // Predicated region
        $region61: #{tpu_custom_call.1} parent=51 // pred_check
          %p5911 = pneg %p217
        $region62: #{tpu_custom_call.1} parent=51 // pred_check_branch
          %5913 = sbr.rel (%p5911) target = $region64
        $region63: #{tpu_custom_call.1} parent=51 // pred_region
          %5915 = vsyncadd %s5907, 0
          %s5916 = smul.addr %s26, 32
          %s5917 = smul.addr %s5916, 8
          %s5918 = scalar_lea.hbm %s8, %s5917
          %s5919 = sshll.u32 %s5910, 4
          %s5920 = int_to_ptr.vmem [resolvable:$true] %s5919
          %s5921 = sshll.u32 %s5918, 4
          %s5922 = int_to_ptr.hbm [resolvable:$true] %s5921
          %5927 = dma.vmem_to_hbm [thread:$0]  %s5920, 4096, %s5922, %s5907, 128, 128, 8
        $region64: #{tpu_custom_call.1} parent=51 // pred_fallthru
          _
      $region52: #{tpu_custom_call.1} parent=5 // pred_fallthru
        _
      %p5928 = scmp.le.s32.totalorder 2, %s21
      // Predicated region
      $region65: #{tpu_custom_call.1} parent=5 // pred_check
        %p5929 = pneg %p5928
      $region66: #{tpu_custom_call.1} parent=5 // pred_check_branch
        %5931 = sbr.rel (%p5929) target = $region68
      $region67: #{tpu_custom_call.1} parent=5 // pred_region
        %s5932 = ssub.s32 %s21, 2
        // Predicated region
        $region69: #{tpu_custom_call.1} parent=67 // pred_check
          %p5933 = pneg %p223
        $region70: #{tpu_custom_call.1} parent=67 // pred_check_branch
          %5935 = sbr.rel (%p5933) target = $region72
        $region71: #{tpu_custom_call.1} parent=67 // pred_region
          %s5936 = sand.u32 %s208, 1
          %s5937 = scalar_lea.sflag [#allocation5], %s5936
          %s5938 = sand.u32 %s208, 1
          %s5939 = smul.addr %s5938, 256
          %s5940 = scalar_lea.vmem [#allocation8], %s5939
          %5942 = dma.done %s5937, 4096
        $region72: #{tpu_custom_call.1} parent=67 // pred_fallthru
          _
      $region68: #{tpu_custom_call.1} parent=5 // pred_fallthru
        _
    $region6: #{tpu_custom_call.1} parent=1 // loop_footer
      %s25 = sadd.s32 1, %s21
    $region7: #{tpu_custom_call.1} parent=1 // loop_footer_branch
      %20 = sbr.rel target = $region3
    $region8: #{tpu_custom_call.1} parent=1 // loop_exit
      _
    %5943 = vsyncpa [#allocation4], 1
    %s5944 = scalar_lea.sflag [#allocation4], 1
    %5945 = vsyncpa %s5944, 1
    %5946 = vsyncpa [#allocation7], 1
    %5947 = vsyncpa [#allocation5], 1
    %s5948 = scalar_lea.sflag [#allocation5], 1
    %5949 = vsyncpa %s5948, 1

</llo_original>
